<compile_context>
chip_gen: v7x
topology: tpu7x:2x2x1
jax: 0.10.0
libtpu: 0.0.40
codegen_flags: <defaults>
</compile_context>

<pallas_src>
import functools

import jax
import jax.numpy as jnp
from jax.experimental import pallas as pl
from jax.experimental.pallas import tpu as pltpu

VMEM = pltpu.MemorySpace.VMEM
F32 = jnp.float32
BF16 = jnp.bfloat16

_N_DATA = 6        # x, edge_feat, gather_src, scatter_node, scatter_linegraph, pool
_N_PER_LAYER = 16  # node conv (8) + edge conv (6) + outer BN (2)


# ----------------------------- kernel helpers ------------------------------ #

def _train_bn(x, gamma, beta, eps=1e-5):
    """BatchNorm1d in train mode (per-call biased batch statistics), f32."""
    mean = jnp.mean(x, axis=0, keepdims=True)
    var = jnp.mean((x - mean) ** 2, axis=0, keepdims=True)
    return (x - mean) * jax.lax.rsqrt(var + eps) * gamma + beta


def _rel_linear_agg(scat_h, feats_b, w3_ref, bias):
    """linear(scatter_add(...).view(n, R*D)) as ONE wide MXU matmul.

    scat_h : [n_out, R*n_msg] bf16  hstacked per-relation scatter operator
    feats_b: [n_msg, D_in]    bf16  per-message features
    w3_ref : [R, D_in, D_out] bf16  relational linear weight (row blocks of linear.weight.T)
    """
    num_rel = w3_ref.shape[0]
    # vstack_r(feats @ Wl[r]) -> [R*n_msg, D_out], row order (r, msg) matches scat_h cols.
    p = jnp.concatenate(
        [jnp.dot(feats_b, w3_ref[r], preferred_element_type=F32) for r in range(num_rel)],
        axis=0,
    ).astype(BF16)
    return jnp.dot(scat_h, p, preferred_element_type=F32) + bias


# ------------------------- fully fused forward kernel ----------------------- #

def _gearnet_forward_kernel(*refs, num_layers, shortcut, concat_hidden):
    """Entire GearNet forward: all layers + edge message passing + BNs + concat + pool."""
    x_ref, ef_ref, gsrc_ref, snode_ref, slg_ref, pool_ref = refs[:_N_DATA]
    node_out_ref, graph_out_ref = refs[_N_DATA + _N_PER_LAYER * num_layers:]

    ef_b = ef_ref[...].astype(BF16)     # [E, ED_feat]  original edge features (bf16)
    gsrc = gsrc_ref[...]                # [E, N]   bf16 one-hot gather of x[src]
    snode = snode_ref[...]              # [N, R*E] bf16 hstacked node scatter operator
    slg = slg_ref[...]                  # [E, B*E] bf16 composed line-graph operator

    layer_input = x_ref[...]            # [N, D_in] f32
    edge_input = ef_ref[...]            # [E, ED_in] f32 (line-graph node features)
    hiddens = []

    for i in range(num_layers):         # static Python loop (traced once)
        base = _N_DATA + _N_PER_LAYER * i
        (wet, be, wl3, bl, wst, bs, gamma, beta,
         ewl3, ebl, ews, ebs, egamma, ebeta,
         ogamma, obeta) = refs[base:base + _N_PER_LAYER]

        x_b = layer_input.astype(BF16)
        ei_b = edge_input.astype(BF16)

        # --- message: x[src] + edge_linear(edge_feature) --------------------
        edge_proj = jnp.dot(ef_b, wet[...], preferred_element_type=F32) + be[...]
        msg = jnp.dot(gsrc, x_b, preferred_element_type=F32) + edge_proj       # [E, D_in]

        # --- node relational conv: linear(aggregate) + self_loop -> BN -> relu
        h = _rel_linear_agg(snode, msg.astype(BF16), wl3, bl[...])
        h = h + jnp.dot(x_b, wst[...], preferred_element_type=F32) + bs[...]
        h = _train_bn(h, gamma[...], beta[...])
        h = jnp.maximum(h, 0.0)
        if shortcut[i]:                 # static flag (only when D_in == D_out)
            h = h + layer_input

        # --- line-graph relational conv (edge message passing) --------------
        eh = _rel_linear_agg(slg, ei_b, ewl3, ebl[...])
        eh = eh + jnp.dot(ei_b, ews[...], preferred_element_type=F32) + ebs[...]
        eh = _train_bn(eh, egamma[...], ebeta[...])
        eh = jnp.maximum(eh, 0.0)

        # --- edge -> node update: relu(layers[i].linear(scatter_add(edge_hidden)))
        upd = _rel_linear_agg(snode, eh.astype(BF16), wl3, bl[...])
        h = h + jnp.maximum(upd, 0.0)

        # --- outer self.batch_norms[i] ---------------------------------------
        h = _train_bn(h, ogamma[...], obeta[...])

        hiddens.append(h)
        layer_input = h
        edge_input = eh

    node_feature = jnp.concatenate(hiddens, axis=-1) if concat_hidden else hiddens[-1]
    node_out_ref[...] = node_feature
    graph_out_ref[...] = jnp.dot(pool_ref[...], node_feature.astype(BF16),
                                 preferred_element_type=F32)                    # sum readout


def pallas_gearnet_forward(x, edge_feat, gather_src, snode, slg, pool_mat,
                           flat_params, shortcut, concat_hidden, d_cat):
    n = x.shape[0]
    g = pool_mat.shape[0]
    num_layers = len(flat_params) // _N_PER_LAYER
    n_in = _N_DATA + len(flat_params)
    kern = functools.partial(_gearnet_forward_kernel, num_layers=num_layers,
                             shortcut=tuple(bool(s) for s in shortcut),
                             concat_hidden=concat_hidden)
    return pl.pallas_call(
        kern,
        out_shape=(jax.ShapeDtypeStruct((n, d_cat), F32),
                   jax.ShapeDtypeStruct((g, d_cat), F32)),
        in_specs=[pl.BlockSpec(memory_space=VMEM)] * n_in,
        out_specs=(pl.BlockSpec(memory_space=VMEM),
                   pl.BlockSpec(memory_space=VMEM)),
    )(x, edge_feat, gather_src, snode, slg, pool_mat, *flat_params)


# ------------------------------ GearNet model ------------------------------ #

class GearNetPallas:
    def __init__(self, input_dim=8, num_relation=2, num_layers=3, emb_dim=16,
                 short_cut=True, concat_hidden=True, num_angle_bin=4, key=None):
        self.input_dim = input_dim
        self.num_relation = num_relation
        self.num_layers = num_layers
        self.num_angle_bin = num_angle_bin
        self.short_cut = short_cut
        self.concat_hidden = concat_hidden
        # _get_num_edge_features: 2*input_dim + num_relation + seq_dist(1) + dist(1)
        self.edge_input_dim = input_dim * 2 + num_relation + 1 + 1
        self.dims = [input_dim] + [emb_dim] * num_layers
        self.edge_dims = [self.edge_input_dim] + self.dims[:-1]
        self.params = self._init_params(key)

    def _init_params(self, key):
        def lin(k, d_in, d_out):
            k1, k2 = jax.random.split(k)
            scale = 1.0 / jnp.sqrt(d_in)
            wt = jax.random.uniform(k1, (d_in, d_out), F32, -scale, scale)
            b = jax.random.uniform(k2, (1, d_out), F32, -scale, scale)
            return wt, b

        params = {"layers": [], "edge_layers": [], "batch_norms": []}
        keys = jax.random.split(key, 3 * self.num_layers)
        for i in range(self.num_layers):
            d_in, d_out = self.dims[i], self.dims[i + 1]
            k = jax.random.split(keys[3 * i], 5)
            wl, bl = lin(k[0], self.num_relation * d_in, d_out)   # layers[i].linear
            ws, bs = lin(k[1], d_in, d_out)                       # layers[i].self_loop
            we, be = lin(k[2], self.edge_input_dim, d_in)         # layers[i].edge_linear
            params["layers"].append(dict(
                wl3=wl.reshape(self.num_relation, d_in, d_out).astype(BF16), bl=bl,
                wst=ws.astype(BF16), bs=bs, wet=we.astype(BF16), be=be,
                gamma=1.0 + 0.1 * jax.random.normal(k[3], (1, d_out), F32),
                beta=0.1 * jax.random.normal(k[4], (1, d_out), F32)))

            ed_in, ed_out = self.edge_dims[i], self.edge_dims[i + 1]
            k = jax.random.split(keys[3 * i + 1], 4)
            ewl, ebl = lin(k[0], self.num_angle_bin * ed_in, ed_out)
            ews, ebs = lin(k[1], ed_in, ed_out)
            params["edge_layers"].append(dict(
                wl3=ewl.reshape(self.num_angle_bin, ed_in, ed_out).astype(BF16), bl=ebl,
                wst=ews.astype(BF16), bs=ebs,
                gamma=1.0 + 0.1 * jax.random.normal(k[2], (1, ed_out), F32),
                beta=0.1 * jax.random.normal(k[3], (1, ed_out), F32)))

            k = jax.random.split(keys[3 * i + 2], 2)
            params["batch_norms"].append(dict(
                gamma=1.0 + 0.1 * jax.random.normal(k[0], (1, d_out), F32),
                beta=0.1 * jax.random.normal(k[1], (1, d_out), F32)))
        return params

    def __call__(self, x, pos, edge_index, edge_type, batch_idx, num_graphs):
        n_nodes = x.shape[0]
        n_edges = edge_index.shape[1]
        src, dst = edge_index[0], edge_index[1]
        num_rel = self.num_relation
        num_bin = self.num_angle_bin

        # ---- gear_net_edge_features (torch.pairwise_distance adds eps=1e-6 to diff) ----
        u = jnp.take(x, src, axis=0)
        v = jnp.take(x, dst, axis=0)
        etype_oh = jax.nn.one_hot(edge_type, num_rel, dtype=F32)
        diff = jnp.take(pos, src, axis=0) - jnp.take(pos, dst, axis=0) + 1e-6
        dists = jnp.sqrt(jnp.sum(diff ** 2, axis=-1, keepdims=True))
        seq_dist = jnp.abs(src - dst).astype(F32)[:, None]
        edge_feat = jnp.concatenate([u, v, etype_oh, seq_dist, dists], axis=1)

        # ---- gather operator for x[src]:  [E, N] one-hot ----
        gather_src = jax.nn.one_hot(src, n_nodes, dtype=F32).astype(BF16)

        # ---- hstacked node scatter operator: S[n, r*E + e] = (dst[e]==n)*(type[e]==r)*w(=1) ----
        dst_oh = jax.nn.one_hot(dst, n_nodes, dtype=F32).T            # [N, E]
        rel_oh = jax.nn.one_hot(edge_type, num_rel, dtype=F32).T      # [R, E]
        scat3 = rel_oh[:, None, :] * dst_oh[None, :, :]               # [R, N, E]
        snode = jnp.transpose(scat3, (1, 0, 2)).reshape(
            n_nodes, num_rel * n_edges).astype(BF16)                  # [N, R*E]

        # ---- SpatialLineGraph composed with the e1-gather into one [E, B*E] operator ----
        # candidate pair (e1 -> e2) valid iff dst[e1] == src[e2]; relation = angle bin
        e1 = jnp.repeat(jnp.arange(n_edges), n_edges)
        e2 = jnp.tile(jnp.arange(n_edges), n_edges)
        valid = (dst[e1] == src[e2]).astype(F32)
        node_i = dst[e2]
        node_j = dst[e1]
        node_k = src[e1]
        v1 = jnp.take(pos, node_i, axis=0) - jnp.take(pos, node_j, axis=0)
        v2 = jnp.take(pos, node_k, axis=0) - jnp.take(pos, node_j, axis=0)
        cosv = jnp.sum(v1 * v2, axis=-1)
        sinv = jnp.sqrt(jnp.sum(jnp.cross(v1, v2) ** 2, axis=-1))
        angle = jnp.arctan2(sinv, cosv)
        abin = jnp.clip((angle / jnp.pi * num_bin).astype(jnp.int32), 0, num_bin - 1)
        bin_oh = jax.nn.one_hot(abin, num_bin, dtype=F32)             # [E*E, B]
        a_pairs = (valid[:, None] * bin_oh).reshape(n_edges, n_edges, num_bin)  # [e1, e2, b]
        # S_lg[e2, b*E + e1] = valid(e1,e2) * (bin(e1,e2)==b)
        slg = jnp.transpose(a_pairs, (1, 2, 0)).reshape(
            n_edges, num_bin * n_edges).astype(BF16)                  # [E, B*E]

        # ---- sum-pool operator over graphs ----
        pool_mat = jax.nn.one_hot(batch_idx, num_graphs, dtype=F32).T.astype(BF16)  # [G, N]

        # ---- flatten per-layer parameters + static shortcut flags ----
        flat_params, shortcut_flags = [], []
        for i in range(self.num_layers):
            p = self.params["layers"][i]
            ep = self.params["edge_layers"][i]
            bnp = self.params["batch_norms"][i]
            flat_params += [p["wet"], p["be"], p["wl3"], p["bl"], p["wst"], p["bs"],
                            p["gamma"], p["beta"],
                            ep["wl3"], ep["bl"], ep["wst"], ep["bs"],
                            ep["gamma"], ep["beta"],
                            bnp["gamma"], bnp["beta"]]
            shortcut_flags.append(self.short_cut and self.dims[i] == self.dims[i + 1])

        d_cat = sum(self.dims[1:]) if self.concat_hidden else self.dims[-1]
        node_feature, graph_feature = pallas_gearnet_forward(
            x, edge_feat, gather_src, snode, slg, pool_mat,
            flat_params, shortcut_flags, self.concat_hidden, d_cat)
        return {"node_embedding": node_feature, "graph_embedding": graph_feature}


# --------------------------------- main ------------------------------------ #

if __name__ == "__main__":
    key = jax.random.PRNGKey(0)
    kx, kpos, ksrc, kdst, ktype, kparam = jax.random.split(key, 6)

    N, E, G = 16, 24, 2
    input_dim, num_relation, num_layers, emb_dim, num_angle_bin = 8, 2, 3, 16, 4

    x = jax.random.normal(kx, (N, input_dim), F32)
    pos = jax.random.normal(kpos, (N, 3), F32)
    src = jax.random.randint(ksrc, (E,), 0, N)
    dst = jax.random.randint(kdst, (E,), 0, N)
    edge_index = jnp.stack([src, dst])
    edge_type = jax.random.randint(ktype, (E,), 0, num_relation)
    batch_idx = jnp.concatenate([jnp.zeros(N // 2, jnp.int32),
                                 jnp.ones(N - N // 2, jnp.int32)])

    model = GearNetPallas(input_dim=input_dim, num_relation=num_relation,
                          num_layers=num_layers, emb_dim=emb_dim,
                          short_cut=True, concat_hidden=True,
                          num_angle_bin=num_angle_bin, key=kparam)

    out = model(x, pos, edge_index, edge_type, batch_idx, G)
    jax.block_until_ready(out)

    assert out["node_embedding"].shape == (N, emb_dim * num_layers)
    assert out["graph_embedding"].shape == (G, emb_dim * num_layers)
    assert jnp.all(jnp.isfinite(out["node_embedding"]))
    assert jnp.all(jnp.isfinite(out["graph_embedding"]))
    print("KERNEL_OK")
</pallas_src>

<mosaic_0001>
module attributes {stable_mosaic.version = 11 : i64} {
  func.func @_gearnet_forward_kernel(%arg0: memref<16x8xf32, #tpu.memory_space<vmem>>, %arg1: memref<24x20xf32, #tpu.memory_space<vmem>>, %arg2: memref<24x16xbf16, #tpu.memory_space<vmem>>, %arg3: memref<16x48xbf16, #tpu.memory_space<vmem>>, %arg4: memref<24x96xbf16, #tpu.memory_space<vmem>>, %arg5: memref<2x16xbf16, #tpu.memory_space<vmem>>, %arg6: memref<20x8xbf16, #tpu.memory_space<vmem>>, %arg7: memref<1x8xf32, #tpu.memory_space<vmem>>, %arg8: memref<2x8x16xbf16, #tpu.memory_space<vmem>>, %arg9: memref<1x16xf32, #tpu.memory_space<vmem>>, %arg10: memref<8x16xbf16, #tpu.memory_space<vmem>>, %arg11: memref<1x16xf32, #tpu.memory_space<vmem>>, %arg12: memref<1x16xf32, #tpu.memory_space<vmem>>, %arg13: memref<1x16xf32, #tpu.memory_space<vmem>>, %arg14: memref<4x20x8xbf16, #tpu.memory_space<vmem>>, %arg15: memref<1x8xf32, #tpu.memory_space<vmem>>, %arg16: memref<20x8xbf16, #tpu.memory_space<vmem>>, %arg17: memref<1x8xf32, #tpu.memory_space<vmem>>, %arg18: memref<1x8xf32, #tpu.memory_space<vmem>>, %arg19: memref<1x8xf32, #tpu.memory_space<vmem>>, %arg20: memref<1x16xf32, #tpu.memory_space<vmem>>, %arg21: memref<1x16xf32, #tpu.memory_space<vmem>>, %arg22: memref<20x16xbf16, #tpu.memory_space<vmem>>, %arg23: memref<1x16xf32, #tpu.memory_space<vmem>>, %arg24: memref<2x16x16xbf16, #tpu.memory_space<vmem>>, %arg25: memref<1x16xf32, #tpu.memory_space<vmem>>, %arg26: memref<16x16xbf16, #tpu.memory_space<vmem>>, %arg27: memref<1x16xf32, #tpu.memory_space<vmem>>, %arg28: memref<1x16xf32, #tpu.memory_space<vmem>>, %arg29: memref<1x16xf32, #tpu.memory_space<vmem>>, %arg30: memref<4x8x16xbf16, #tpu.memory_space<vmem>>, %arg31: memref<1x16xf32, #tpu.memory_space<vmem>>, %arg32: memref<8x16xbf16, #tpu.memory_space<vmem>>, %arg33: memref<1x16xf32, #tpu.memory_space<vmem>>, %arg34: memref<1x16xf32, #tpu.memory_space<vmem>>, %arg35: memref<1x16xf32, #tpu.memory_space<vmem>>, %arg36: memref<1x16xf32, #tpu.memory_space<vmem>>, %arg37: memref<1x16xf32, #tpu.memory_space<vmem>>, %arg38: memref<20x16xbf16, #tpu.memory_space<vmem>>, %arg39: memref<1x16xf32, #tpu.memory_space<vmem>>, %arg40: memref<2x16x16xbf16, #tpu.memory_space<vmem>>, %arg41: memref<1x16xf32, #tpu.memory_space<vmem>>, %arg42: memref<16x16xbf16, #tpu.memory_space<vmem>>, %arg43: memref<1x16xf32, #tpu.memory_space<vmem>>, %arg44: memref<1x16xf32, #tpu.memory_space<vmem>>, %arg45: memref<1x16xf32, #tpu.memory_space<vmem>>, %arg46: memref<4x16x16xbf16, #tpu.memory_space<vmem>>, %arg47: memref<1x16xf32, #tpu.memory_space<vmem>>, %arg48: memref<16x16xbf16, #tpu.memory_space<vmem>>, %arg49: memref<1x16xf32, #tpu.memory_space<vmem>>, %arg50: memref<1x16xf32, #tpu.memory_space<vmem>>, %arg51: memref<1x16xf32, #tpu.memory_space<vmem>>, %arg52: memref<1x16xf32, #tpu.memory_space<vmem>>, %arg53: memref<1x16xf32, #tpu.memory_space<vmem>>, %arg54: memref<16x48xf32, #tpu.memory_space<vmem>>, %arg55: memref<2x48xf32, #tpu.memory_space<vmem>>) attributes {dimension_semantics = [], scalar_prefetch = 0 : i64, scratch_operands = 0 : i64, tpu.core_type = #tpu.core_type<tc>} {
    %c0 = arith.constant 0 : index
    %c0_0 = arith.constant 0 : index
    %0 = vector.load %arg1[%c0, %c0_0] : memref<24x20xf32, #tpu.memory_space<vmem>>, vector<24x20xf32>
    %1 = arith.truncf %0 : vector<24x20xf32> to vector<24x20xbf16>
    %c0_1 = arith.constant 0 : index
    %c0_2 = arith.constant 0 : index
    %2 = vector.load %arg2[%c0_1, %c0_2] : memref<24x16xbf16, #tpu.memory_space<vmem>>, vector<24x16xbf16>
    %c0_3 = arith.constant 0 : index
    %c0_4 = arith.constant 0 : index
    %3 = vector.load %arg3[%c0_3, %c0_4] : memref<16x48xbf16, #tpu.memory_space<vmem>>, vector<16x48xbf16>
    %c0_5 = arith.constant 0 : index
    %c0_6 = arith.constant 0 : index
    %4 = vector.load %arg4[%c0_5, %c0_6] : memref<24x96xbf16, #tpu.memory_space<vmem>>, vector<24x96xbf16>
    %c0_7 = arith.constant 0 : index
    %c0_8 = arith.constant 0 : index
    %5 = vector.load %arg0[%c0_7, %c0_8] : memref<16x8xf32, #tpu.memory_space<vmem>>, vector<16x8xf32>
    %c0_9 = arith.constant 0 : index
    %c0_10 = arith.constant 0 : index
    %6 = vector.load %arg1[%c0_9, %c0_10] : memref<24x20xf32, #tpu.memory_space<vmem>>, vector<24x20xf32>
    %7 = arith.truncf %5 : vector<16x8xf32> to vector<16x8xbf16>
    %8 = arith.truncf %6 : vector<24x20xf32> to vector<24x20xbf16>
    %c0_11 = arith.constant 0 : index
    %c0_12 = arith.constant 0 : index
    %9 = vector.load %arg6[%c0_11, %c0_12] : memref<20x8xbf16, #tpu.memory_space<vmem>>, vector<20x8xbf16>
    %cst = arith.constant dense<0.000000e+00> : vector<24x8xf32>
    %10 = tpu.matmul %1, %9, %cst {dimension_numbers = #tpu.dot_dimension_numbers<[1], [0], [0], [1], [0, 0, 1, 1], [], []>} : vector<24x20xbf16>, vector<20x8xbf16>, vector<24x8xf32> -> vector<24x8xf32>
    %c0_13 = arith.constant 0 : index
    %c0_14 = arith.constant 0 : index
    %11 = vector.load %arg7[%c0_13, %c0_14] : memref<1x8xf32, #tpu.memory_space<vmem>>, vector<1x8xf32>
    %12 = vector.broadcast %11 : vector<1x8xf32> to vector<24x8xf32>
    %13 = arith.addf %10, %12 : vector<24x8xf32>
    %cst_15 = arith.constant dense<0.000000e+00> : vector<24x8xf32>
    %14 = tpu.matmul %2, %7, %cst_15 {dimension_numbers = #tpu.dot_dimension_numbers<[1], [0], [0], [1], [0, 0, 1, 1], [], []>} : vector<24x16xbf16>, vector<16x8xbf16>, vector<24x8xf32> -> vector<24x8xf32>
    %15 = arith.addf %14, %13 : vector<24x8xf32>
    %16 = arith.truncf %15 : vector<24x8xf32> to vector<24x8xbf16>
    %c0_16 = arith.constant 0 : index
    %c0_17 = arith.constant 0 : index
    %17 = vector.load %arg9[%c0_16, %c0_17] : memref<1x16xf32, #tpu.memory_space<vmem>>, vector<1x16xf32>
    %c0_18 = arith.constant 0 : index
    %c0_19 = arith.constant 0 : index
    %c0_20 = arith.constant 0 : index
    %18 = vector.load %arg8[%c0_18, %c0_19, %c0_20] : memref<2x8x16xbf16, #tpu.memory_space<vmem>>, vector<1x8x16xbf16>
    %19 = vector.shape_cast %18 : vector<1x8x16xbf16> to vector<8x16xbf16>
    %cst_21 = arith.constant dense<0.000000e+00> : vector<24x16xf32>
    %20 = tpu.matmul %16, %19, %cst_21 {dimension_numbers = #tpu.dot_dimension_numbers<[1], [0], [0], [1], [0, 0, 1, 1], [], []>} : vector<24x8xbf16>, vector<8x16xbf16>, vector<24x16xf32> -> vector<24x16xf32>
    %c1 = arith.constant 1 : index
    %c0_22 = arith.constant 0 : index
    %c0_23 = arith.constant 0 : index
    %21 = vector.load %arg8[%c1, %c0_22, %c0_23] : memref<2x8x16xbf16, #tpu.memory_space<vmem>>, vector<1x8x16xbf16>
    %22 = vector.shape_cast %21 : vector<1x8x16xbf16> to vector<8x16xbf16>
    %cst_24 = arith.constant dense<0.000000e+00> : vector<24x16xf32>
    %23 = tpu.matmul %16, %22, %cst_24 {dimension_numbers = #tpu.dot_dimension_numbers<[1], [0], [0], [1], [0, 0, 1, 1], [], []>} : vector<24x8xbf16>, vector<8x16xbf16>, vector<24x16xf32> -> vector<24x16xf32>
    %24 = tpu.concatenate %20, %23 in 0 : vector<24x16xf32>, vector<24x16xf32> -> vector<48x16xf32>
    %25 = arith.truncf %24 : vector<48x16xf32> to vector<48x16xbf16>
    %cst_25 = arith.constant dense<0.000000e+00> : vector<16x16xf32>
    %26 = tpu.matmul %3, %25, %cst_25 {dimension_numbers = #tpu.dot_dimension_numbers<[1], [0], [0], [1], [0, 0, 1, 1], [], []>} : vector<16x48xbf16>, vector<48x16xbf16>, vector<16x16xf32> -> vector<16x16xf32>
    %27 = vector.broadcast %17 : vector<1x16xf32> to vector<16x16xf32>
    %28 = arith.addf %26, %27 : vector<16x16xf32>
    %c0_26 = arith.constant 0 : index
    %c0_27 = arith.constant 0 : index
    %29 = vector.load %arg10[%c0_26, %c0_27] : memref<8x16xbf16, #tpu.memory_space<vmem>>, vector<8x16xbf16>
    %cst_28 = arith.constant dense<0.000000e+00> : vector<16x16xf32>
    %30 = tpu.matmul %7, %29, %cst_28 {dimension_numbers = #tpu.dot_dimension_numbers<[1], [0], [0], [1], [0, 0, 1, 1], [], []>} : vector<16x8xbf16>, vector<8x16xbf16>, vector<16x16xf32> -> vector<16x16xf32>
    %31 = arith.addf %28, %30 : vector<16x16xf32>
    %c0_29 = arith.constant 0 : index
    %c0_30 = arith.constant 0 : index
    %32 = vector.load %arg11[%c0_29, %c0_30] : memref<1x16xf32, #tpu.memory_space<vmem>>, vector<1x16xf32>
    %33 = vector.broadcast %32 : vector<1x16xf32> to vector<16x16xf32>
    %34 = arith.addf %31, %33 : vector<16x16xf32>
    %c0_31 = arith.constant 0 : index
    %c0_32 = arith.constant 0 : index
    %35 = vector.load %arg12[%c0_31, %c0_32] : memref<1x16xf32, #tpu.memory_space<vmem>>, vector<1x16xf32>
    %c0_33 = arith.constant 0 : index
    %c0_34 = arith.constant 0 : index
    %36 = vector.load %arg13[%c0_33, %c0_34] : memref<1x16xf32, #tpu.memory_space<vmem>>, vector<1x16xf32>
    %cst_35 = arith.constant dense<0.000000e+00> : vector<16xf32>
    %37 = vector.multi_reduction <add>, %34, %cst_35 [0] : vector<16x16xf32> to vector<16xf32>
    %38 = vector.shape_cast %37 : vector<16xf32> to vector<1x16xf32>
    %cst_36 = arith.constant 1.600000e+01 : f32
    %39 = vector.broadcast %cst_36 : f32 to vector<1x16xf32>
    %40 = arith.divf %38, %39 : vector<1x16xf32>
    %41 = vector.broadcast %40 : vector<1x16xf32> to vector<16x16xf32>
    %42 = arith.subf %34, %41 : vector<16x16xf32>
    %43 = arith.mulf %42, %42 : vector<16x16xf32>
    %cst_37 = arith.constant dense<0.000000e+00> : vector<16xf32>
    %44 = vector.multi_reduction <add>, %43, %cst_37 [0] : vector<16x16xf32> to vector<16xf32>
    %45 = vector.shape_cast %44 : vector<16xf32> to vector<1x16xf32>
    %cst_38 = arith.constant 1.600000e+01 : f32
    %46 = vector.broadcast %cst_38 : f32 to vector<1x16xf32>
    %47 = arith.divf %45, %46 : vector<1x16xf32>
    %48 = vector.broadcast %40 : vector<1x16xf32> to vector<16x16xf32>
    %49 = arith.subf %34, %48 : vector<16x16xf32>
    %cst_39 = arith.constant 9.99999974E-6 : f32
    %50 = vector.broadcast %cst_39 : f32 to vector<1x16xf32>
    %51 = arith.addf %47, %50 : vector<1x16xf32>
    %52 = math.rsqrt %51 : vector<1x16xf32>
    %53 = vector.broadcast %52 : vector<1x16xf32> to vector<16x16xf32>
    %54 = arith.mulf %49, %53 : vector<16x16xf32>
    %55 = vector.broadcast %35 : vector<1x16xf32> to vector<16x16xf32>
    %56 = arith.mulf %54, %55 : vector<16x16xf32>
    %57 = vector.broadcast %36 : vector<1x16xf32> to vector<16x16xf32>
    %58 = arith.addf %56, %57 : vector<16x16xf32>
    %cst_40 = arith.constant 0.000000e+00 : f32
    %59 = vector.broadcast %cst_40 : f32 to vector<16x16xf32>
    %60 = arith.maximumf %58, %59 : vector<16x16xf32>
    %c0_41 = arith.constant 0 : index
    %c0_42 = arith.constant 0 : index
    %61 = vector.load %arg15[%c0_41, %c0_42] : memref<1x8xf32, #tpu.memory_space<vmem>>, vector<1x8xf32>
    %c0_43 = arith.constant 0 : index
    %c0_44 = arith.constant 0 : index
    %c0_45 = arith.constant 0 : index
    %62 = vector.load %arg14[%c0_43, %c0_44, %c0_45] : memref<4x20x8xbf16, #tpu.memory_space<vmem>>, vector<1x20x8xbf16>
    %63 = vector.shape_cast %62 : vector<1x20x8xbf16> to vector<20x8xbf16>
    %cst_46 = arith.constant dense<0.000000e+00> : vector<24x8xf32>
    %64 = tpu.matmul %8, %63, %cst_46 {dimension_numbers = #tpu.dot_dimension_numbers<[1], [0], [0], [1], [0, 0, 1, 1], [], []>} : vector<24x20xbf16>, vector<20x8xbf16>, vector<24x8xf32> -> vector<24x8xf32>
    %c1_47 = arith.constant 1 : index
    %c0_48 = arith.constant 0 : index
    %c0_49 = arith.constant 0 : index
    %65 = vector.load %arg14[%c1_47, %c0_48, %c0_49] : memref<4x20x8xbf16, #tpu.memory_space<vmem>>, vector<1x20x8xbf16>
    %66 = vector.shape_cast %65 : vector<1x20x8xbf16> to vector<20x8xbf16>
    %cst_50 = arith.constant dense<0.000000e+00> : vector<24x8xf32>
    %67 = tpu.matmul %8, %66, %cst_50 {dimension_numbers = #tpu.dot_dimension_numbers<[1], [0], [0], [1], [0, 0, 1, 1], [], []>} : vector<24x20xbf16>, vector<20x8xbf16>, vector<24x8xf32> -> vector<24x8xf32>
    %c2 = arith.constant 2 : index
    %c0_51 = arith.constant 0 : index
    %c0_52 = arith.constant 0 : index
    %68 = vector.load %arg14[%c2, %c0_51, %c0_52] : memref<4x20x8xbf16, #tpu.memory_space<vmem>>, vector<1x20x8xbf16>
    %69 = vector.shape_cast %68 : vector<1x20x8xbf16> to vector<20x8xbf16>
    %cst_53 = arith.constant dense<0.000000e+00> : vector<24x8xf32>
    %70 = tpu.matmul %8, %69, %cst_53 {dimension_numbers = #tpu.dot_dimension_numbers<[1], [0], [0], [1], [0, 0, 1, 1], [], []>} : vector<24x20xbf16>, vector<20x8xbf16>, vector<24x8xf32> -> vector<24x8xf32>
    %c3 = arith.constant 3 : index
    %c0_54 = arith.constant 0 : index
    %c0_55 = arith.constant 0 : index
    %71 = vector.load %arg14[%c3, %c0_54, %c0_55] : memref<4x20x8xbf16, #tpu.memory_space<vmem>>, vector<1x20x8xbf16>
    %72 = vector.shape_cast %71 : vector<1x20x8xbf16> to vector<20x8xbf16>
    %cst_56 = arith.constant dense<0.000000e+00> : vector<24x8xf32>
    %73 = tpu.matmul %8, %72, %cst_56 {dimension_numbers = #tpu.dot_dimension_numbers<[1], [0], [0], [1], [0, 0, 1, 1], [], []>} : vector<24x20xbf16>, vector<20x8xbf16>, vector<24x8xf32> -> vector<24x8xf32>
    %74 = tpu.concatenate %64, %67, %70, %73 in 0 : vector<24x8xf32>, vector<24x8xf32>, vector<24x8xf32>, vector<24x8xf32> -> vector<96x8xf32>
    %75 = arith.truncf %74 : vector<96x8xf32> to vector<96x8xbf16>
    %cst_57 = arith.constant dense<0.000000e+00> : vector<24x8xf32>
    %76 = tpu.matmul %4, %75, %cst_57 {dimension_numbers = #tpu.dot_dimension_numbers<[1], [0], [0], [1], [0, 0, 1, 1], [], []>} : vector<24x96xbf16>, vector<96x8xbf16>, vector<24x8xf32> -> vector<24x8xf32>
    %77 = vector.broadcast %61 : vector<1x8xf32> to vector<24x8xf32>
    %78 = arith.addf %76, %77 : vector<24x8xf32>
    %c0_58 = arith.constant 0 : index
    %c0_59 = arith.constant 0 : index
    %79 = vector.load %arg16[%c0_58, %c0_59] : memref<20x8xbf16, #tpu.memory_space<vmem>>, vector<20x8xbf16>
    %cst_60 = arith.constant dense<0.000000e+00> : vector<24x8xf32>
    %80 = tpu.matmul %8, %79, %cst_60 {dimension_numbers = #tpu.dot_dimension_numbers<[1], [0], [0], [1], [0, 0, 1, 1], [], []>} : vector<24x20xbf16>, vector<20x8xbf16>, vector<24x8xf32> -> vector<24x8xf32>
    %81 = arith.addf %78, %80 : vector<24x8xf32>
    %c0_61 = arith.constant 0 : index
    %c0_62 = arith.constant 0 : index
    %82 = vector.load %arg17[%c0_61, %c0_62] : memref<1x8xf32, #tpu.memory_space<vmem>>, vector<1x8xf32>
    %83 = vector.broadcast %82 : vector<1x8xf32> to vector<24x8xf32>
    %84 = arith.addf %81, %83 : vector<24x8xf32>
    %c0_63 = arith.constant 0 : index
    %c0_64 = arith.constant 0 : index
    %85 = vector.load %arg18[%c0_63, %c0_64] : memref<1x8xf32, #tpu.memory_space<vmem>>, vector<1x8xf32>
    %c0_65 = arith.constant 0 : index
    %c0_66 = arith.constant 0 : index
    %86 = vector.load %arg19[%c0_65, %c0_66] : memref<1x8xf32, #tpu.memory_space<vmem>>, vector<1x8xf32>
    %cst_67 = arith.constant dense<0.000000e+00> : vector<8xf32>
    %87 = vector.multi_reduction <add>, %84, %cst_67 [0] : vector<24x8xf32> to vector<8xf32>
    %88 = vector.shape_cast %87 : vector<8xf32> to vector<1x8xf32>
    %cst_68 = arith.constant 2.400000e+01 : f32
    %89 = vector.broadcast %cst_68 : f32 to vector<1x8xf32>
    %90 = arith.divf %88, %89 : vector<1x8xf32>
    %91 = vector.broadcast %90 : vector<1x8xf32> to vector<24x8xf32>
    %92 = arith.subf %84, %91 : vector<24x8xf32>
    %93 = arith.mulf %92, %92 : vector<24x8xf32>
    %cst_69 = arith.constant dense<0.000000e+00> : vector<8xf32>
    %94 = vector.multi_reduction <add>, %93, %cst_69 [0] : vector<24x8xf32> to vector<8xf32>
    %95 = vector.shape_cast %94 : vector<8xf32> to vector<1x8xf32>
    %cst_70 = arith.constant 2.400000e+01 : f32
    %96 = vector.broadcast %cst_70 : f32 to vector<1x8xf32>
    %97 = arith.divf %95, %96 : vector<1x8xf32>
    %98 = vector.broadcast %90 : vector<1x8xf32> to vector<24x8xf32>
    %99 = arith.subf %84, %98 : vector<24x8xf32>
    %cst_71 = arith.constant 9.99999974E-6 : f32
    %100 = vector.broadcast %cst_71 : f32 to vector<1x8xf32>
    %101 = arith.addf %97, %100 : vector<1x8xf32>
    %102 = math.rsqrt %101 : vector<1x8xf32>
    %103 = vector.broadcast %102 : vector<1x8xf32> to vector<24x8xf32>
    %104 = arith.mulf %99, %103 : vector<24x8xf32>
    %105 = vector.broadcast %85 : vector<1x8xf32> to vector<24x8xf32>
    %106 = arith.mulf %104, %105 : vector<24x8xf32>
    %107 = vector.broadcast %86 : vector<1x8xf32> to vector<24x8xf32>
    %108 = arith.addf %106, %107 : vector<24x8xf32>
    %cst_72 = arith.constant 0.000000e+00 : f32
    %109 = vector.broadcast %cst_72 : f32 to vector<24x8xf32>
    %110 = arith.maximumf %108, %109 : vector<24x8xf32>
    %111 = arith.truncf %110 : vector<24x8xf32> to vector<24x8xbf16>
    %c0_73 = arith.constant 0 : index
    %c0_74 = arith.constant 0 : index
    %112 = vector.load %arg9[%c0_73, %c0_74] : memref<1x16xf32, #tpu.memory_space<vmem>>, vector<1x16xf32>
    %c0_75 = arith.constant 0 : index
    %c0_76 = arith.constant 0 : index
    %c0_77 = arith.constant 0 : index
    %113 = vector.load %arg8[%c0_75, %c0_76, %c0_77] : memref<2x8x16xbf16, #tpu.memory_space<vmem>>, vector<1x8x16xbf16>
    %114 = vector.shape_cast %113 : vector<1x8x16xbf16> to vector<8x16xbf16>
    %cst_78 = arith.constant dense<0.000000e+00> : vector<24x16xf32>
    %115 = tpu.matmul %111, %114, %cst_78 {dimension_numbers = #tpu.dot_dimension_numbers<[1], [0], [0], [1], [0, 0, 1, 1], [], []>} : vector<24x8xbf16>, vector<8x16xbf16>, vector<24x16xf32> -> vector<24x16xf32>
    %c1_79 = arith.constant 1 : index
    %c0_80 = arith.constant 0 : index
    %c0_81 = arith.constant 0 : index
    %116 = vector.load %arg8[%c1_79, %c0_80, %c0_81] : memref<2x8x16xbf16, #tpu.memory_space<vmem>>, vector<1x8x16xbf16>
    %117 = vector.shape_cast %116 : vector<1x8x16xbf16> to vector<8x16xbf16>
    %cst_82 = arith.constant dense<0.000000e+00> : vector<24x16xf32>
    %118 = tpu.matmul %111, %117, %cst_82 {dimension_numbers = #tpu.dot_dimension_numbers<[1], [0], [0], [1], [0, 0, 1, 1], [], []>} : vector<24x8xbf16>, vector<8x16xbf16>, vector<24x16xf32> -> vector<24x16xf32>
    %119 = tpu.concatenate %115, %118 in 0 : vector<24x16xf32>, vector<24x16xf32> -> vector<48x16xf32>
    %120 = arith.truncf %119 : vector<48x16xf32> to vector<48x16xbf16>
    %cst_83 = arith.constant dense<0.000000e+00> : vector<16x16xf32>
    %121 = tpu.matmul %3, %120, %cst_83 {dimension_numbers = #tpu.dot_dimension_numbers<[1], [0], [0], [1], [0, 0, 1, 1], [], []>} : vector<16x48xbf16>, vector<48x16xbf16>, vector<16x16xf32> -> vector<16x16xf32>
    %122 = vector.broadcast %112 : vector<1x16xf32> to vector<16x16xf32>
    %123 = arith.addf %121, %122 : vector<16x16xf32>
    %cst_84 = arith.constant 0.000000e+00 : f32
    %124 = vector.broadcast %cst_84 : f32 to vector<16x16xf32>
    %125 = arith.maximumf %123, %124 : vector<16x16xf32>
    %126 = arith.addf %60, %125 : vector<16x16xf32>
    %c0_85 = arith.constant 0 : index
    %c0_86 = arith.constant 0 : index
    %127 = vector.load %arg20[%c0_85, %c0_86] : memref<1x16xf32, #tpu.memory_space<vmem>>, vector<1x16xf32>
    %c0_87 = arith.constant 0 : index
    %c0_88 = arith.constant 0 : index
    %128 = vector.load %arg21[%c0_87, %c0_88] : memref<1x16xf32, #tpu.memory_space<vmem>>, vector<1x16xf32>
    %cst_89 = arith.constant dense<0.000000e+00> : vector<16xf32>
    %129 = vector.multi_reduction <add>, %126, %cst_89 [0] : vector<16x16xf32> to vector<16xf32>
    %130 = vector.shape_cast %129 : vector<16xf32> to vector<1x16xf32>
    %cst_90 = arith.constant 1.600000e+01 : f32
    %131 = vector.broadcast %cst_90 : f32 to vector<1x16xf32>
    %132 = arith.divf %130, %131 : vector<1x16xf32>
    %133 = vector.broadcast %132 : vector<1x16xf32> to vector<16x16xf32>
    %134 = arith.subf %126, %133 : vector<16x16xf32>
    %135 = arith.mulf %134, %134 : vector<16x16xf32>
    %cst_91 = arith.constant dense<0.000000e+00> : vector<16xf32>
    %136 = vector.multi_reduction <add>, %135, %cst_91 [0] : vector<16x16xf32> to vector<16xf32>
    %137 = vector.shape_cast %136 : vector<16xf32> to vector<1x16xf32>
    %cst_92 = arith.constant 1.600000e+01 : f32
    %138 = vector.broadcast %cst_92 : f32 to vector<1x16xf32>
    %139 = arith.divf %137, %138 : vector<1x16xf32>
    %140 = vector.broadcast %132 : vector<1x16xf32> to vector<16x16xf32>
    %141 = arith.subf %126, %140 : vector<16x16xf32>
    %cst_93 = arith.constant 9.99999974E-6 : f32
    %142 = vector.broadcast %cst_93 : f32 to vector<1x16xf32>
    %143 = arith.addf %139, %142 : vector<1x16xf32>
    %144 = math.rsqrt %143 : vector<1x16xf32>
    %145 = vector.broadcast %144 : vector<1x16xf32> to vector<16x16xf32>
    %146 = arith.mulf %141, %145 : vector<16x16xf32>
    %147 = vector.broadcast %127 : vector<1x16xf32> to vector<16x16xf32>
    %148 = arith.mulf %146, %147 : vector<16x16xf32>
    %149 = vector.broadcast %128 : vector<1x16xf32> to vector<16x16xf32>
    %150 = arith.addf %148, %149 : vector<16x16xf32>
    %151 = arith.truncf %150 : vector<16x16xf32> to vector<16x16xbf16>
    %152 = arith.truncf %110 : vector<24x8xf32> to vector<24x8xbf16>
    %c0_94 = arith.constant 0 : index
    %c0_95 = arith.constant 0 : index
    %153 = vector.load %arg22[%c0_94, %c0_95] : memref<20x16xbf16, #tpu.memory_space<vmem>>, vector<20x16xbf16>
    %cst_96 = arith.constant dense<0.000000e+00> : vector<24x16xf32>
    %154 = tpu.matmul %1, %153, %cst_96 {dimension_numbers = #tpu.dot_dimension_numbers<[1], [0], [0], [1], [0, 0, 1, 1], [], []>} : vector<24x20xbf16>, vector<20x16xbf16>, vector<24x16xf32> -> vector<24x16xf32>
    %c0_97 = arith.constant 0 : index
    %c0_98 = arith.constant 0 : index
    %155 = vector.load %arg23[%c0_97, %c0_98] : memref<1x16xf32, #tpu.memory_space<vmem>>, vector<1x16xf32>
    %156 = vector.broadcast %155 : vector<1x16xf32> to vector<24x16xf32>
    %157 = arith.addf %154, %156 : vector<24x16xf32>
    %cst_99 = arith.constant dense<0.000000e+00> : vector<24x16xf32>
    %158 = tpu.matmul %2, %151, %cst_99 {dimension_numbers = #tpu.dot_dimension_numbers<[1], [0], [0], [1], [0, 0, 1, 1], [], []>} : vector<24x16xbf16>, vector<16x16xbf16>, vector<24x16xf32> -> vector<24x16xf32>
    %159 = arith.addf %158, %157 : vector<24x16xf32>
    %160 = arith.truncf %159 : vector<24x16xf32> to vector<24x16xbf16>
    %c0_100 = arith.constant 0 : index
    %c0_101 = arith.constant 0 : index
    %161 = vector.load %arg25[%c0_100, %c0_101] : memref<1x16xf32, #tpu.memory_space<vmem>>, vector<1x16xf32>
    %c0_102 = arith.constant 0 : index
    %c0_103 = arith.constant 0 : index
    %c0_104 = arith.constant 0 : index
    %162 = vector.load %arg24[%c0_102, %c0_103, %c0_104] : memref<2x16x16xbf16, #tpu.memory_space<vmem>>, vector<1x16x16xbf16>
    %163 = vector.shape_cast %162 : vector<1x16x16xbf16> to vector<16x16xbf16>
    %cst_105 = arith.constant dense<0.000000e+00> : vector<24x16xf32>
    %164 = tpu.matmul %160, %163, %cst_105 {dimension_numbers = #tpu.dot_dimension_numbers<[1], [0], [0], [1], [0, 0, 1, 1], [], []>} : vector<24x16xbf16>, vector<16x16xbf16>, vector<24x16xf32> -> vector<24x16xf32>
    %c1_106 = arith.constant 1 : index
    %c0_107 = arith.constant 0 : index
    %c0_108 = arith.constant 0 : index
    %165 = vector.load %arg24[%c1_106, %c0_107, %c0_108] : memref<2x16x16xbf16, #tpu.memory_space<vmem>>, vector<1x16x16xbf16>
    %166 = vector.shape_cast %165 : vector<1x16x16xbf16> to vector<16x16xbf16>
    %cst_109 = arith.constant dense<0.000000e+00> : vector<24x16xf32>
    %167 = tpu.matmul %160, %166, %cst_109 {dimension_numbers = #tpu.dot_dimension_numbers<[1], [0], [0], [1], [0, 0, 1, 1], [], []>} : vector<24x16xbf16>, vector<16x16xbf16>, vector<24x16xf32> -> vector<24x16xf32>
    %168 = tpu.concatenate %164, %167 in 0 : vector<24x16xf32>, vector<24x16xf32> -> vector<48x16xf32>
    %169 = arith.truncf %168 : vector<48x16xf32> to vector<48x16xbf16>
    %cst_110 = arith.constant dense<0.000000e+00> : vector<16x16xf32>
    %170 = tpu.matmul %3, %169, %cst_110 {dimension_numbers = #tpu.dot_dimension_numbers<[1], [0], [0], [1], [0, 0, 1, 1], [], []>} : vector<16x48xbf16>, vector<48x16xbf16>, vector<16x16xf32> -> vector<16x16xf32>
    %171 = vector.broadcast %161 : vector<1x16xf32> to vector<16x16xf32>
    %172 = arith.addf %170, %171 : vector<16x16xf32>
    %c0_111 = arith.constant 0 : index
    %c0_112 = arith.constant 0 : index
    %173 = vector.load %arg26[%c0_111, %c0_112] : memref<16x16xbf16, #tpu.memory_space<vmem>>, vector<16x16xbf16>
    %cst_113 = arith.constant dense<0.000000e+00> : vector<16x16xf32>
    %174 = tpu.matmul %151, %173, %cst_113 {dimension_numbers = #tpu.dot_dimension_numbers<[1], [0], [0], [1], [0, 0, 1, 1], [], []>} : vector<16x16xbf16>, vector<16x16xbf16>, vector<16x16xf32> -> vector<16x16xf32>
    %175 = arith.addf %172, %174 : vector<16x16xf32>
    %c0_114 = arith.constant 0 : index
    %c0_115 = arith.constant 0 : index
    %176 = vector.load %arg27[%c0_114, %c0_115] : memref<1x16xf32, #tpu.memory_space<vmem>>, vector<1x16xf32>
    %177 = vector.broadcast %176 : vector<1x16xf32> to vector<16x16xf32>
    %178 = arith.addf %175, %177 : vector<16x16xf32>
    %c0_116 = arith.constant 0 : index
    %c0_117 = arith.constant 0 : index
    %179 = vector.load %arg28[%c0_116, %c0_117] : memref<1x16xf32, #tpu.memory_space<vmem>>, vector<1x16xf32>
    %c0_118 = arith.constant 0 : index
    %c0_119 = arith.constant 0 : index
    %180 = vector.load %arg29[%c0_118, %c0_119] : memref<1x16xf32, #tpu.memory_space<vmem>>, vector<1x16xf32>
    %cst_120 = arith.constant dense<0.000000e+00> : vector<16xf32>
    %181 = vector.multi_reduction <add>, %178, %cst_120 [0] : vector<16x16xf32> to vector<16xf32>
    %182 = vector.shape_cast %181 : vector<16xf32> to vector<1x16xf32>
    %cst_121 = arith.constant 1.600000e+01 : f32
    %183 = vector.broadcast %cst_121 : f32 to vector<1x16xf32>
    %184 = arith.divf %182, %183 : vector<1x16xf32>
    %185 = vector.broadcast %184 : vector<1x16xf32> to vector<16x16xf32>
    %186 = arith.subf %178, %185 : vector<16x16xf32>
    %187 = arith.mulf %186, %186 : vector<16x16xf32>
    %cst_122 = arith.constant dense<0.000000e+00> : vector<16xf32>
    %188 = vector.multi_reduction <add>, %187, %cst_122 [0] : vector<16x16xf32> to vector<16xf32>
    %189 = vector.shape_cast %188 : vector<16xf32> to vector<1x16xf32>
    %cst_123 = arith.constant 1.600000e+01 : f32
    %190 = vector.broadcast %cst_123 : f32 to vector<1x16xf32>
    %191 = arith.divf %189, %190 : vector<1x16xf32>
    %192 = vector.broadcast %184 : vector<1x16xf32> to vector<16x16xf32>
    %193 = arith.subf %178, %192 : vector<16x16xf32>
    %cst_124 = arith.constant 9.99999974E-6 : f32
    %194 = vector.broadcast %cst_124 : f32 to vector<1x16xf32>
    %195 = arith.addf %191, %194 : vector<1x16xf32>
    %196 = math.rsqrt %195 : vector<1x16xf32>
    %197 = vector.broadcast %196 : vector<1x16xf32> to vector<16x16xf32>
    %198 = arith.mulf %193, %197 : vector<16x16xf32>
    %199 = vector.broadcast %179 : vector<1x16xf32> to vector<16x16xf32>
    %200 = arith.mulf %198, %199 : vector<16x16xf32>
    %201 = vector.broadcast %180 : vector<1x16xf32> to vector<16x16xf32>
    %202 = arith.addf %200, %201 : vector<16x16xf32>
    %cst_125 = arith.constant 0.000000e+00 : f32
    %203 = vector.broadcast %cst_125 : f32 to vector<16x16xf32>
    %204 = arith.maximumf %202, %203 : vector<16x16xf32>
    %205 = arith.addf %204, %150 : vector<16x16xf32>
    %c0_126 = arith.constant 0 : index
    %c0_127 = arith.constant 0 : index
    %206 = vector.load %arg31[%c0_126, %c0_127] : memref<1x16xf32, #tpu.memory_space<vmem>>, vector<1x16xf32>
    %c0_128 = arith.constant 0 : index
    %c0_129 = arith.constant 0 : index
    %c0_130 = arith.constant 0 : index
    %207 = vector.load %arg30[%c0_128, %c0_129, %c0_130] : memref<4x8x16xbf16, #tpu.memory_space<vmem>>, vector<1x8x16xbf16>
    %208 = vector.shape_cast %207 : vector<1x8x16xbf16> to vector<8x16xbf16>
    %cst_131 = arith.constant dense<0.000000e+00> : vector<24x16xf32>
    %209 = tpu.matmul %152, %208, %cst_131 {dimension_numbers = #tpu.dot_dimension_numbers<[1], [0], [0], [1], [0, 0, 1, 1], [], []>} : vector<24x8xbf16>, vector<8x16xbf16>, vector<24x16xf32> -> vector<24x16xf32>
    %c1_132 = arith.constant 1 : index
    %c0_133 = arith.constant 0 : index
    %c0_134 = arith.constant 0 : index
    %210 = vector.load %arg30[%c1_132, %c0_133, %c0_134] : memref<4x8x16xbf16, #tpu.memory_space<vmem>>, vector<1x8x16xbf16>
    %211 = vector.shape_cast %210 : vector<1x8x16xbf16> to vector<8x16xbf16>
    %cst_135 = arith.constant dense<0.000000e+00> : vector<24x16xf32>
    %212 = tpu.matmul %152, %211, %cst_135 {dimension_numbers = #tpu.dot_dimension_numbers<[1], [0], [0], [1], [0, 0, 1, 1], [], []>} : vector<24x8xbf16>, vector<8x16xbf16>, vector<24x16xf32> -> vector<24x16xf32>
    %c2_136 = arith.constant 2 : index
    %c0_137 = arith.constant 0 : index
    %c0_138 = arith.constant 0 : index
    %213 = vector.load %arg30[%c2_136, %c0_137, %c0_138] : memref<4x8x16xbf16, #tpu.memory_space<vmem>>, vector<1x8x16xbf16>
    %214 = vector.shape_cast %213 : vector<1x8x16xbf16> to vector<8x16xbf16>
    %cst_139 = arith.constant dense<0.000000e+00> : vector<24x16xf32>
    %215 = tpu.matmul %152, %214, %cst_139 {dimension_numbers = #tpu.dot_dimension_numbers<[1], [0], [0], [1], [0, 0, 1, 1], [], []>} : vector<24x8xbf16>, vector<8x16xbf16>, vector<24x16xf32> -> vector<24x16xf32>
    %c3_140 = arith.constant 3 : index
    %c0_141 = arith.constant 0 : index
    %c0_142 = arith.constant 0 : index
    %216 = vector.load %arg30[%c3_140, %c0_141, %c0_142] : memref<4x8x16xbf16, #tpu.memory_space<vmem>>, vector<1x8x16xbf16>
    %217 = vector.shape_cast %216 : vector<1x8x16xbf16> to vector<8x16xbf16>
    %cst_143 = arith.constant dense<0.000000e+00> : vector<24x16xf32>
    %218 = tpu.matmul %152, %217, %cst_143 {dimension_numbers = #tpu.dot_dimension_numbers<[1], [0], [0], [1], [0, 0, 1, 1], [], []>} : vector<24x8xbf16>, vector<8x16xbf16>, vector<24x16xf32> -> vector<24x16xf32>
    %219 = tpu.concatenate %209, %212, %215, %218 in 0 : vector<24x16xf32>, vector<24x16xf32>, vector<24x16xf32>, vector<24x16xf32> -> vector<96x16xf32>
    %220 = arith.truncf %219 : vector<96x16xf32> to vector<96x16xbf16>
    %cst_144 = arith.constant dense<0.000000e+00> : vector<24x16xf32>
    %221 = tpu.matmul %4, %220, %cst_144 {dimension_numbers = #tpu.dot_dimension_numbers<[1], [0], [0], [1], [0, 0, 1, 1], [], []>} : vector<24x96xbf16>, vector<96x16xbf16>, vector<24x16xf32> -> vector<24x16xf32>
    %222 = vector.broadcast %206 : vector<1x16xf32> to vector<24x16xf32>
    %223 = arith.addf %221, %222 : vector<24x16xf32>
    %c0_145 = arith.constant 0 : index
    %c0_146 = arith.constant 0 : index
    %224 = vector.load %arg32[%c0_145, %c0_146] : memref<8x16xbf16, #tpu.memory_space<vmem>>, vector<8x16xbf16>
    %cst_147 = arith.constant dense<0.000000e+00> : vector<24x16xf32>
    %225 = tpu.matmul %152, %224, %cst_147 {dimension_numbers = #tpu.dot_dimension_numbers<[1], [0], [0], [1], [0, 0, 1, 1], [], []>} : vector<24x8xbf16>, vector<8x16xbf16>, vector<24x16xf32> -> vector<24x16xf32>
    %226 = arith.addf %223, %225 : vector<24x16xf32>
    %c0_148 = arith.constant 0 : index
    %c0_149 = arith.constant 0 : index
    %227 = vector.load %arg33[%c0_148, %c0_149] : memref<1x16xf32, #tpu.memory_space<vmem>>, vector<1x16xf32>
    %228 = vector.broadcast %227 : vector<1x16xf32> to vector<24x16xf32>
    %229 = arith.addf %226, %228 : vector<24x16xf32>
    %c0_150 = arith.constant 0 : index
    %c0_151 = arith.constant 0 : index
    %230 = vector.load %arg34[%c0_150, %c0_151] : memref<1x16xf32, #tpu.memory_space<vmem>>, vector<1x16xf32>
    %c0_152 = arith.constant 0 : index
    %c0_153 = arith.constant 0 : index
    %231 = vector.load %arg35[%c0_152, %c0_153] : memref<1x16xf32, #tpu.memory_space<vmem>>, vector<1x16xf32>
    %cst_154 = arith.constant dense<0.000000e+00> : vector<16xf32>
    %232 = vector.multi_reduction <add>, %229, %cst_154 [0] : vector<24x16xf32> to vector<16xf32>
    %233 = vector.shape_cast %232 : vector<16xf32> to vector<1x16xf32>
    %cst_155 = arith.constant 2.400000e+01 : f32
    %234 = vector.broadcast %cst_155 : f32 to vector<1x16xf32>
    %235 = arith.divf %233, %234 : vector<1x16xf32>
    %236 = vector.broadcast %235 : vector<1x16xf32> to vector<24x16xf32>
    %237 = arith.subf %229, %236 : vector<24x16xf32>
    %238 = arith.mulf %237, %237 : vector<24x16xf32>
    %cst_156 = arith.constant dense<0.000000e+00> : vector<16xf32>
    %239 = vector.multi_reduction <add>, %238, %cst_156 [0] : vector<24x16xf32> to vector<16xf32>
    %240 = vector.shape_cast %239 : vector<16xf32> to vector<1x16xf32>
    %cst_157 = arith.constant 2.400000e+01 : f32
    %241 = vector.broadcast %cst_157 : f32 to vector<1x16xf32>
    %242 = arith.divf %240, %241 : vector<1x16xf32>
    %243 = vector.broadcast %235 : vector<1x16xf32> to vector<24x16xf32>
    %244 = arith.subf %229, %243 : vector<24x16xf32>
    %cst_158 = arith.constant 9.99999974E-6 : f32
    %245 = vector.broadcast %cst_158 : f32 to vector<1x16xf32>
    %246 = arith.addf %242, %245 : vector<1x16xf32>
    %247 = math.rsqrt %246 : vector<1x16xf32>
    %248 = vector.broadcast %247 : vector<1x16xf32> to vector<24x16xf32>
    %249 = arith.mulf %244, %248 : vector<24x16xf32>
    %250 = vector.broadcast %230 : vector<1x16xf32> to vector<24x16xf32>
    %251 = arith.mulf %249, %250 : vector<24x16xf32>
    %252 = vector.broadcast %231 : vector<1x16xf32> to vector<24x16xf32>
    %253 = arith.addf %251, %252 : vector<24x16xf32>
    %cst_159 = arith.constant 0.000000e+00 : f32
    %254 = vector.broadcast %cst_159 : f32 to vector<24x16xf32>
    %255 = arith.maximumf %253, %254 : vector<24x16xf32>
    %256 = arith.truncf %255 : vector<24x16xf32> to vector<24x16xbf16>
    %c0_160 = arith.constant 0 : index
    %c0_161 = arith.constant 0 : index
    %257 = vector.load %arg25[%c0_160, %c0_161] : memref<1x16xf32, #tpu.memory_space<vmem>>, vector<1x16xf32>
    %c0_162 = arith.constant 0 : index
    %c0_163 = arith.constant 0 : index
    %c0_164 = arith.constant 0 : index
    %258 = vector.load %arg24[%c0_162, %c0_163, %c0_164] : memref<2x16x16xbf16, #tpu.memory_space<vmem>>, vector<1x16x16xbf16>
    %259 = vector.shape_cast %258 : vector<1x16x16xbf16> to vector<16x16xbf16>
    %cst_165 = arith.constant dense<0.000000e+00> : vector<24x16xf32>
    %260 = tpu.matmul %256, %259, %cst_165 {dimension_numbers = #tpu.dot_dimension_numbers<[1], [0], [0], [1], [0, 0, 1, 1], [], []>} : vector<24x16xbf16>, vector<16x16xbf16>, vector<24x16xf32> -> vector<24x16xf32>
    %c1_166 = arith.constant 1 : index
    %c0_167 = arith.constant 0 : index
    %c0_168 = arith.constant 0 : index
    %261 = vector.load %arg24[%c1_166, %c0_167, %c0_168] : memref<2x16x16xbf16, #tpu.memory_space<vmem>>, vector<1x16x16xbf16>
    %262 = vector.shape_cast %261 : vector<1x16x16xbf16> to vector<16x16xbf16>
    %cst_169 = arith.constant dense<0.000000e+00> : vector<24x16xf32>
    %263 = tpu.matmul %256, %262, %cst_169 {dimension_numbers = #tpu.dot_dimension_numbers<[1], [0], [0], [1], [0, 0, 1, 1], [], []>} : vector<24x16xbf16>, vector<16x16xbf16>, vector<24x16xf32> -> vector<24x16xf32>
    %264 = tpu.concatenate %260, %263 in 0 : vector<24x16xf32>, vector<24x16xf32> -> vector<48x16xf32>
    %265 = arith.truncf %264 : vector<48x16xf32> to vector<48x16xbf16>
    %cst_170 = arith.constant dense<0.000000e+00> : vector<16x16xf32>
    %266 = tpu.matmul %3, %265, %cst_170 {dimension_numbers = #tpu.dot_dimension_numbers<[1], [0], [0], [1], [0, 0, 1, 1], [], []>} : vector<16x48xbf16>, vector<48x16xbf16>, vector<16x16xf32> -> vector<16x16xf32>
    %267 = vector.broadcast %257 : vector<1x16xf32> to vector<16x16xf32>
    %268 = arith.addf %266, %267 : vector<16x16xf32>
    %cst_171 = arith.constant 0.000000e+00 : f32
    %269 = vector.broadcast %cst_171 : f32 to vector<16x16xf32>
    %270 = arith.maximumf %268, %269 : vector<16x16xf32>
    %271 = arith.addf %205, %270 : vector<16x16xf32>
    %c0_172 = arith.constant 0 : index
    %c0_173 = arith.constant 0 : index
    %272 = vector.load %arg36[%c0_172, %c0_173] : memref<1x16xf32, #tpu.memory_space<vmem>>, vector<1x16xf32>
    %c0_174 = arith.constant 0 : index
    %c0_175 = arith.constant 0 : index
    %273 = vector.load %arg37[%c0_174, %c0_175] : memref<1x16xf32, #tpu.memory_space<vmem>>, vector<1x16xf32>
    %cst_176 = arith.constant dense<0.000000e+00> : vector<16xf32>
    %274 = vector.multi_reduction <add>, %271, %cst_176 [0] : vector<16x16xf32> to vector<16xf32>
    %275 = vector.shape_cast %274 : vector<16xf32> to vector<1x16xf32>
    %cst_177 = arith.constant 1.600000e+01 : f32
    %276 = vector.broadcast %cst_177 : f32 to vector<1x16xf32>
    %277 = arith.divf %275, %276 : vector<1x16xf32>
    %278 = vector.broadcast %277 : vector<1x16xf32> to vector<16x16xf32>
    %279 = arith.subf %271, %278 : vector<16x16xf32>
    %280 = arith.mulf %279, %279 : vector<16x16xf32>
    %cst_178 = arith.constant dense<0.000000e+00> : vector<16xf32>
    %281 = vector.multi_reduction <add>, %280, %cst_178 [0] : vector<16x16xf32> to vector<16xf32>
    %282 = vector.shape_cast %281 : vector<16xf32> to vector<1x16xf32>
    %cst_179 = arith.constant 1.600000e+01 : f32
    %283 = vector.broadcast %cst_179 : f32 to vector<1x16xf32>
    %284 = arith.divf %282, %283 : vector<1x16xf32>
    %285 = vector.broadcast %277 : vector<1x16xf32> to vector<16x16xf32>
    %286 = arith.subf %271, %285 : vector<16x16xf32>
    %cst_180 = arith.constant 9.99999974E-6 : f32
    %287 = vector.broadcast %cst_180 : f32 to vector<1x16xf32>
    %288 = arith.addf %284, %287 : vector<1x16xf32>
    %289 = math.rsqrt %288 : vector<1x16xf32>
    %290 = vector.broadcast %289 : vector<1x16xf32> to vector<16x16xf32>
    %291 = arith.mulf %286, %290 : vector<16x16xf32>
    %292 = vector.broadcast %272 : vector<1x16xf32> to vector<16x16xf32>
    %293 = arith.mulf %291, %292 : vector<16x16xf32>
    %294 = vector.broadcast %273 : vector<1x16xf32> to vector<16x16xf32>
    %295 = arith.addf %293, %294 : vector<16x16xf32>
    %296 = arith.truncf %295 : vector<16x16xf32> to vector<16x16xbf16>
    %297 = arith.truncf %255 : vector<24x16xf32> to vector<24x16xbf16>
    %c0_181 = arith.constant 0 : index
    %c0_182 = arith.constant 0 : index
    %298 = vector.load %arg38[%c0_181, %c0_182] : memref<20x16xbf16, #tpu.memory_space<vmem>>, vector<20x16xbf16>
    %cst_183 = arith.constant dense<0.000000e+00> : vector<24x16xf32>
    %299 = tpu.matmul %1, %298, %cst_183 {dimension_numbers = #tpu.dot_dimension_numbers<[1], [0], [0], [1], [0, 0, 1, 1], [], []>} : vector<24x20xbf16>, vector<20x16xbf16>, vector<24x16xf32> -> vector<24x16xf32>
    %c0_184 = arith.constant 0 : index
    %c0_185 = arith.constant 0 : index
    %300 = vector.load %arg39[%c0_184, %c0_185] : memref<1x16xf32, #tpu.memory_space<vmem>>, vector<1x16xf32>
    %301 = vector.broadcast %300 : vector<1x16xf32> to vector<24x16xf32>
    %302 = arith.addf %299, %301 : vector<24x16xf32>
    %cst_186 = arith.constant dense<0.000000e+00> : vector<24x16xf32>
    %303 = tpu.matmul %2, %296, %cst_186 {dimension_numbers = #tpu.dot_dimension_numbers<[1], [0], [0], [1], [0, 0, 1, 1], [], []>} : vector<24x16xbf16>, vector<16x16xbf16>, vector<24x16xf32> -> vector<24x16xf32>
    %304 = arith.addf %303, %302 : vector<24x16xf32>
    %305 = arith.truncf %304 : vector<24x16xf32> to vector<24x16xbf16>
    %c0_187 = arith.constant 0 : index
    %c0_188 = arith.constant 0 : index
    %306 = vector.load %arg41[%c0_187, %c0_188] : memref<1x16xf32, #tpu.memory_space<vmem>>, vector<1x16xf32>
    %c0_189 = arith.constant 0 : index
    %c0_190 = arith.constant 0 : index
    %c0_191 = arith.constant 0 : index
    %307 = vector.load %arg40[%c0_189, %c0_190, %c0_191] : memref<2x16x16xbf16, #tpu.memory_space<vmem>>, vector<1x16x16xbf16>
    %308 = vector.shape_cast %307 : vector<1x16x16xbf16> to vector<16x16xbf16>
    %cst_192 = arith.constant dense<0.000000e+00> : vector<24x16xf32>
    %309 = tpu.matmul %305, %308, %cst_192 {dimension_numbers = #tpu.dot_dimension_numbers<[1], [0], [0], [1], [0, 0, 1, 1], [], []>} : vector<24x16xbf16>, vector<16x16xbf16>, vector<24x16xf32> -> vector<24x16xf32>
    %c1_193 = arith.constant 1 : index
    %c0_194 = arith.constant 0 : index
    %c0_195 = arith.constant 0 : index
    %310 = vector.load %arg40[%c1_193, %c0_194, %c0_195] : memref<2x16x16xbf16, #tpu.memory_space<vmem>>, vector<1x16x16xbf16>
    %311 = vector.shape_cast %310 : vector<1x16x16xbf16> to vector<16x16xbf16>
    %cst_196 = arith.constant dense<0.000000e+00> : vector<24x16xf32>
    %312 = tpu.matmul %305, %311, %cst_196 {dimension_numbers = #tpu.dot_dimension_numbers<[1], [0], [0], [1], [0, 0, 1, 1], [], []>} : vector<24x16xbf16>, vector<16x16xbf16>, vector<24x16xf32> -> vector<24x16xf32>
    %313 = tpu.concatenate %309, %312 in 0 : vector<24x16xf32>, vector<24x16xf32> -> vector<48x16xf32>
    %314 = arith.truncf %313 : vector<48x16xf32> to vector<48x16xbf16>
    %cst_197 = arith.constant dense<0.000000e+00> : vector<16x16xf32>
    %315 = tpu.matmul %3, %314, %cst_197 {dimension_numbers = #tpu.dot_dimension_numbers<[1], [0], [0], [1], [0, 0, 1, 1], [], []>} : vector<16x48xbf16>, vector<48x16xbf16>, vector<16x16xf32> -> vector<16x16xf32>
    %316 = vector.broadcast %306 : vector<1x16xf32> to vector<16x16xf32>
    %317 = arith.addf %315, %316 : vector<16x16xf32>
    %c0_198 = arith.constant 0 : index
    %c0_199 = arith.constant 0 : index
    %318 = vector.load %arg42[%c0_198, %c0_199] : memref<16x16xbf16, #tpu.memory_space<vmem>>, vector<16x16xbf16>
    %cst_200 = arith.constant dense<0.000000e+00> : vector<16x16xf32>
    %319 = tpu.matmul %296, %318, %cst_200 {dimension_numbers = #tpu.dot_dimension_numbers<[1], [0], [0], [1], [0, 0, 1, 1], [], []>} : vector<16x16xbf16>, vector<16x16xbf16>, vector<16x16xf32> -> vector<16x16xf32>
    %320 = arith.addf %317, %319 : vector<16x16xf32>
    %c0_201 = arith.constant 0 : index
    %c0_202 = arith.constant 0 : index
    %321 = vector.load %arg43[%c0_201, %c0_202] : memref<1x16xf32, #tpu.memory_space<vmem>>, vector<1x16xf32>
    %322 = vector.broadcast %321 : vector<1x16xf32> to vector<16x16xf32>
    %323 = arith.addf %320, %322 : vector<16x16xf32>
    %c0_203 = arith.constant 0 : index
    %c0_204 = arith.constant 0 : index
    %324 = vector.load %arg44[%c0_203, %c0_204] : memref<1x16xf32, #tpu.memory_space<vmem>>, vector<1x16xf32>
    %c0_205 = arith.constant 0 : index
    %c0_206 = arith.constant 0 : index
    %325 = vector.load %arg45[%c0_205, %c0_206] : memref<1x16xf32, #tpu.memory_space<vmem>>, vector<1x16xf32>
    %cst_207 = arith.constant dense<0.000000e+00> : vector<16xf32>
    %326 = vector.multi_reduction <add>, %323, %cst_207 [0] : vector<16x16xf32> to vector<16xf32>
    %327 = vector.shape_cast %326 : vector<16xf32> to vector<1x16xf32>
    %cst_208 = arith.constant 1.600000e+01 : f32
    %328 = vector.broadcast %cst_208 : f32 to vector<1x16xf32>
    %329 = arith.divf %327, %328 : vector<1x16xf32>
    %330 = vector.broadcast %329 : vector<1x16xf32> to vector<16x16xf32>
    %331 = arith.subf %323, %330 : vector<16x16xf32>
    %332 = arith.mulf %331, %331 : vector<16x16xf32>
    %cst_209 = arith.constant dense<0.000000e+00> : vector<16xf32>
    %333 = vector.multi_reduction <add>, %332, %cst_209 [0] : vector<16x16xf32> to vector<16xf32>
    %334 = vector.shape_cast %333 : vector<16xf32> to vector<1x16xf32>
    %cst_210 = arith.constant 1.600000e+01 : f32
    %335 = vector.broadcast %cst_210 : f32 to vector<1x16xf32>
    %336 = arith.divf %334, %335 : vector<1x16xf32>
    %337 = vector.broadcast %329 : vector<1x16xf32> to vector<16x16xf32>
    %338 = arith.subf %323, %337 : vector<16x16xf32>
    %cst_211 = arith.constant 9.99999974E-6 : f32
    %339 = vector.broadcast %cst_211 : f32 to vector<1x16xf32>
    %340 = arith.addf %336, %339 : vector<1x16xf32>
    %341 = math.rsqrt %340 : vector<1x16xf32>
    %342 = vector.broadcast %341 : vector<1x16xf32> to vector<16x16xf32>
    %343 = arith.mulf %338, %342 : vector<16x16xf32>
    %344 = vector.broadcast %324 : vector<1x16xf32> to vector<16x16xf32>
    %345 = arith.mulf %343, %344 : vector<16x16xf32>
    %346 = vector.broadcast %325 : vector<1x16xf32> to vector<16x16xf32>
    %347 = arith.addf %345, %346 : vector<16x16xf32>
    %cst_212 = arith.constant 0.000000e+00 : f32
    %348 = vector.broadcast %cst_212 : f32 to vector<16x16xf32>
    %349 = arith.maximumf %347, %348 : vector<16x16xf32>
    %350 = arith.addf %349, %295 : vector<16x16xf32>
    %c0_213 = arith.constant 0 : index
    %c0_214 = arith.constant 0 : index
    %351 = vector.load %arg47[%c0_213, %c0_214] : memref<1x16xf32, #tpu.memory_space<vmem>>, vector<1x16xf32>
    %c0_215 = arith.constant 0 : index
    %c0_216 = arith.constant 0 : index
    %c0_217 = arith.constant 0 : index
    %352 = vector.load %arg46[%c0_215, %c0_216, %c0_217] : memref<4x16x16xbf16, #tpu.memory_space<vmem>>, vector<1x16x16xbf16>
    %353 = vector.shape_cast %352 : vector<1x16x16xbf16> to vector<16x16xbf16>
    %cst_218 = arith.constant dense<0.000000e+00> : vector<24x16xf32>
    %354 = tpu.matmul %297, %353, %cst_218 {dimension_numbers = #tpu.dot_dimension_numbers<[1], [0], [0], [1], [0, 0, 1, 1], [], []>} : vector<24x16xbf16>, vector<16x16xbf16>, vector<24x16xf32> -> vector<24x16xf32>
    %c1_219 = arith.constant 1 : index
    %c0_220 = arith.constant 0 : index
    %c0_221 = arith.constant 0 : index
    %355 = vector.load %arg46[%c1_219, %c0_220, %c0_221] : memref<4x16x16xbf16, #tpu.memory_space<vmem>>, vector<1x16x16xbf16>
    %356 = vector.shape_cast %355 : vector<1x16x16xbf16> to vector<16x16xbf16>
    %cst_222 = arith.constant dense<0.000000e+00> : vector<24x16xf32>
    %357 = tpu.matmul %297, %356, %cst_222 {dimension_numbers = #tpu.dot_dimension_numbers<[1], [0], [0], [1], [0, 0, 1, 1], [], []>} : vector<24x16xbf16>, vector<16x16xbf16>, vector<24x16xf32> -> vector<24x16xf32>
    %c2_223 = arith.constant 2 : index
    %c0_224 = arith.constant 0 : index
    %c0_225 = arith.constant 0 : index
    %358 = vector.load %arg46[%c2_223, %c0_224, %c0_225] : memref<4x16x16xbf16, #tpu.memory_space<vmem>>, vector<1x16x16xbf16>
    %359 = vector.shape_cast %358 : vector<1x16x16xbf16> to vector<16x16xbf16>
    %cst_226 = arith.constant dense<0.000000e+00> : vector<24x16xf32>
    %360 = tpu.matmul %297, %359, %cst_226 {dimension_numbers = #tpu.dot_dimension_numbers<[1], [0], [0], [1], [0, 0, 1, 1], [], []>} : vector<24x16xbf16>, vector<16x16xbf16>, vector<24x16xf32> -> vector<24x16xf32>
    %c3_227 = arith.constant 3 : index
    %c0_228 = arith.constant 0 : index
    %c0_229 = arith.constant 0 : index
    %361 = vector.load %arg46[%c3_227, %c0_228, %c0_229] : memref<4x16x16xbf16, #tpu.memory_space<vmem>>, vector<1x16x16xbf16>
    %362 = vector.shape_cast %361 : vector<1x16x16xbf16> to vector<16x16xbf16>
    %cst_230 = arith.constant dense<0.000000e+00> : vector<24x16xf32>
    %363 = tpu.matmul %297, %362, %cst_230 {dimension_numbers = #tpu.dot_dimension_numbers<[1], [0], [0], [1], [0, 0, 1, 1], [], []>} : vector<24x16xbf16>, vector<16x16xbf16>, vector<24x16xf32> -> vector<24x16xf32>
    %364 = tpu.concatenate %354, %357, %360, %363 in 0 : vector<24x16xf32>, vector<24x16xf32>, vector<24x16xf32>, vector<24x16xf32> -> vector<96x16xf32>
    %365 = arith.truncf %364 : vector<96x16xf32> to vector<96x16xbf16>
    %cst_231 = arith.constant dense<0.000000e+00> : vector<24x16xf32>
    %366 = tpu.matmul %4, %365, %cst_231 {dimension_numbers = #tpu.dot_dimension_numbers<[1], [0], [0], [1], [0, 0, 1, 1], [], []>} : vector<24x96xbf16>, vector<96x16xbf16>, vector<24x16xf32> -> vector<24x16xf32>
    %367 = vector.broadcast %351 : vector<1x16xf32> to vector<24x16xf32>
    %368 = arith.addf %366, %367 : vector<24x16xf32>
    %c0_232 = arith.constant 0 : index
    %c0_233 = arith.constant 0 : index
    %369 = vector.load %arg48[%c0_232, %c0_233] : memref<16x16xbf16, #tpu.memory_space<vmem>>, vector<16x16xbf16>
    %cst_234 = arith.constant dense<0.000000e+00> : vector<24x16xf32>
    %370 = tpu.matmul %297, %369, %cst_234 {dimension_numbers = #tpu.dot_dimension_numbers<[1], [0], [0], [1], [0, 0, 1, 1], [], []>} : vector<24x16xbf16>, vector<16x16xbf16>, vector<24x16xf32> -> vector<24x16xf32>
    %371 = arith.addf %368, %370 : vector<24x16xf32>
    %c0_235 = arith.constant 0 : index
    %c0_236 = arith.constant 0 : index
    %372 = vector.load %arg49[%c0_235, %c0_236] : memref<1x16xf32, #tpu.memory_space<vmem>>, vector<1x16xf32>
    %373 = vector.broadcast %372 : vector<1x16xf32> to vector<24x16xf32>
    %374 = arith.addf %371, %373 : vector<24x16xf32>
    %c0_237 = arith.constant 0 : index
    %c0_238 = arith.constant 0 : index
    %375 = vector.load %arg50[%c0_237, %c0_238] : memref<1x16xf32, #tpu.memory_space<vmem>>, vector<1x16xf32>
    %c0_239 = arith.constant 0 : index
    %c0_240 = arith.constant 0 : index
    %376 = vector.load %arg51[%c0_239, %c0_240] : memref<1x16xf32, #tpu.memory_space<vmem>>, vector<1x16xf32>
    %cst_241 = arith.constant dense<0.000000e+00> : vector<16xf32>
    %377 = vector.multi_reduction <add>, %374, %cst_241 [0] : vector<24x16xf32> to vector<16xf32>
    %378 = vector.shape_cast %377 : vector<16xf32> to vector<1x16xf32>
    %cst_242 = arith.constant 2.400000e+01 : f32
    %379 = vector.broadcast %cst_242 : f32 to vector<1x16xf32>
    %380 = arith.divf %378, %379 : vector<1x16xf32>
    %381 = vector.broadcast %380 : vector<1x16xf32> to vector<24x16xf32>
    %382 = arith.subf %374, %381 : vector<24x16xf32>
    %383 = arith.mulf %382, %382 : vector<24x16xf32>
    %cst_243 = arith.constant dense<0.000000e+00> : vector<16xf32>
    %384 = vector.multi_reduction <add>, %383, %cst_243 [0] : vector<24x16xf32> to vector<16xf32>
    %385 = vector.shape_cast %384 : vector<16xf32> to vector<1x16xf32>
    %cst_244 = arith.constant 2.400000e+01 : f32
    %386 = vector.broadcast %cst_244 : f32 to vector<1x16xf32>
    %387 = arith.divf %385, %386 : vector<1x16xf32>
    %388 = vector.broadcast %380 : vector<1x16xf32> to vector<24x16xf32>
    %389 = arith.subf %374, %388 : vector<24x16xf32>
    %cst_245 = arith.constant 9.99999974E-6 : f32
    %390 = vector.broadcast %cst_245 : f32 to vector<1x16xf32>
    %391 = arith.addf %387, %390 : vector<1x16xf32>
    %392 = math.rsqrt %391 : vector<1x16xf32>
    %393 = vector.broadcast %392 : vector<1x16xf32> to vector<24x16xf32>
    %394 = arith.mulf %389, %393 : vector<24x16xf32>
    %395 = vector.broadcast %375 : vector<1x16xf32> to vector<24x16xf32>
    %396 = arith.mulf %394, %395 : vector<24x16xf32>
    %397 = vector.broadcast %376 : vector<1x16xf32> to vector<24x16xf32>
    %398 = arith.addf %396, %397 : vector<24x16xf32>
    %cst_246 = arith.constant 0.000000e+00 : f32
    %399 = vector.broadcast %cst_246 : f32 to vector<24x16xf32>
    %400 = arith.maximumf %398, %399 : vector<24x16xf32>
    %401 = arith.truncf %400 : vector<24x16xf32> to vector<24x16xbf16>
    %c0_247 = arith.constant 0 : index
    %c0_248 = arith.constant 0 : index
    %402 = vector.load %arg41[%c0_247, %c0_248] : memref<1x16xf32, #tpu.memory_space<vmem>>, vector<1x16xf32>
    %c0_249 = arith.constant 0 : index
    %c0_250 = arith.constant 0 : index
    %c0_251 = arith.constant 0 : index
    %403 = vector.load %arg40[%c0_249, %c0_250, %c0_251] : memref<2x16x16xbf16, #tpu.memory_space<vmem>>, vector<1x16x16xbf16>
    %404 = vector.shape_cast %403 : vector<1x16x16xbf16> to vector<16x16xbf16>
    %cst_252 = arith.constant dense<0.000000e+00> : vector<24x16xf32>
    %405 = tpu.matmul %401, %404, %cst_252 {dimension_numbers = #tpu.dot_dimension_numbers<[1], [0], [0], [1], [0, 0, 1, 1], [], []>} : vector<24x16xbf16>, vector<16x16xbf16>, vector<24x16xf32> -> vector<24x16xf32>
    %c1_253 = arith.constant 1 : index
    %c0_254 = arith.constant 0 : index
    %c0_255 = arith.constant 0 : index
    %406 = vector.load %arg40[%c1_253, %c0_254, %c0_255] : memref<2x16x16xbf16, #tpu.memory_space<vmem>>, vector<1x16x16xbf16>
    %407 = vector.shape_cast %406 : vector<1x16x16xbf16> to vector<16x16xbf16>
    %cst_256 = arith.constant dense<0.000000e+00> : vector<24x16xf32>
    %408 = tpu.matmul %401, %407, %cst_256 {dimension_numbers = #tpu.dot_dimension_numbers<[1], [0], [0], [1], [0, 0, 1, 1], [], []>} : vector<24x16xbf16>, vector<16x16xbf16>, vector<24x16xf32> -> vector<24x16xf32>
    %409 = tpu.concatenate %405, %408 in 0 : vector<24x16xf32>, vector<24x16xf32> -> vector<48x16xf32>
    %410 = arith.truncf %409 : vector<48x16xf32> to vector<48x16xbf16>
    %cst_257 = arith.constant dense<0.000000e+00> : vector<16x16xf32>
    %411 = tpu.matmul %3, %410, %cst_257 {dimension_numbers = #tpu.dot_dimension_numbers<[1], [0], [0], [1], [0, 0, 1, 1], [], []>} : vector<16x48xbf16>, vector<48x16xbf16>, vector<16x16xf32> -> vector<16x16xf32>
    %412 = vector.broadcast %402 : vector<1x16xf32> to vector<16x16xf32>
    %413 = arith.addf %411, %412 : vector<16x16xf32>
    %cst_258 = arith.constant 0.000000e+00 : f32
    %414 = vector.broadcast %cst_258 : f32 to vector<16x16xf32>
    %415 = arith.maximumf %413, %414 : vector<16x16xf32>
    %416 = arith.addf %350, %415 : vector<16x16xf32>
    %c0_259 = arith.constant 0 : index
    %c0_260 = arith.constant 0 : index
    %417 = vector.load %arg52[%c0_259, %c0_260] : memref<1x16xf32, #tpu.memory_space<vmem>>, vector<1x16xf32>
    %c0_261 = arith.constant 0 : index
    %c0_262 = arith.constant 0 : index
    %418 = vector.load %arg53[%c0_261, %c0_262] : memref<1x16xf32, #tpu.memory_space<vmem>>, vector<1x16xf32>
    %cst_263 = arith.constant dense<0.000000e+00> : vector<16xf32>
    %419 = vector.multi_reduction <add>, %416, %cst_263 [0] : vector<16x16xf32> to vector<16xf32>
    %420 = vector.shape_cast %419 : vector<16xf32> to vector<1x16xf32>
    %cst_264 = arith.constant 1.600000e+01 : f32
    %421 = vector.broadcast %cst_264 : f32 to vector<1x16xf32>
    %422 = arith.divf %420, %421 : vector<1x16xf32>
    %423 = vector.broadcast %422 : vector<1x16xf32> to vector<16x16xf32>
    %424 = arith.subf %416, %423 : vector<16x16xf32>
    %425 = arith.mulf %424, %424 : vector<16x16xf32>
    %cst_265 = arith.constant dense<0.000000e+00> : vector<16xf32>
    %426 = vector.multi_reduction <add>, %425, %cst_265 [0] : vector<16x16xf32> to vector<16xf32>
    %427 = vector.shape_cast %426 : vector<16xf32> to vector<1x16xf32>
    %cst_266 = arith.constant 1.600000e+01 : f32
    %428 = vector.broadcast %cst_266 : f32 to vector<1x16xf32>
    %429 = arith.divf %427, %428 : vector<1x16xf32>
    %430 = vector.broadcast %422 : vector<1x16xf32> to vector<16x16xf32>
    %431 = arith.subf %416, %430 : vector<16x16xf32>
    %cst_267 = arith.constant 9.99999974E-6 : f32
    %432 = vector.broadcast %cst_267 : f32 to vector<1x16xf32>
    %433 = arith.addf %429, %432 : vector<1x16xf32>
    %434 = math.rsqrt %433 : vector<1x16xf32>
    %435 = vector.broadcast %434 : vector<1x16xf32> to vector<16x16xf32>
    %436 = arith.mulf %431, %435 : vector<16x16xf32>
    %437 = vector.broadcast %417 : vector<1x16xf32> to vector<16x16xf32>
    %438 = arith.mulf %436, %437 : vector<16x16xf32>
    %439 = vector.broadcast %418 : vector<1x16xf32> to vector<16x16xf32>
    %440 = arith.addf %438, %439 : vector<16x16xf32>
    %441 = tpu.concatenate %150, %295, %440 in 1 : vector<16x16xf32>, vector<16x16xf32>, vector<16x16xf32> -> vector<16x48xf32>
    %c0_268 = arith.constant 0 : index
    %c0_269 = arith.constant 0 : index
    %442 = vector.load %arg54[%c0_268, %c0_269] : memref<16x48xf32, #tpu.memory_space<vmem>>, vector<16x48xf32>
    tpu.vector_store %arg54[%c0_268, %c0_269], %441 {strides = array<i32>} : memref<16x48xf32, #tpu.memory_space<vmem>>, vector<16x48xf32>,
    %c0_270 = arith.constant 0 : index
    %c0_271 = arith.constant 0 : index
    %443 = vector.load %arg5[%c0_270, %c0_271] : memref<2x16xbf16, #tpu.memory_space<vmem>>, vector<2x16xbf16>
    %444 = arith.truncf %441 : vector<16x48xf32> to vector<16x48xbf16>
    %cst_272 = arith.constant dense<0.000000e+00> : vector<2x48xf32>
    %445 = tpu.matmul %443, %444, %cst_272 {dimension_numbers = #tpu.dot_dimension_numbers<[1], [0], [0], [1], [0, 0, 1, 1], [], []>} : vector<2x16xbf16>, vector<16x48xbf16>, vector<2x48xf32> -> vector<2x48xf32>
    %c0_273 = arith.constant 0 : index
    %c0_274 = arith.constant 0 : index
    %446 = vector.load %arg55[%c0_273, %c0_274] : memref<2x48xf32, #tpu.memory_space<vmem>>, vector<2x48xf32>
    tpu.vector_store %arg55[%c0_273, %c0_274], %445 {strides = array<i32>} : memref<2x48xf32, #tpu.memory_space<vmem>>, vector<2x48xf32>,
    return
  }
}

</mosaic_0001>

<llo_original>
// kernel: tpu_custom_call.1
$region0: #{tpu_custom_call.1}
  #allocation0 [shape = 'u32[]', space=smem, size = 0x4, offset = 0x4, fixed_abs, tag = 'smem constant byte address 0x4 - core index']
  #allocation1 [shape = 'u32[144,128]{1,0:T(1,128)}', space=vmem, size = 0x12000, scoped, tag = 'internal scratch']
  %s0 = inlined_call_operand.smem [shape: u32[56], index: -1, kind: input, shape index: {}]
  %s1 = sld [smem:[%s0]]
  %s2 = scalar_lea.smem %s0, 1
  %s3 = sld [smem:[%s2]]
  %s4 = scalar_lea.smem %s0, 2
  %s5 = sld [smem:[%s4]]
  %s6 = scalar_lea.smem %s0, 3
  %s7 = sld [smem:[%s6]]
  %s8 = scalar_lea.smem %s0, 4
  %s9 = sld [smem:[%s8]]
  %s10 = scalar_lea.smem %s0, 5
  %s11 = sld [smem:[%s10]]
  %s12 = scalar_lea.smem %s0, 6
  %s13 = sld [smem:[%s12]]
  %s14 = scalar_lea.smem %s0, 7
  %s15 = sld [smem:[%s14]]
  %s16 = scalar_lea.smem %s0, 8
  %s17 = sld [smem:[%s16]]
  %s18 = scalar_lea.smem %s0, 9
  %s19 = sld [smem:[%s18]]
  %s20 = scalar_lea.smem %s0, 10
  %s21 = sld [smem:[%s20]]
  %s22 = scalar_lea.smem %s0, 11
  %s23 = sld [smem:[%s22]]
  %s24 = scalar_lea.smem %s0, 12
  %s25 = sld [smem:[%s24]]
  %s26 = scalar_lea.smem %s0, 13
  %s27 = sld [smem:[%s26]]
  %s28 = scalar_lea.smem %s0, 14
  %s29 = sld [smem:[%s28]]
  %s30 = scalar_lea.smem %s0, 15
  %s31 = sld [smem:[%s30]]
  %s32 = scalar_lea.smem %s0, 16
  %s33 = sld [smem:[%s32]]
  %s34 = scalar_lea.smem %s0, 17
  %s35 = sld [smem:[%s34]]
  %s36 = scalar_lea.smem %s0, 18
  %s37 = sld [smem:[%s36]]
  %s38 = scalar_lea.smem %s0, 19
  %s39 = sld [smem:[%s38]]
  %s40 = scalar_lea.smem %s0, 20
  %s41 = sld [smem:[%s40]]
  %s42 = scalar_lea.smem %s0, 21
  %s43 = sld [smem:[%s42]]
  %s44 = scalar_lea.smem %s0, 22
  %s45 = sld [smem:[%s44]]
  %s46 = scalar_lea.smem %s0, 23
  %s47 = sld [smem:[%s46]]
  %s48 = scalar_lea.smem %s0, 24
  %s49 = sld [smem:[%s48]]
  %s50 = scalar_lea.smem %s0, 25
  %s51 = sld [smem:[%s50]]
  %s52 = scalar_lea.smem %s0, 26
  %s53 = sld [smem:[%s52]]
  %s54 = scalar_lea.smem %s0, 27
  %s55 = sld [smem:[%s54]]
  %s56 = scalar_lea.smem %s0, 28
  %s57 = sld [smem:[%s56]]
  %s58 = scalar_lea.smem %s0, 29
  %s59 = sld [smem:[%s58]]
  %s60 = scalar_lea.smem %s0, 30
  %s61 = sld [smem:[%s60]]
  %s62 = scalar_lea.smem %s0, 31
  %s63 = sld [smem:[%s62]]
  %s64 = scalar_lea.smem %s0, 32
  %s65 = sld [smem:[%s64]]
  %s66 = scalar_lea.smem %s0, 33
  %s67 = sld [smem:[%s66]]
  %s68 = scalar_lea.smem %s0, 34
  %s69 = sld [smem:[%s68]]
  %s70 = scalar_lea.smem %s0, 35
  %s71 = sld [smem:[%s70]]
  %s72 = scalar_lea.smem %s0, 36
  %s73 = sld [smem:[%s72]]
  %s74 = scalar_lea.smem %s0, 37
  %s75 = sld [smem:[%s74]]
  %s76 = scalar_lea.smem %s0, 38
  %s77 = sld [smem:[%s76]]
  %s78 = scalar_lea.smem %s0, 39
  %s79 = sld [smem:[%s78]]
  %s80 = scalar_lea.smem %s0, 40
  %s81 = sld [smem:[%s80]]
  %s82 = scalar_lea.smem %s0, 41
  %s83 = sld [smem:[%s82]]
  %s84 = scalar_lea.smem %s0, 42
  %s85 = sld [smem:[%s84]]
  %s86 = scalar_lea.smem %s0, 43
  %s87 = sld [smem:[%s86]]
  %s88 = scalar_lea.smem %s0, 44
  %s89 = sld [smem:[%s88]]
  %s90 = scalar_lea.smem %s0, 45
  %s91 = sld [smem:[%s90]]
  %s92 = scalar_lea.smem %s0, 46
  %s93 = sld [smem:[%s92]]
  %s94 = scalar_lea.smem %s0, 47
  %s95 = sld [smem:[%s94]]
  %s96 = scalar_lea.smem %s0, 48
  %s97 = sld [smem:[%s96]]
  %s98 = scalar_lea.smem %s0, 49
  %s99 = sld [smem:[%s98]]
  %s100 = scalar_lea.smem %s0, 50
  %s101 = sld [smem:[%s100]]
  %s102 = scalar_lea.smem %s0, 51
  %s103 = sld [smem:[%s102]]
  %s104 = scalar_lea.smem %s0, 52
  %s105 = sld [smem:[%s104]]
  %s106 = scalar_lea.smem %s0, 53
  %s107 = sld [smem:[%s106]]
  %s108 = scalar_lea.smem %s0, 54
  %s109 = sld [smem:[%s108]]
  %s110 = scalar_lea.smem %s0, 55
  %s111 = sld [smem:[%s110]]
  %112 = xla_tuple %s109, %s111
  %s113 = sld [smem:[#allocation0]]
  $region282: #{tpu_custom_call.1} parent=0
    _
  %s115 = ssub.s32 1, %s113
  %s116 = scalar_select 0, %s115, %s113
  $region1: #{tpu_custom_call.1} parent=0
    #allocation2 [shape = 'u8[512]{0}', space=vmem, size = 0x400, scoped, tag = 'input window, operand 37, single buffered']
    #allocation3 [shape = 's32[1]{0}', space=sflag, size = 0x4, scoped, tag = 'scoped memory for tpu_custom_call.1']
    #allocation4 [shape = 's32[1]{0}', space=sflag, size = 0x4, scoped, tag = 'scoped memory for tpu_custom_call.1']
    #allocation5 [shape = 'u8[512]{0}', space=vmem, size = 0x400, scoped, tag = 'input window, operand 39, single buffered']
    #allocation6 [shape = 's32[1]{0}', space=sflag, size = 0x4, scoped, tag = 'scoped memory for tpu_custom_call.1']
    #allocation7 [shape = 'u8[512]{0}', space=vmem, size = 0x400, scoped, tag = 'input window, operand 41, single buffered']
    #allocation8 [shape = 'u8[512]{0}', space=vmem, size = 0x400, scoped, tag = 'input window, operand 43, single buffered']
    #allocation9 [shape = 's32[1]{0}', space=sflag, size = 0x4, scoped, tag = 'scoped memory for tpu_custom_call.1']
    #allocation10 [shape = 'u8[512]{0}', space=vmem, size = 0x400, scoped, tag = 'input window, operand 44, single buffered']
    #allocation11 [shape = 'u8[512]{0}', space=vmem, size = 0x400, scoped, tag = 'input window, operand 45, single buffered']
    #allocation12 [shape = 's32[1]{0}', space=sflag, size = 0x4, scoped, tag = 'scoped memory for tpu_custom_call.1']
    #allocation13 [shape = 'u8[512]{0}', space=vmem, size = 0x400, scoped, tag = 'input window, operand 47, single buffered']
    #allocation14 [shape = 'u8[512]{0}', space=vmem, size = 0x400, scoped, tag = 'input window, operand 49, single buffered']
    #allocation15 [shape = 's32[1]{0}', space=sflag, size = 0x4, scoped, tag = 'scoped memory for tpu_custom_call.1']
    #allocation16 [shape = 'u8[512]{0}', space=vmem, size = 0x400, scoped, tag = 'input window, operand 50, single buffered']
    #allocation17 [shape = 'u8[512]{0}', space=vmem, size = 0x400, scoped, tag = 'input window, operand 51, single buffered']
    #allocation18 [shape = 's32[1]{0}', space=sflag, size = 0x4, scoped, tag = 'scoped memory for tpu_custom_call.1']
    #allocation19 [shape = 'u8[512]{0}', space=vmem, size = 0x400, scoped, tag = 'input window, operand 52, single buffered']
    #allocation20 [shape = 'u8[512]{0}', space=vmem, size = 0x400, scoped, tag = 'input window, operand 53, single buffered']
    #allocation21 [shape = 's32[1]{0}', space=sflag, size = 0x4, scoped, tag = 'scoped memory for tpu_custom_call.1']
    #allocation22 [shape = 'u8[8192]{0}', space=vmem, size = 0x2000, scoped, tag = 'output window, operand 0, single buffered']
    #allocation23 [shape = 'u8[1024]{0}', space=vmem, size = 0x400, scoped, tag = 'output window, operand 1, single buffered']
    #allocation24 [shape = 's32[1]{0}', space=sflag, size = 0x4, scoped, tag = 'scoped memory for tpu_custom_call.1']
    %117 = vsyncpa [#allocation3], 0
    %118 = vsyncpa [#allocation6], 0
    %119 = vsyncpa [#allocation9], 0
    %120 = vsyncpa [#allocation12], 0
    %121 = vsyncpa [#allocation15], 0
    %122 = vsyncpa [#allocation18], 0
    %123 = vsyncpa [#allocation21], 0
    %124 = vsyncpa [#allocation4], 0
    %125 = vsyncpa [#allocation24], 0
    // Predicated region
    $region2: #{tpu_custom_call.1} parent=1 // pred_check
      _
    $region3: #{tpu_custom_call.1} parent=1 // pred_check_branch
      %127 = sbr.rel (0) target = $region5
    $region4: #{tpu_custom_call.1} parent=1 // pred_region
      _
    $region5: #{tpu_custom_call.1} parent=1 // pred_fallthru
      _
    // Predicated region
    $region6: #{tpu_custom_call.1} parent=1 // pred_check
      _
    $region7: #{tpu_custom_call.1} parent=1 // pred_check_branch
      %129 = sbr.rel (0) target = $region9
    $region8: #{tpu_custom_call.1} parent=1 // pred_region
      _
    $region9: #{tpu_custom_call.1} parent=1 // pred_fallthru
      _
    // Predicated region
    $region10: #{tpu_custom_call.1} parent=1 // pred_check
      _
    $region11: #{tpu_custom_call.1} parent=1 // pred_check_branch
      %131 = sbr.rel (0) target = $region13
    $region12: #{tpu_custom_call.1} parent=1 // pred_region
      _
    $region13: #{tpu_custom_call.1} parent=1 // pred_fallthru
      _
    // Predicated region
    $region14: #{tpu_custom_call.1} parent=1 // pred_check
      _
    $region15: #{tpu_custom_call.1} parent=1 // pred_check_branch
      %133 = sbr.rel (0) target = $region17
    $region16: #{tpu_custom_call.1} parent=1 // pred_region
      _
    $region17: #{tpu_custom_call.1} parent=1 // pred_fallthru
      _
    // Predicated region
    $region18: #{tpu_custom_call.1} parent=1 // pred_check
      _
    $region19: #{tpu_custom_call.1} parent=1 // pred_check_branch
      %135 = sbr.rel (0) target = $region21
    $region20: #{tpu_custom_call.1} parent=1 // pred_region
      _
    $region21: #{tpu_custom_call.1} parent=1 // pred_fallthru
      _
    // Predicated region
    $region22: #{tpu_custom_call.1} parent=1 // pred_check
      _
    $region23: #{tpu_custom_call.1} parent=1 // pred_check_branch
      %137 = sbr.rel (0) target = $region25
    $region24: #{tpu_custom_call.1} parent=1 // pred_region
      _
    $region25: #{tpu_custom_call.1} parent=1 // pred_fallthru
      _
    // Predicated region
    $region26: #{tpu_custom_call.1} parent=1 // pred_check
      _
    $region27: #{tpu_custom_call.1} parent=1 // pred_check_branch
      %139 = sbr.rel (0) target = $region29
    $region28: #{tpu_custom_call.1} parent=1 // pred_region
      _
    $region29: #{tpu_custom_call.1} parent=1 // pred_fallthru
      _
    // Predicated region
    $region30: #{tpu_custom_call.1} parent=1 // pred_check
      _
    $region31: #{tpu_custom_call.1} parent=1 // pred_check_branch
      %141 = sbr.rel (0) target = $region33
    $region32: #{tpu_custom_call.1} parent=1 // pred_region
      _
    $region33: #{tpu_custom_call.1} parent=1 // pred_fallthru
      _
    // Predicated region
    $region34: #{tpu_custom_call.1} parent=1 // pred_check
      _
    $region35: #{tpu_custom_call.1} parent=1 // pred_check_branch
      %143 = sbr.rel (0) target = $region37
    $region36: #{tpu_custom_call.1} parent=1 // pred_region
      _
    $region37: #{tpu_custom_call.1} parent=1 // pred_fallthru
      _
    // Predicated region
    $region38: #{tpu_custom_call.1} parent=1 // pred_check
      _
    $region39: #{tpu_custom_call.1} parent=1 // pred_check_branch
      %145 = sbr.rel (0) target = $region41
    $region40: #{tpu_custom_call.1} parent=1 // pred_region
      _
    $region41: #{tpu_custom_call.1} parent=1 // pred_fallthru
      _
    // Predicated region
    $region42: #{tpu_custom_call.1} parent=1 // pred_check
      _
    $region43: #{tpu_custom_call.1} parent=1 // pred_check_branch
      %147 = sbr.rel (0) target = $region45
    $region44: #{tpu_custom_call.1} parent=1 // pred_region
      _
    $region45: #{tpu_custom_call.1} parent=1 // pred_fallthru
      _
    // Predicated region
    $region46: #{tpu_custom_call.1} parent=1 // pred_check
      _
    $region47: #{tpu_custom_call.1} parent=1 // pred_check_branch
      %149 = sbr.rel (0) target = $region49
    $region48: #{tpu_custom_call.1} parent=1 // pred_region
      _
    $region49: #{tpu_custom_call.1} parent=1 // pred_fallthru
      _
    // Predicated region
    $region50: #{tpu_custom_call.1} parent=1 // pred_check
      _
    $region51: #{tpu_custom_call.1} parent=1 // pred_check_branch
      %151 = sbr.rel (0) target = $region53
    $region52: #{tpu_custom_call.1} parent=1 // pred_region
      _
    $region53: #{tpu_custom_call.1} parent=1 // pred_fallthru
      _
    // Predicated region
    $region54: #{tpu_custom_call.1} parent=1 // pred_check
      _
    $region55: #{tpu_custom_call.1} parent=1 // pred_check_branch
      %153 = sbr.rel (0) target = $region57
    $region56: #{tpu_custom_call.1} parent=1 // pred_region
      _
    $region57: #{tpu_custom_call.1} parent=1 // pred_fallthru
      _
    // Predicated region
    $region58: #{tpu_custom_call.1} parent=1 // pred_check
      _
    $region59: #{tpu_custom_call.1} parent=1 // pred_check_branch
      %155 = sbr.rel (0) target = $region61
    $region60: #{tpu_custom_call.1} parent=1 // pred_region
      _
    $region61: #{tpu_custom_call.1} parent=1 // pred_fallthru
      _
    // Predicated region
    $region62: #{tpu_custom_call.1} parent=1 // pred_check
      _
    $region63: #{tpu_custom_call.1} parent=1 // pred_check_branch
      %157 = sbr.rel (0) target = $region65
    $region64: #{tpu_custom_call.1} parent=1 // pred_region
      _
    $region65: #{tpu_custom_call.1} parent=1 // pred_fallthru
      _
    // Predicated region
    $region66: #{tpu_custom_call.1} parent=1 // pred_check
      _
    $region67: #{tpu_custom_call.1} parent=1 // pred_check_branch
      %159 = sbr.rel (0) target = $region69
    $region68: #{tpu_custom_call.1} parent=1 // pred_region
      _
    $region69: #{tpu_custom_call.1} parent=1 // pred_fallthru
      _
    // Predicated region
    $region70: #{tpu_custom_call.1} parent=1 // pred_check
      _
    $region71: #{tpu_custom_call.1} parent=1 // pred_check_branch
      %161 = sbr.rel (0) target = $region73
    $region72: #{tpu_custom_call.1} parent=1 // pred_region
      _
    $region73: #{tpu_custom_call.1} parent=1 // pred_fallthru
      _
    // Predicated region
    $region74: #{tpu_custom_call.1} parent=1 // pred_check
      _
    $region75: #{tpu_custom_call.1} parent=1 // pred_check_branch
      %163 = sbr.rel (0) target = $region77
    $region76: #{tpu_custom_call.1} parent=1 // pred_region
      _
    $region77: #{tpu_custom_call.1} parent=1 // pred_fallthru
      _
    // Predicated region
    $region78: #{tpu_custom_call.1} parent=1 // pred_check
      _
    $region79: #{tpu_custom_call.1} parent=1 // pred_check_branch
      %165 = sbr.rel (0) target = $region81
    $region80: #{tpu_custom_call.1} parent=1 // pred_region
      _
    $region81: #{tpu_custom_call.1} parent=1 // pred_fallthru
      _
    // Predicated region
    $region82: #{tpu_custom_call.1} parent=1 // pred_check
      _
    $region83: #{tpu_custom_call.1} parent=1 // pred_check_branch
      %167 = sbr.rel (0) target = $region85
    $region84: #{tpu_custom_call.1} parent=1 // pred_region
      _
    $region85: #{tpu_custom_call.1} parent=1 // pred_fallthru
      _
    // Predicated region
    $region86: #{tpu_custom_call.1} parent=1 // pred_check
      _
    $region87: #{tpu_custom_call.1} parent=1 // pred_check_branch
      %169 = sbr.rel (0) target = $region89
    $region88: #{tpu_custom_call.1} parent=1 // pred_region
      _
    $region89: #{tpu_custom_call.1} parent=1 // pred_fallthru
      _
    // Predicated region
    $region90: #{tpu_custom_call.1} parent=1 // pred_check
      _
    $region91: #{tpu_custom_call.1} parent=1 // pred_check_branch
      %171 = sbr.rel (0) target = $region93
    $region92: #{tpu_custom_call.1} parent=1 // pred_region
      _
    $region93: #{tpu_custom_call.1} parent=1 // pred_fallthru
      _
    // Predicated region
    $region94: #{tpu_custom_call.1} parent=1 // pred_check
      _
    $region95: #{tpu_custom_call.1} parent=1 // pred_check_branch
      %173 = sbr.rel (0) target = $region97
    $region96: #{tpu_custom_call.1} parent=1 // pred_region
      _
    $region97: #{tpu_custom_call.1} parent=1 // pred_fallthru
      _
    // Predicated region
    $region98: #{tpu_custom_call.1} parent=1 // pred_check
      _
    $region99: #{tpu_custom_call.1} parent=1 // pred_check_branch
      %175 = sbr.rel (0) target = $region101
    $region100: #{tpu_custom_call.1} parent=1 // pred_region
      _
    $region101: #{tpu_custom_call.1} parent=1 // pred_fallthru
      _
    // Predicated region
    $region102: #{tpu_custom_call.1} parent=1 // pred_check
      _
    $region103: #{tpu_custom_call.1} parent=1 // pred_check_branch
      %177 = sbr.rel (0) target = $region105
    $region104: #{tpu_custom_call.1} parent=1 // pred_region
      _
    $region105: #{tpu_custom_call.1} parent=1 // pred_fallthru
      _
    // Predicated region
    $region106: #{tpu_custom_call.1} parent=1 // pred_check
      _
    $region107: #{tpu_custom_call.1} parent=1 // pred_check_branch
      %179 = sbr.rel (0) target = $region109
    $region108: #{tpu_custom_call.1} parent=1 // pred_region
      _
    $region109: #{tpu_custom_call.1} parent=1 // pred_fallthru
      _
    // Predicated region
    $region110: #{tpu_custom_call.1} parent=1 // pred_check
      _
    $region111: #{tpu_custom_call.1} parent=1 // pred_check_branch
      %181 = sbr.rel (0) target = $region113
    $region112: #{tpu_custom_call.1} parent=1 // pred_region
      _
    $region113: #{tpu_custom_call.1} parent=1 // pred_fallthru
      _
    // Predicated region
    $region114: #{tpu_custom_call.1} parent=1 // pred_check
      _
    $region115: #{tpu_custom_call.1} parent=1 // pred_check_branch
      %183 = sbr.rel (0) target = $region117
    $region116: #{tpu_custom_call.1} parent=1 // pred_region
      _
    $region117: #{tpu_custom_call.1} parent=1 // pred_fallthru
      _
    // Predicated region
    $region118: #{tpu_custom_call.1} parent=1 // pred_check
      _
    $region119: #{tpu_custom_call.1} parent=1 // pred_check_branch
      %185 = sbr.rel (0) target = $region121
    $region120: #{tpu_custom_call.1} parent=1 // pred_region
      _
    $region121: #{tpu_custom_call.1} parent=1 // pred_fallthru
      _
    // Predicated region
    $region122: #{tpu_custom_call.1} parent=1 // pred_check
      _
    $region123: #{tpu_custom_call.1} parent=1 // pred_check_branch
      %187 = sbr.rel (0) target = $region125
    $region124: #{tpu_custom_call.1} parent=1 // pred_region
      _
    $region125: #{tpu_custom_call.1} parent=1 // pred_fallthru
      _
    // Predicated region
    $region126: #{tpu_custom_call.1} parent=1 // pred_check
      _
    $region127: #{tpu_custom_call.1} parent=1 // pred_check_branch
      %189 = sbr.rel (0) target = $region129
    $region128: #{tpu_custom_call.1} parent=1 // pred_region
      _
    $region129: #{tpu_custom_call.1} parent=1 // pred_fallthru
      _
    // Predicated region
    $region130: #{tpu_custom_call.1} parent=1 // pred_check
      _
    $region131: #{tpu_custom_call.1} parent=1 // pred_check_branch
      %191 = sbr.rel (0) target = $region133
    $region132: #{tpu_custom_call.1} parent=1 // pred_region
      _
    $region133: #{tpu_custom_call.1} parent=1 // pred_fallthru
      _
    // Predicated region
    $region134: #{tpu_custom_call.1} parent=1 // pred_check
      _
    $region135: #{tpu_custom_call.1} parent=1 // pred_check_branch
      %193 = sbr.rel (0) target = $region137
    $region136: #{tpu_custom_call.1} parent=1 // pred_region
      _
    $region137: #{tpu_custom_call.1} parent=1 // pred_fallthru
      _
    // Predicated region
    $region138: #{tpu_custom_call.1} parent=1 // pred_check
      _
    $region139: #{tpu_custom_call.1} parent=1 // pred_check_branch
      %195 = sbr.rel (0) target = $region141
    $region140: #{tpu_custom_call.1} parent=1 // pred_region
      _
    $region141: #{tpu_custom_call.1} parent=1 // pred_fallthru
      _
    // Predicated region
    $region142: #{tpu_custom_call.1} parent=1 // pred_check
      _
    $region143: #{tpu_custom_call.1} parent=1 // pred_check_branch
      %197 = sbr.rel (0) target = $region145
    $region144: #{tpu_custom_call.1} parent=1 // pred_region
      _
    $region145: #{tpu_custom_call.1} parent=1 // pred_fallthru
      _
    // Predicated region
    $region146: #{tpu_custom_call.1} parent=1 // pred_check
      _
    $region147: #{tpu_custom_call.1} parent=1 // pred_check_branch
      %199 = sbr.rel (0) target = $region149
    $region148: #{tpu_custom_call.1} parent=1 // pred_region
      _
    $region149: #{tpu_custom_call.1} parent=1 // pred_fallthru
      _
    // Predicated region
    $region150: #{tpu_custom_call.1} parent=1 // pred_check
      _
    $region151: #{tpu_custom_call.1} parent=1 // pred_check_branch
      %201 = sbr.rel (0) target = $region153
    $region152: #{tpu_custom_call.1} parent=1 // pred_region
      %s203 = ssub.s32 16, 16
      %204 = vsyncadd [#allocation3], %s203
      %s206 = sshll.u32 [#allocation2], 4
      %s207 = int_to_ptr.vmem [resolvable:$true] %s206
      %209 = dma.hbm_to_vmem [thread:$0]  %s75, 16, %s207, [#allocation3]
    $region153: #{tpu_custom_call.1} parent=1 // pred_fallthru
      _
    // Predicated region
    $region154: #{tpu_custom_call.1} parent=1 // pred_check
      _
    $region155: #{tpu_custom_call.1} parent=1 // pred_check_branch
      %211 = sbr.rel (0) target = $region157
    $region156: #{tpu_custom_call.1} parent=1 // pred_region
      _
    $region157: #{tpu_custom_call.1} parent=1 // pred_fallthru
      _
    // Predicated region
    $region158: #{tpu_custom_call.1} parent=1 // pred_check
      _
    $region159: #{tpu_custom_call.1} parent=1 // pred_check_branch
      %213 = sbr.rel (0) target = $region161
    $region160: #{tpu_custom_call.1} parent=1 // pred_region
      %s215 = ssub.s32 16, 16
      %216 = vsyncadd [#allocation6], %s215
      %s218 = sshll.u32 [#allocation5], 4
      %s219 = int_to_ptr.vmem [resolvable:$true] %s218
      %221 = dma.hbm_to_vmem [thread:$0]  %s79, 16, %s219, [#allocation6]
    $region161: #{tpu_custom_call.1} parent=1 // pred_fallthru
      _
    // Predicated region
    $region162: #{tpu_custom_call.1} parent=1 // pred_check
      _
    $region163: #{tpu_custom_call.1} parent=1 // pred_check_branch
      %223 = sbr.rel (0) target = $region165
    $region164: #{tpu_custom_call.1} parent=1 // pred_region
      _
    $region165: #{tpu_custom_call.1} parent=1 // pred_fallthru
      _
    // Predicated region
    $region166: #{tpu_custom_call.1} parent=1 // pred_check
      _
    $region167: #{tpu_custom_call.1} parent=1 // pred_check_branch
      %225 = sbr.rel (0) target = $region169
    $region168: #{tpu_custom_call.1} parent=1 // pred_region
      %s227 = ssub.s32 16, 16
      %228 = vsyncadd [#allocation6], %s227
      %s230 = sshll.u32 [#allocation7], 4
      %s231 = int_to_ptr.vmem [resolvable:$true] %s230
      %233 = dma.hbm_to_vmem [thread:$0]  %s83, 16, %s231, [#allocation6]
    $region169: #{tpu_custom_call.1} parent=1 // pred_fallthru
      _
    // Predicated region
    $region170: #{tpu_custom_call.1} parent=1 // pred_check
      _
    $region171: #{tpu_custom_call.1} parent=1 // pred_check_branch
      %235 = sbr.rel (0) target = $region173
    $region172: #{tpu_custom_call.1} parent=1 // pred_region
      _
    $region173: #{tpu_custom_call.1} parent=1 // pred_fallthru
      _
    // Predicated region
    $region174: #{tpu_custom_call.1} parent=1 // pred_check
      _
    $region175: #{tpu_custom_call.1} parent=1 // pred_check_branch
      %237 = sbr.rel (0) target = $region177
    $region176: #{tpu_custom_call.1} parent=1 // pred_region
      %s239 = ssub.s32 16, 16
      %240 = vsyncadd [#allocation9], %s239
      %s242 = sshll.u32 [#allocation8], 4
      %s243 = int_to_ptr.vmem [resolvable:$true] %s242
      %245 = dma.hbm_to_vmem [thread:$0]  %s87, 16, %s243, [#allocation9]
    $region177: #{tpu_custom_call.1} parent=1 // pred_fallthru
      _
    // Predicated region
    $region178: #{tpu_custom_call.1} parent=1 // pred_check
      _
    $region179: #{tpu_custom_call.1} parent=1 // pred_check_branch
      %247 = sbr.rel (0) target = $region181
    $region180: #{tpu_custom_call.1} parent=1 // pred_region
      %s249 = ssub.s32 16, 16
      %250 = vsyncadd [#allocation9], %s249
      %s252 = sshll.u32 [#allocation10], 4
      %s253 = int_to_ptr.vmem [resolvable:$true] %s252
      %255 = dma.hbm_to_vmem [thread:$0]  %s89, 16, %s253, [#allocation9]
    $region181: #{tpu_custom_call.1} parent=1 // pred_fallthru
      _
    // Predicated region
    $region182: #{tpu_custom_call.1} parent=1 // pred_check
      _
    $region183: #{tpu_custom_call.1} parent=1 // pred_check_branch
      %257 = sbr.rel (0) target = $region185
    $region184: #{tpu_custom_call.1} parent=1 // pred_region
      %s259 = ssub.s32 16, 16
      %260 = vsyncadd [#allocation12], %s259
      %s262 = sshll.u32 [#allocation11], 4
      %s263 = int_to_ptr.vmem [resolvable:$true] %s262
      %265 = dma.hbm_to_vmem [thread:$0]  %s91, 16, %s263, [#allocation12]
    $region185: #{tpu_custom_call.1} parent=1 // pred_fallthru
      _
    // Predicated region
    $region186: #{tpu_custom_call.1} parent=1 // pred_check
      _
    $region187: #{tpu_custom_call.1} parent=1 // pred_check_branch
      %267 = sbr.rel (0) target = $region189
    $region188: #{tpu_custom_call.1} parent=1 // pred_region
      _
    $region189: #{tpu_custom_call.1} parent=1 // pred_fallthru
      _
    // Predicated region
    $region190: #{tpu_custom_call.1} parent=1 // pred_check
      _
    $region191: #{tpu_custom_call.1} parent=1 // pred_check_branch
      %269 = sbr.rel (0) target = $region193
    $region192: #{tpu_custom_call.1} parent=1 // pred_region
      %s271 = ssub.s32 16, 16
      %272 = vsyncadd [#allocation12], %s271
      %s274 = sshll.u32 [#allocation13], 4
      %s275 = int_to_ptr.vmem [resolvable:$true] %s274
      %277 = dma.hbm_to_vmem [thread:$0]  %s95, 16, %s275, [#allocation12]
    $region193: #{tpu_custom_call.1} parent=1 // pred_fallthru
      _
    // Predicated region
    $region194: #{tpu_custom_call.1} parent=1 // pred_check
      _
    $region195: #{tpu_custom_call.1} parent=1 // pred_check_branch
      %279 = sbr.rel (0) target = $region197
    $region196: #{tpu_custom_call.1} parent=1 // pred_region
      _
    $region197: #{tpu_custom_call.1} parent=1 // pred_fallthru
      _
    // Predicated region
    $region198: #{tpu_custom_call.1} parent=1 // pred_check
      _
    $region199: #{tpu_custom_call.1} parent=1 // pred_check_branch
      %281 = sbr.rel (0) target = $region201
    $region200: #{tpu_custom_call.1} parent=1 // pred_region
      %s283 = ssub.s32 16, 16
      %284 = vsyncadd [#allocation15], %s283
      %s286 = sshll.u32 [#allocation14], 4
      %s287 = int_to_ptr.vmem [resolvable:$true] %s286
      %289 = dma.hbm_to_vmem [thread:$0]  %s99, 16, %s287, [#allocation15]
    $region201: #{tpu_custom_call.1} parent=1 // pred_fallthru
      _
    // Predicated region
    $region202: #{tpu_custom_call.1} parent=1 // pred_check
      _
    $region203: #{tpu_custom_call.1} parent=1 // pred_check_branch
      %291 = sbr.rel (0) target = $region205
    $region204: #{tpu_custom_call.1} parent=1 // pred_region
      %s293 = ssub.s32 16, 16
      %294 = vsyncadd [#allocation15], %s293
      %s296 = sshll.u32 [#allocation16], 4
      %s297 = int_to_ptr.vmem [resolvable:$true] %s296
      %299 = dma.hbm_to_vmem [thread:$0]  %s101, 16, %s297, [#allocation15]
    $region205: #{tpu_custom_call.1} parent=1 // pred_fallthru
      _
    // Predicated region
    $region206: #{tpu_custom_call.1} parent=1 // pred_check
      _
    $region207: #{tpu_custom_call.1} parent=1 // pred_check_branch
      %301 = sbr.rel (0) target = $region209
    $region208: #{tpu_custom_call.1} parent=1 // pred_region
      %s303 = ssub.s32 16, 16
      %304 = vsyncadd [#allocation18], %s303
      %s306 = sshll.u32 [#allocation17], 4
      %s307 = int_to_ptr.vmem [resolvable:$true] %s306
      %309 = dma.hbm_to_vmem [thread:$0]  %s103, 16, %s307, [#allocation18]
    $region209: #{tpu_custom_call.1} parent=1 // pred_fallthru
      _
    // Predicated region
    $region210: #{tpu_custom_call.1} parent=1 // pred_check
      _
    $region211: #{tpu_custom_call.1} parent=1 // pred_check_branch
      %311 = sbr.rel (0) target = $region213
    $region212: #{tpu_custom_call.1} parent=1 // pred_region
      %s313 = ssub.s32 16, 16
      %314 = vsyncadd [#allocation18], %s313
      %s316 = sshll.u32 [#allocation19], 4
      %s317 = int_to_ptr.vmem [resolvable:$true] %s316
      %319 = dma.hbm_to_vmem [thread:$0]  %s105, 16, %s317, [#allocation18]
    $region213: #{tpu_custom_call.1} parent=1 // pred_fallthru
      _
    // Predicated region
    $region214: #{tpu_custom_call.1} parent=1 // pred_check
      _
    $region215: #{tpu_custom_call.1} parent=1 // pred_check_branch
      %321 = sbr.rel (0) target = $region217
    $region216: #{tpu_custom_call.1} parent=1 // pred_region
      %s323 = ssub.s32 16, 16
      %324 = vsyncadd [#allocation21], %s323
      %s326 = sshll.u32 [#allocation20], 4
      %s327 = int_to_ptr.vmem [resolvable:$true] %s326
      %329 = dma.hbm_to_vmem [thread:$0]  %s107, 16, %s327, [#allocation21]
    $region217: #{tpu_custom_call.1} parent=1 // pred_fallthru
      _
    // Predicated region
    $region218: #{tpu_custom_call.1} parent=1 // pred_check
      _
    $region219: #{tpu_custom_call.1} parent=1 // pred_check_branch
      %331 = sbr.rel (0) target = $region221
    $region220: #{tpu_custom_call.1} parent=1 // pred_region
      %332 = dma.done [#allocation3], 16
    $region221: #{tpu_custom_call.1} parent=1 // pred_fallthru
      _
    // Predicated region
    $region222: #{tpu_custom_call.1} parent=1 // pred_check
      _
    $region223: #{tpu_custom_call.1} parent=1 // pred_check_branch
      %334 = sbr.rel (0) target = $region225
    $region224: #{tpu_custom_call.1} parent=1 // pred_region
      %335 = dma.done [#allocation6], 16
    $region225: #{tpu_custom_call.1} parent=1 // pred_fallthru
      _
    // Predicated region
    $region226: #{tpu_custom_call.1} parent=1 // pred_check
      _
    $region227: #{tpu_custom_call.1} parent=1 // pred_check_branch
      %337 = sbr.rel (0) target = $region229
    $region228: #{tpu_custom_call.1} parent=1 // pred_region
      %338 = dma.done [#allocation6], 16
    $region229: #{tpu_custom_call.1} parent=1 // pred_fallthru
      _
    // Predicated region
    $region230: #{tpu_custom_call.1} parent=1 // pred_check
      _
    $region231: #{tpu_custom_call.1} parent=1 // pred_check_branch
      %340 = sbr.rel (0) target = $region233
    $region232: #{tpu_custom_call.1} parent=1 // pred_region
      %341 = dma.done [#allocation9], 16
    $region233: #{tpu_custom_call.1} parent=1 // pred_fallthru
      _
    // Predicated region
    $region234: #{tpu_custom_call.1} parent=1 // pred_check
      _
    $region235: #{tpu_custom_call.1} parent=1 // pred_check_branch
      %343 = sbr.rel (0) target = $region237
    $region236: #{tpu_custom_call.1} parent=1 // pred_region
      %344 = dma.done [#allocation9], 16
    $region237: #{tpu_custom_call.1} parent=1 // pred_fallthru
      _
    // Predicated region
    $region238: #{tpu_custom_call.1} parent=1 // pred_check
      _
    $region239: #{tpu_custom_call.1} parent=1 // pred_check_branch
      %346 = sbr.rel (0) target = $region241
    $region240: #{tpu_custom_call.1} parent=1 // pred_region
      %347 = dma.done [#allocation12], 16
    $region241: #{tpu_custom_call.1} parent=1 // pred_fallthru
      _
    // Predicated region
    $region242: #{tpu_custom_call.1} parent=1 // pred_check
      _
    $region243: #{tpu_custom_call.1} parent=1 // pred_check_branch
      %349 = sbr.rel (0) target = $region245
    $region244: #{tpu_custom_call.1} parent=1 // pred_region
      %350 = dma.done [#allocation12], 16
    $region245: #{tpu_custom_call.1} parent=1 // pred_fallthru
      _
    // Predicated region
    $region246: #{tpu_custom_call.1} parent=1 // pred_check
      _
    $region247: #{tpu_custom_call.1} parent=1 // pred_check_branch
      %352 = sbr.rel (0) target = $region249
    $region248: #{tpu_custom_call.1} parent=1 // pred_region
      %353 = dma.done [#allocation15], 16
    $region249: #{tpu_custom_call.1} parent=1 // pred_fallthru
      _
    // Predicated region
    $region250: #{tpu_custom_call.1} parent=1 // pred_check
      _
    $region251: #{tpu_custom_call.1} parent=1 // pred_check_branch
      %355 = sbr.rel (0) target = $region253
    $region252: #{tpu_custom_call.1} parent=1 // pred_region
      %356 = dma.done [#allocation15], 16
    $region253: #{tpu_custom_call.1} parent=1 // pred_fallthru
      _
    // Predicated region
    $region254: #{tpu_custom_call.1} parent=1 // pred_check
      _
    $region255: #{tpu_custom_call.1} parent=1 // pred_check_branch
      %358 = sbr.rel (0) target = $region257
    $region256: #{tpu_custom_call.1} parent=1 // pred_region
      %359 = dma.done [#allocation18], 16
    $region257: #{tpu_custom_call.1} parent=1 // pred_fallthru
      _
    // Predicated region
    $region258: #{tpu_custom_call.1} parent=1 // pred_check
      _
    $region259: #{tpu_custom_call.1} parent=1 // pred_check_branch
      %361 = sbr.rel (0) target = $region261
    $region260: #{tpu_custom_call.1} parent=1 // pred_region
      %362 = dma.done [#allocation18], 16
    $region261: #{tpu_custom_call.1} parent=1 // pred_fallthru
      _
    // Predicated region
    $region262: #{tpu_custom_call.1} parent=1 // pred_check
      _
    $region263: #{tpu_custom_call.1} parent=1 // pred_check_branch
      %364 = sbr.rel (0) target = $region265
    $region264: #{tpu_custom_call.1} parent=1 // pred_region
      %365 = dma.done [#allocation21], 16
    $region265: #{tpu_custom_call.1} parent=1 // pred_fallthru
      _
    %v367 = vld [vmem:[%s3] sm:$0xff]
    %v368 = vld [vmem:[%s3 + $0x8] sm:$0xff]
    %v369 = vld [vmem:[%s3 + $0x10] sm:$0xff]
    %v370 = vpack.c.bf16 %v368, %v367
    %v371 = vpack.c.bf16 %v369, %v369
    %v372 = vld [vmem:[%s5] sm:$0xf]
    %v373 = vld [vmem:[%s5 + $0x4] sm:$0xf]
    %v374 = vld [vmem:[%s5 + $0x8] sm:$0xf]
    %v375 = vld [vmem:[%s7] sm:$0xf]
    %v376 = vld [vmem:[%s7 + $0x4] sm:$0xf]
    %v377 = vld [vmem:[%s9] sm:$0xf]
    %v378 = vld [vmem:[%s9 + $0x4] sm:$0xf]
    %v379 = vld [vmem:[%s9 + $0x8] sm:$0xf]
    %v380 = vld [vmem:[%s1] sm:$0xff]
    %v381 = vld [vmem:[%s1 + $0x8] sm:$0xff]
    %v382 = vpack.c.bf16 %v381, %v380
    %v383 = vld [vmem:[%s13] sm:$0xf]
    %v384 = vld [vmem:[%s13 + $0x4] sm:$0xf]
    %v385 = vld [vmem:[%s13 + $0x8] sm:$0x3]
    %v386 = vld [vmem:[%s15] sm:$0x1]
    %v388 = vlaneseq
    %v389 = vshrl.u32 %v388, 7
    %v390 = vsub.s32 0, %v389
    %v391 = vrot.slane %v386, %v390
    %v396 = vunpack.c.l.b16 %v383
    %v397 = vunpack.c.l.b16 %v384
    %v398 = vunpack.c.l.b16 %v385
    %v399 = vpack.c.b16 %v397, %v396
    %v400 = vpack.c.b16 %v398, %v398
    %vm402 = vcmask 162816
    %v404 = vsel %vm402, %v370, 0
    %v407 = vsel %vm402, %v371, 0
    %vm409 = vcmask 1041408
    %v411 = vsel %vm409, %v400, 0
    %413 = vmatprep.subr.bf16.mxu0 0
    %414 = vmatpush1.bf16.msra.mxu0 %v399
    %415 = vmatprep.subr.bf16.mxu0 0
    %416 = vmatpush1.bf16.msra.mxu0 %v411
    %417 = vmatprep.subr.bf16.mxu0 0
    %418 = vmatpush1.bf16.msra.mxu0 0
    %419 = vmatprep.subr.bf16.mxu0 0
    %420 = vmatpush1.bf16.msra.mxu0 0
    %421 = vmatprep.subr.bf16.mxu0 0
    %422 = vmatpush1.bf16.msra.mxu0 0
    %423 = vmatprep.subr.bf16.mxu0 0
    %424 = vmatpush1.bf16.msra.mxu0 0
    %425 = vmatprep.subr.bf16.mxu0 0
    %426 = vmatpush1.bf16.msra.mxu0 0
    %427 = vmatprep.subr.bf16.mxu0 0
    %428 = vmatpush1.bf16.msra.mxu0 0
    %429 = vmatprep.subr.bf16.mxu0 0
    %430 = vmatpush1.bf16.msra.mxu0 0
    %431 = vmatprep.subr.bf16.mxu0 0
    %432 = vmatpush1.bf16.msra.mxu0 0
    %433 = vmatprep.subr.bf16.mxu0 0
    %434 = vmatpush1.bf16.msra.mxu0 0
    %435 = vmatprep.subr.bf16.mxu0 0
    %436 = vmatpush1.bf16.msra.mxu0 0
    %437 = vmatprep.subr.bf16.mxu0 0
    %438 = vmatpush1.bf16.msra.mxu0 0
    %439 = vmatprep.subr.bf16.mxu0 0
    %440 = vmatpush1.bf16.msra.mxu0 0
    %441 = vmatprep.subr.bf16.mxu0 0
    %442 = vmatpush1.bf16.msra.mxu0 0
    %443 = vmatprep.subr.bf16.mxu0 0
    %444 = vmatpush1.bf16.msra.mxu0 0
    %445 = vmatprep.mubr.bf16.mxu0 0
    %446 = vmatmul.mubr.bf16.gmra.mrb[0].mxu0 %v404
    %v447 = vpop.f32.mrb[0].mxu0
    %v448 = vadd.f32 %v391, %v447
    %v449 = vpop.f32.mrb[0].mxu0
    %v450 = vpop.f32.mrb[0].mxu0
    %v451 = vadd.f32 %v391, %v450
    %v452 = vpop.f32.mrb[0].mxu0
    %453 = vmatprep.mubr.bf16.mxu0 0
    %454 = vmatmul.mubr.bf16.gmra.mrb[0].mxu0 %v407
    %v455 = vpop.f32.mrb[0].mxu0
    %v456 = vadd.f32 %v391, %v455
    %v457 = vpop.f32.mrb[0].mxu0
    %v458 = vpop.f32.mrb[0].mxu0
    %v459 = vpop.f32.mrb[0].mxu0
    %460 = vdwg.mxu0
    %v464 = vunpack.c.l.b16 %v372
    %v465 = vunpack.c.l.b16 %v373
    %v466 = vunpack.c.l.b16 %v374
    %v467 = vpack.c.b16 %v465, %v464
    %v468 = vpack.c.b16 %v466, %v466
    %vm469 = vcmask 130048
    %v471 = vsel %vm469, %v467, 0
    %v474 = vsel %vm469, %v468, 0
    %476 = vmatprep.subr.bf16.mxu0 0
    %477 = vmatpush1.bf16.msra.mxu0 %v382
    %478 = vmatprep.subr.bf16.mxu0 0
    %479 = vmatpush1.bf16.msra.mxu0 0
    %480 = vmatprep.subr.bf16.mxu0 0
    %481 = vmatpush1.bf16.msra.mxu0 0
    %482 = vmatprep.subr.bf16.mxu0 0
    %483 = vmatpush1.bf16.msra.mxu0 0
    %484 = vmatprep.subr.bf16.mxu0 0
    %485 = vmatpush1.bf16.msra.mxu0 0
    %486 = vmatprep.subr.bf16.mxu0 0
    %487 = vmatpush1.bf16.msra.mxu0 0
    %488 = vmatprep.subr.bf16.mxu0 0
    %489 = vmatpush1.bf16.msra.mxu0 0
    %490 = vmatprep.subr.bf16.mxu0 0
    %491 = vmatpush1.bf16.msra.mxu0 0
    %492 = vmatprep.subr.bf16.mxu0 0
    %493 = vmatpush1.bf16.msra.mxu0 0
    %494 = vmatprep.subr.bf16.mxu0 0
    %495 = vmatpush1.bf16.msra.mxu0 0
    %496 = vmatprep.subr.bf16.mxu0 0
    %497 = vmatpush1.bf16.msra.mxu0 0
    %498 = vmatprep.subr.bf16.mxu0 0
    %499 = vmatpush1.bf16.msra.mxu0 0
    %500 = vmatprep.subr.bf16.mxu0 0
    %501 = vmatpush1.bf16.msra.mxu0 0
    %502 = vmatprep.subr.bf16.mxu0 0
    %503 = vmatpush1.bf16.msra.mxu0 0
    %504 = vmatprep.subr.bf16.mxu0 0
    %505 = vmatpush1.bf16.msra.mxu0 0
    %506 = vmatprep.subr.bf16.mxu0 0
    %507 = vmatpush1.bf16.msra.mxu0 0
    %508 = vmatprep.mubr.bf16.mxu0 0
    %509 = vmatmul.mubr.bf16.gmra.mrb[0].mxu0 %v471
    %v510 = vpop.f32.mrb[0].mxu0
    %v511 = vadd.f32 %v448, %v510
    %v512 = vpop.f32.mrb[0].mxu0
    %v513 = vpop.f32.mrb[0].mxu0
    %v514 = vadd.f32 %v451, %v513
    %v515 = vpop.f32.mrb[0].mxu0
    %516 = vmatprep.mubr.bf16.mxu0 0
    %517 = vmatmul.mubr.bf16.gmra.mrb[0].mxu0 %v474
    %v518 = vpop.f32.mrb[0].mxu0
    %v519 = vadd.f32 %v456, %v518
    %v520 = vpop.f32.mrb[0].mxu0
    %v521 = vpop.f32.mrb[0].mxu0
    %v522 = vpop.f32.mrb[0].mxu0
    %523 = vdwg.mxu0
    %v524 = vpack.c.bf16 %v514, %v511
    %v525 = vpack.c.bf16 %v519, %v519
    %v526 = vld [vmem:[%s19] sm:$0x1]
    %v527 = vld [vmem:[%s17] sm:$0xf]
    %vm528 = vcmask 64512
    %v530 = vsel %vm528, %v524, 0
    %v533 = vsel %vm528, %v525, 0
    %vm535 = vcmask 1043456
    %v537 = vsel %vm535, %v527, 0
    %539 = vmatprep.subr.bf16.mxu0 0
    %540 = vmatpush1.bf16.msra.mxu0 %v537
    %541 = vmatprep.subr.bf16.mxu0 0
    %542 = vmatpush1.bf16.msra.mxu0 0
    %543 = vmatprep.subr.bf16.mxu0 0
    %544 = vmatpush1.bf16.msra.mxu0 0
    %545 = vmatprep.subr.bf16.mxu0 0
    %546 = vmatpush1.bf16.msra.mxu0 0
    %547 = vmatprep.subr.bf16.mxu0 0
    %548 = vmatpush1.bf16.msra.mxu0 0
    %549 = vmatprep.subr.bf16.mxu0 0
    %550 = vmatpush1.bf16.msra.mxu0 0
    %551 = vmatprep.subr.bf16.mxu0 0
    %552 = vmatpush1.bf16.msra.mxu0 0
    %553 = vmatprep.subr.bf16.mxu0 0
    %554 = vmatpush1.bf16.msra.mxu0 0
    %555 = vmatprep.subr.bf16.mxu0 0
    %556 = vmatpush1.bf16.msra.mxu0 0
    %557 = vmatprep.subr.bf16.mxu0 0
    %558 = vmatpush1.bf16.msra.mxu0 0
    %559 = vmatprep.subr.bf16.mxu0 0
    %560 = vmatpush1.bf16.msra.mxu0 0
    %561 = vmatprep.subr.bf16.mxu0 0
    %562 = vmatpush1.bf16.msra.mxu0 0
    %563 = vmatprep.subr.bf16.mxu0 0
    %564 = vmatpush1.bf16.msra.mxu0 0
    %565 = vmatprep.subr.bf16.mxu0 0
    %566 = vmatpush1.bf16.msra.mxu0 0
    %567 = vmatprep.subr.bf16.mxu0 0
    %568 = vmatpush1.bf16.msra.mxu0 0
    %569 = vmatprep.subr.bf16.mxu0 0
    %570 = vmatpush1.bf16.msra.mxu0 0
    %571 = vmatprep.mubr.bf16.mxu0 0
    %572 = vmatmul.mubr.bf16.gmra.mrb[0].mxu0 %v530
    %v573 = vpop.f32.mrb[0].mxu0
    %v574 = vadd.f32 0.0, %v573
    %v575 = vpop.f32.mrb[0].mxu0
    %v576 = vpop.f32.mrb[0].mxu0
    %v577 = vadd.f32 0.0, %v576
    %v578 = vpop.f32.mrb[0].mxu0
    %579 = vmatprep.mubr.bf16.mxu0 0
    %580 = vmatmul.mubr.bf16.gmra.mrb[0].mxu0 %v533
    %v581 = vpop.f32.mrb[0].mxu0
    %v582 = vadd.f32 0.0, %v581
    %v583 = vpop.f32.mrb[0].mxu0
    %v584 = vpop.f32.mrb[0].mxu0
    %v585 = vpop.f32.mrb[0].mxu0
    %586 = vdwg.mxu0
    %s587 = scalar_lea.vmem %s17, 4
    %v588 = vld [vmem:[%s587] sm:$0xf]
    %v590 = vsel %vm535, %v588, 0
    %592 = vmatprep.subr.bf16.mxu0 0
    %593 = vmatpush1.bf16.msra.mxu0 %v590
    %594 = vmatprep.subr.bf16.mxu0 0
    %595 = vmatpush1.bf16.msra.mxu0 0
    %596 = vmatprep.subr.bf16.mxu0 0
    %597 = vmatpush1.bf16.msra.mxu0 0
    %598 = vmatprep.subr.bf16.mxu0 0
    %599 = vmatpush1.bf16.msra.mxu0 0
    %600 = vmatprep.subr.bf16.mxu0 0
    %601 = vmatpush1.bf16.msra.mxu0 0
    %602 = vmatprep.subr.bf16.mxu0 0
    %603 = vmatpush1.bf16.msra.mxu0 0
    %604 = vmatprep.subr.bf16.mxu0 0
    %605 = vmatpush1.bf16.msra.mxu0 0
    %606 = vmatprep.subr.bf16.mxu0 0
    %607 = vmatpush1.bf16.msra.mxu0 0
    %608 = vmatprep.subr.bf16.mxu0 0
    %609 = vmatpush1.bf16.msra.mxu0 0
    %610 = vmatprep.subr.bf16.mxu0 0
    %611 = vmatpush1.bf16.msra.mxu0 0
    %612 = vmatprep.subr.bf16.mxu0 0
    %613 = vmatpush1.bf16.msra.mxu0 0
    %614 = vmatprep.subr.bf16.mxu0 0
    %615 = vmatpush1.bf16.msra.mxu0 0
    %616 = vmatprep.subr.bf16.mxu0 0
    %617 = vmatpush1.bf16.msra.mxu0 0
    %618 = vmatprep.subr.bf16.mxu0 0
    %619 = vmatpush1.bf16.msra.mxu0 0
    %620 = vmatprep.subr.bf16.mxu0 0
    %621 = vmatpush1.bf16.msra.mxu0 0
    %622 = vmatprep.subr.bf16.mxu0 0
    %623 = vmatpush1.bf16.msra.mxu0 0
    %624 = vmatprep.mubr.bf16.mxu0 0
    %625 = vmatmul.mubr.bf16.gmra.mrb[0].mxu0 %v530
    %v626 = vpop.f32.mrb[0].mxu0
    %v627 = vadd.f32 0.0, %v626
    %v628 = vpop.f32.mrb[0].mxu0
    %v629 = vpop.f32.mrb[0].mxu0
    %v630 = vadd.f32 0.0, %v629
    %v631 = vpop.f32.mrb[0].mxu0
    %632 = vmatprep.mubr.bf16.mxu0 0
    %633 = vmatmul.mubr.bf16.gmra.mrb[0].mxu0 %v533
    %v634 = vpop.f32.mrb[0].mxu0
    %v635 = vadd.f32 0.0, %v634
    %v636 = vpop.f32.mrb[0].mxu0
    %v637 = vpop.f32.mrb[0].mxu0
    %v638 = vpop.f32.mrb[0].mxu0
    %639 = vdwg.mxu0
    %v640 = vpack.c.bf16 %v577, %v574
    %v641 = vpack.c.bf16 %v627, %v582
    %v642 = vpack.c.bf16 %v635, %v630
    %v644 = vlaneseq
    %v645 = vshrl.u32 %v644, 7
    %v646 = vsub.s32 0, %v645
    %v647 = vrot.slane %v526, %v646
    %v651 = vunpack.c.l.b16 %v375
    %v652 = vunpack.c.l.b16 %v376
    %v653 = vpack.c.b16 %v652, %v651
    %vm654 = vcmask 392192
    %v656 = vsel %vm654, %v653, 0
    %658 = vmatprep.subr.bf16.mxu0 0
    %659 = vmatpush1.bf16.msra.mxu0 %v640
    %660 = vmatprep.subr.bf16.mxu0 0
    %661 = vmatpush1.bf16.msra.mxu0 %v641
    %662 = vmatprep.subr.bf16.mxu0 0
    %663 = vmatpush1.bf16.msra.mxu0 %v642
    %664 = vmatprep.subr.bf16.mxu0 0
    %665 = vmatpush1.bf16.msra.mxu0 0
    %666 = vmatprep.subr.bf16.mxu0 0
    %667 = vmatpush1.bf16.msra.mxu0 0
    %668 = vmatprep.subr.bf16.mxu0 0
    %669 = vmatpush1.bf16.msra.mxu0 0
    %670 = vmatprep.subr.bf16.mxu0 0
    %671 = vmatpush1.bf16.msra.mxu0 0
    %672 = vmatprep.subr.bf16.mxu0 0
    %673 = vmatpush1.bf16.msra.mxu0 0
    %674 = vmatprep.subr.bf16.mxu0 0
    %675 = vmatpush1.bf16.msra.mxu0 0
    %676 = vmatprep.subr.bf16.mxu0 0
    %677 = vmatpush1.bf16.msra.mxu0 0
    %678 = vmatprep.subr.bf16.mxu0 0
    %679 = vmatpush1.bf16.msra.mxu0 0
    %680 = vmatprep.subr.bf16.mxu0 0
    %681 = vmatpush1.bf16.msra.mxu0 0
    %682 = vmatprep.subr.bf16.mxu0 0
    %683 = vmatpush1.bf16.msra.mxu0 0
    %684 = vmatprep.subr.bf16.mxu0 0
    %685 = vmatpush1.bf16.msra.mxu0 0
    %686 = vmatprep.subr.bf16.mxu0 0
    %687 = vmatpush1.bf16.msra.mxu0 0
    %688 = vmatprep.subr.bf16.mxu0 0
    %689 = vmatpush1.bf16.msra.mxu0 0
    %690 = vmatprep.mubr.bf16.mxu0 0
    %691 = vmatmul.mubr.bf16.gmra.mrb[0].mxu0 %v656
    %v692 = vpop.f32.mrb[0].mxu0
    %v693 = vadd.f32 %v647, %v692
    %v694 = vpop.f32.mrb[0].mxu0
    %v695 = vpop.f32.mrb[0].mxu0
    %v696 = vadd.f32 %v647, %v695
    %v697 = vpop.f32.mrb[0].mxu0
    %698 = vdwg.mxu0
    %v699 = vld [vmem:[%s21] sm:$0xf]
    %v701 = vsel %vm528, %v382, 0
    %v704 = vsel %vm535, %v699, 0
    %706 = vmatprep.subr.bf16.mxu0 0
    %707 = vmatpush1.bf16.msra.mxu0 %v704
    %708 = vmatprep.subr.bf16.mxu0 0
    %709 = vmatpush1.bf16.msra.mxu0 0
    %710 = vmatprep.subr.bf16.mxu0 0
    %711 = vmatpush1.bf16.msra.mxu0 0
    %712 = vmatprep.subr.bf16.mxu0 0
    %713 = vmatpush1.bf16.msra.mxu0 0
    %714 = vmatprep.subr.bf16.mxu0 0
    %715 = vmatpush1.bf16.msra.mxu0 0
    %716 = vmatprep.subr.bf16.mxu0 0
    %717 = vmatpush1.bf16.msra.mxu0 0
    %718 = vmatprep.subr.bf16.mxu0 0
    %719 = vmatpush1.bf16.msra.mxu0 0
    %720 = vmatprep.subr.bf16.mxu0 0
    %721 = vmatpush1.bf16.msra.mxu0 0
    %722 = vmatprep.subr.bf16.mxu0 0
    %723 = vmatpush1.bf16.msra.mxu0 0
    %724 = vmatprep.subr.bf16.mxu0 0
    %725 = vmatpush1.bf16.msra.mxu0 0
    %726 = vmatprep.subr.bf16.mxu0 0
    %727 = vmatpush1.bf16.msra.mxu0 0
    %728 = vmatprep.subr.bf16.mxu0 0
    %729 = vmatpush1.bf16.msra.mxu0 0
    %730 = vmatprep.subr.bf16.mxu0 0
    %731 = vmatpush1.bf16.msra.mxu0 0
    %732 = vmatprep.subr.bf16.mxu0 0
    %733 = vmatpush1.bf16.msra.mxu0 0
    %734 = vmatprep.subr.bf16.mxu0 0
    %735 = vmatpush1.bf16.msra.mxu0 0
    %736 = vmatprep.subr.bf16.mxu0 0
    %737 = vmatpush1.bf16.msra.mxu0 0
    %738 = vmatprep.mubr.bf16.mxu0 0
    %739 = vmatmul.mubr.bf16.gmra.mrb[0].mxu0 %v701
    %v740 = vpop.f32.mrb[0].mxu0
    %v741 = vadd.f32 0.0, %v740
    %v742 = vpop.f32.mrb[0].mxu0
    %v743 = vpop.f32.mrb[0].mxu0
    %v744 = vadd.f32 0.0, %v743
    %v745 = vpop.f32.mrb[0].mxu0
    %746 = vdwg.mxu0
    %v747 = vadd.f32 %v693, %v741
    %v748 = vadd.f32 %v696, %v744
    %v749 = vld [vmem:[%s23] sm:$0x1]
    %v751 = vlaneseq
    %v752 = vshrl.u32 %v751, 7
    %v753 = vsub.s32 0, %v752
    %v754 = vrot.slane %v749, %v753
    %v756 = vadd.f32 %v747, %v754
    %v757 = vadd.f32 %v748, %v754
    %v758 = vld [vmem:[%s25] sm:$0x1]
    %v759 = vld [vmem:[%s27] sm:$0x1]
    %v760 = vsel %vm469, %v756, 0.0
    %v761 = vsel %vm469, %v757, 0.0
    %v762 = vadd.f32 %v760, %v761
    %v763 = vrot.slane %v762, 4
    %v764 = vadd.f32 %v762, %v763
    %v765 = vrot.slane %v764, 2
    %v766 = vadd.f32 %v764, %v765
    %v767 = vrot.slane %v766, 1
    %v768 = vadd.f32 %v766, %v767
    %v769 = vrcp.pop 16.0
    %v770 = vmul.f32 %v768, %v769
    %v771 = vsub.f32 %v756, %v770
    %v772 = vsub.f32 %v757, %v770
    %v773 = vmul.f32 %v771, %v771
    %v774 = vmul.f32 %v772, %v772
    %v775 = vsel %vm469, %v773, 0.0
    %v776 = vsel %vm469, %v774, 0.0
    %v777 = vadd.f32 %v775, %v776
    %v778 = vrot.slane %v777, 4
    %v779 = vadd.f32 %v777, %v778
    %v780 = vrot.slane %v779, 2
    %v781 = vadd.f32 %v779, %v780
    %v782 = vrot.slane %v781, 1
    %v783 = vadd.f32 %v781, %v782
    %v784 = vmul.f32 %v783, %v769
    %v785 = vadd.f32 %v784, 1e-05
    %v786 = vrsqrt.pop %v785
    %v787 = vmul.f32 %v771, %v786
    %v788 = vmul.f32 %v772, %v786
    %v790 = vlaneseq
    %v791 = vshrl.u32 %v790, 7
    %v792 = vsub.s32 0, %v791
    %v793 = vrot.slane %v758, %v792
    %v795 = vmul.f32 %v787, %v793
    %v796 = vmul.f32 %v788, %v793
    %v798 = vlaneseq
    %v799 = vshrl.u32 %v798, 7
    %v800 = vsub.s32 0, %v799
    %v801 = vrot.slane %v759, %v800
    %v803 = vadd.f32 %v795, %v801
    %v804 = vadd.f32 %v796, %v801
    %v805 = vmax.f32 %v803, 0.0
    %v806 = vmax.f32 %v804, 0.0
    %v807 = vld [vmem:[%s31] sm:$0x1]
    %v808 = vld [vmem:[%s29] sm:$0xf]
    %v809 = vld [vmem:[%s29 + $0x4] sm:$0xf]
    %v810 = vld [vmem:[%s29 + $0x8] sm:$0x3]
    %v814 = vunpack.c.l.b16 %v808
    %v815 = vunpack.c.l.b16 %v809
    %v816 = vunpack.c.l.b16 %v810
    %v817 = vpack.c.b16 %v815, %v814
    %v818 = vpack.c.b16 %v816, %v816
    %v821 = vsel %vm409, %v818, 0
    %823 = vmatprep.subr.bf16.mxu0 0
    %824 = vmatpush1.bf16.msra.mxu0 %v817
    %825 = vmatprep.subr.bf16.mxu0 0
    %826 = vmatpush1.bf16.msra.mxu0 %v821
    %827 = vmatprep.subr.bf16.mxu0 0
    %828 = vmatpush1.bf16.msra.mxu0 0
    %829 = vmatprep.subr.bf16.mxu0 0
    %830 = vmatpush1.bf16.msra.mxu0 0
    %831 = vmatprep.subr.bf16.mxu0 0
    %832 = vmatpush1.bf16.msra.mxu0 0
    %833 = vmatprep.subr.bf16.mxu0 0
    %834 = vmatpush1.bf16.msra.mxu0 0
    %835 = vmatprep.subr.bf16.mxu0 0
    %836 = vmatpush1.bf16.msra.mxu0 0
    %837 = vmatprep.subr.bf16.mxu0 0
    %838 = vmatpush1.bf16.msra.mxu0 0
    %839 = vmatprep.subr.bf16.mxu0 0
    %840 = vmatpush1.bf16.msra.mxu0 0
    %841 = vmatprep.subr.bf16.mxu0 0
    %842 = vmatpush1.bf16.msra.mxu0 0
    %843 = vmatprep.subr.bf16.mxu0 0
    %844 = vmatpush1.bf16.msra.mxu0 0
    %845 = vmatprep.subr.bf16.mxu0 0
    %846 = vmatpush1.bf16.msra.mxu0 0
    %847 = vmatprep.subr.bf16.mxu0 0
    %848 = vmatpush1.bf16.msra.mxu0 0
    %849 = vmatprep.subr.bf16.mxu0 0
    %850 = vmatpush1.bf16.msra.mxu0 0
    %851 = vmatprep.subr.bf16.mxu0 0
    %852 = vmatpush1.bf16.msra.mxu0 0
    %853 = vmatprep.subr.bf16.mxu0 0
    %854 = vmatpush1.bf16.msra.mxu0 0
    %855 = vmatprep.mubr.bf16.mxu0 0
    %856 = vmatmul.mubr.bf16.gmra.mrb[0].mxu0 %v404
    %v857 = vpop.f32.mrb[0].mxu0
    %v858 = vadd.f32 0.0, %v857
    %v859 = vpop.f32.mrb[0].mxu0
    %v860 = vpop.f32.mrb[0].mxu0
    %v861 = vadd.f32 0.0, %v860
    %v862 = vpop.f32.mrb[0].mxu0
    %863 = vmatprep.mubr.bf16.mxu0 0
    %864 = vmatmul.mubr.bf16.gmra.mrb[0].mxu0 %v407
    %v865 = vpop.f32.mrb[0].mxu0
    %v866 = vadd.f32 0.0, %v865
    %v867 = vpop.f32.mrb[0].mxu0
    %v868 = vpop.f32.mrb[0].mxu0
    %v869 = vpop.f32.mrb[0].mxu0
    %870 = vdwg.mxu0
    %s871 = scalar_lea.vmem %s29, 12
    %v872 = vld [vmem:[%s871] sm:$0xf]
    %v873 = vld [vmem:[%s871 + $0x4] sm:$0xf]
    %v874 = vld [vmem:[%s871 + $0x8] sm:$0x3]
    %v878 = vunpack.c.l.b16 %v872
    %v879 = vunpack.c.l.b16 %v873
    %v880 = vunpack.c.l.b16 %v874
    %v881 = vpack.c.b16 %v879, %v878
    %v882 = vpack.c.b16 %v880, %v880
    %v885 = vsel %vm409, %v882, 0
    %887 = vmatprep.subr.bf16.mxu0 0
    %888 = vmatpush1.bf16.msra.mxu0 %v881
    %889 = vmatprep.subr.bf16.mxu0 0
    %890 = vmatpush1.bf16.msra.mxu0 %v885
    %891 = vmatprep.subr.bf16.mxu0 0
    %892 = vmatpush1.bf16.msra.mxu0 0
    %893 = vmatprep.subr.bf16.mxu0 0
    %894 = vmatpush1.bf16.msra.mxu0 0
    %895 = vmatprep.subr.bf16.mxu0 0
    %896 = vmatpush1.bf16.msra.mxu0 0
    %897 = vmatprep.subr.bf16.mxu0 0
    %898 = vmatpush1.bf16.msra.mxu0 0
    %899 = vmatprep.subr.bf16.mxu0 0
    %900 = vmatpush1.bf16.msra.mxu0 0
    %901 = vmatprep.subr.bf16.mxu0 0
    %902 = vmatpush1.bf16.msra.mxu0 0
    %903 = vmatprep.subr.bf16.mxu0 0
    %904 = vmatpush1.bf16.msra.mxu0 0
    %905 = vmatprep.subr.bf16.mxu0 0
    %906 = vmatpush1.bf16.msra.mxu0 0
    %907 = vmatprep.subr.bf16.mxu0 0
    %908 = vmatpush1.bf16.msra.mxu0 0
    %909 = vmatprep.subr.bf16.mxu0 0
    %910 = vmatpush1.bf16.msra.mxu0 0
    %911 = vmatprep.subr.bf16.mxu0 0
    %912 = vmatpush1.bf16.msra.mxu0 0
    %913 = vmatprep.subr.bf16.mxu0 0
    %914 = vmatpush1.bf16.msra.mxu0 0
    %915 = vmatprep.subr.bf16.mxu0 0
    %916 = vmatpush1.bf16.msra.mxu0 0
    %917 = vmatprep.subr.bf16.mxu0 0
    %918 = vmatpush1.bf16.msra.mxu0 0
    %919 = vmatprep.mubr.bf16.mxu0 0
    %920 = vmatmul.mubr.bf16.gmra.mrb[0].mxu0 %v404
    %v921 = vpop.f32.mrb[0].mxu0
    %v922 = vadd.f32 0.0, %v921
    %v923 = vpop.f32.mrb[0].mxu0
    %v924 = vpop.f32.mrb[0].mxu0
    %v925 = vadd.f32 0.0, %v924
    %v926 = vpop.f32.mrb[0].mxu0
    %927 = vmatprep.mubr.bf16.mxu0 0
    %928 = vmatmul.mubr.bf16.gmra.mrb[0].mxu0 %v407
    %v929 = vpop.f32.mrb[0].mxu0
    %v930 = vadd.f32 0.0, %v929
    %v931 = vpop.f32.mrb[0].mxu0
    %v932 = vpop.f32.mrb[0].mxu0
    %v933 = vpop.f32.mrb[0].mxu0
    %934 = vdwg.mxu0
    %s935 = scalar_lea.vmem %s29, 24
    %v936 = vld [vmem:[%s935] sm:$0xf]
    %v937 = vld [vmem:[%s935 + $0x4] sm:$0xf]
    %v938 = vld [vmem:[%s935 + $0x8] sm:$0x3]
    %v942 = vunpack.c.l.b16 %v936
    %v943 = vunpack.c.l.b16 %v937
    %v944 = vunpack.c.l.b16 %v938
    %v945 = vpack.c.b16 %v943, %v942
    %v946 = vpack.c.b16 %v944, %v944
    %v949 = vsel %vm409, %v946, 0
    %951 = vmatprep.subr.bf16.mxu0 0
    %952 = vmatpush1.bf16.msra.mxu0 %v945
    %953 = vmatprep.subr.bf16.mxu0 0
    %954 = vmatpush1.bf16.msra.mxu0 %v949
    %955 = vmatprep.subr.bf16.mxu0 0
    %956 = vmatpush1.bf16.msra.mxu0 0
    %957 = vmatprep.subr.bf16.mxu0 0
    %958 = vmatpush1.bf16.msra.mxu0 0
    %959 = vmatprep.subr.bf16.mxu0 0
    %960 = vmatpush1.bf16.msra.mxu0 0
    %961 = vmatprep.subr.bf16.mxu0 0
    %962 = vmatpush1.bf16.msra.mxu0 0
    %963 = vmatprep.subr.bf16.mxu0 0
    %964 = vmatpush1.bf16.msra.mxu0 0
    %965 = vmatprep.subr.bf16.mxu0 0
    %966 = vmatpush1.bf16.msra.mxu0 0
    %967 = vmatprep.subr.bf16.mxu0 0
    %968 = vmatpush1.bf16.msra.mxu0 0
    %969 = vmatprep.subr.bf16.mxu0 0
    %970 = vmatpush1.bf16.msra.mxu0 0
    %971 = vmatprep.subr.bf16.mxu0 0
    %972 = vmatpush1.bf16.msra.mxu0 0
    %973 = vmatprep.subr.bf16.mxu0 0
    %974 = vmatpush1.bf16.msra.mxu0 0
    %975 = vmatprep.subr.bf16.mxu0 0
    %976 = vmatpush1.bf16.msra.mxu0 0
    %977 = vmatprep.subr.bf16.mxu0 0
    %978 = vmatpush1.bf16.msra.mxu0 0
    %979 = vmatprep.subr.bf16.mxu0 0
    %980 = vmatpush1.bf16.msra.mxu0 0
    %981 = vmatprep.subr.bf16.mxu0 0
    %982 = vmatpush1.bf16.msra.mxu0 0
    %983 = vmatprep.mubr.bf16.mxu0 0
    %984 = vmatmul.mubr.bf16.gmra.mrb[0].mxu0 %v404
    %v985 = vpop.f32.mrb[0].mxu0
    %v986 = vadd.f32 0.0, %v985
    %v987 = vpop.f32.mrb[0].mxu0
    %v988 = vpop.f32.mrb[0].mxu0
    %v989 = vadd.f32 0.0, %v988
    %v990 = vpop.f32.mrb[0].mxu0
    %991 = vmatprep.mubr.bf16.mxu0 0
    %992 = vmatmul.mubr.bf16.gmra.mrb[0].mxu0 %v407
    %v993 = vpop.f32.mrb[0].mxu0
    %v994 = vadd.f32 0.0, %v993
    %v995 = vpop.f32.mrb[0].mxu0
    %v996 = vpop.f32.mrb[0].mxu0
    %v997 = vpop.f32.mrb[0].mxu0
    %998 = vdwg.mxu0
    %s999 = scalar_lea.vmem %s29, 36
    %v1000 = vld [vmem:[%s999] sm:$0xf]
    %v1001 = vld [vmem:[%s999 + $0x4] sm:$0xf]
    %v1002 = vld [vmem:[%s999 + $0x8] sm:$0x3]
    %v1006 = vunpack.c.l.b16 %v1000
    %v1007 = vunpack.c.l.b16 %v1001
    %v1008 = vunpack.c.l.b16 %v1002
    %v1009 = vpack.c.b16 %v1007, %v1006
    %v1010 = vpack.c.b16 %v1008, %v1008
    %v1013 = vsel %vm409, %v1010, 0
    %1015 = vmatprep.subr.bf16.mxu0 0
    %1016 = vmatpush1.bf16.msra.mxu0 %v1009
    %1017 = vmatprep.subr.bf16.mxu0 0
    %1018 = vmatpush1.bf16.msra.mxu0 %v1013
    %1019 = vmatprep.subr.bf16.mxu0 0
    %1020 = vmatpush1.bf16.msra.mxu0 0
    %1021 = vmatprep.subr.bf16.mxu0 0
    %1022 = vmatpush1.bf16.msra.mxu0 0
    %1023 = vmatprep.subr.bf16.mxu0 0
    %1024 = vmatpush1.bf16.msra.mxu0 0
    %1025 = vmatprep.subr.bf16.mxu0 0
    %1026 = vmatpush1.bf16.msra.mxu0 0
    %1027 = vmatprep.subr.bf16.mxu0 0
    %1028 = vmatpush1.bf16.msra.mxu0 0
    %1029 = vmatprep.subr.bf16.mxu0 0
    %1030 = vmatpush1.bf16.msra.mxu0 0
    %1031 = vmatprep.subr.bf16.mxu0 0
    %1032 = vmatpush1.bf16.msra.mxu0 0
    %1033 = vmatprep.subr.bf16.mxu0 0
    %1034 = vmatpush1.bf16.msra.mxu0 0
    %1035 = vmatprep.subr.bf16.mxu0 0
    %1036 = vmatpush1.bf16.msra.mxu0 0
    %1037 = vmatprep.subr.bf16.mxu0 0
    %1038 = vmatpush1.bf16.msra.mxu0 0
    %1039 = vmatprep.subr.bf16.mxu0 0
    %1040 = vmatpush1.bf16.msra.mxu0 0
    %1041 = vmatprep.subr.bf16.mxu0 0
    %1042 = vmatpush1.bf16.msra.mxu0 0
    %1043 = vmatprep.subr.bf16.mxu0 0
    %1044 = vmatpush1.bf16.msra.mxu0 0
    %1045 = vmatprep.subr.bf16.mxu0 0
    %1046 = vmatpush1.bf16.msra.mxu0 0
    %1047 = vmatprep.mubr.bf16.mxu0 0
    %1048 = vmatmul.mubr.bf16.gmra.mrb[0].mxu0 %v404
    %v1049 = vpop.f32.mrb[0].mxu0
    %v1050 = vadd.f32 0.0, %v1049
    %v1051 = vpop.f32.mrb[0].mxu0
    %v1052 = vpop.f32.mrb[0].mxu0
    %v1053 = vadd.f32 0.0, %v1052
    %v1054 = vpop.f32.mrb[0].mxu0
    %1055 = vmatprep.mubr.bf16.mxu0 0
    %1056 = vmatmul.mubr.bf16.gmra.mrb[0].mxu0 %v407
    %v1057 = vpop.f32.mrb[0].mxu0
    %v1058 = vadd.f32 0.0, %v1057
    %v1059 = vpop.f32.mrb[0].mxu0
    %v1060 = vpop.f32.mrb[0].mxu0
    %v1061 = vpop.f32.mrb[0].mxu0
    %1062 = vdwg.mxu0
    %v1063 = vpack.c.bf16 %v861, %v858
    %v1064 = vpack.c.bf16 %v922, %v866
    %v1065 = vpack.c.bf16 %v930, %v925
    %v1066 = vpack.c.bf16 %v989, %v986
    %v1067 = vpack.c.bf16 %v1050, %v994
    %v1068 = vpack.c.bf16 %v1058, %v1053
    %v1070 = vlaneseq
    %v1071 = vshrl.u32 %v1070, 7
    %v1072 = vsub.s32 0, %v1071
    %v1073 = vrot.slane %v807, %v1072
    %v1078 = vunpack.c.l.b16 %v377
    %v1079 = vunpack.c.l.b16 %v378
    %v1080 = vunpack.c.l.b16 %v379
    %v1081 = vpack.c.b16 %v1079, %v1078
    %v1082 = vpack.c.b16 %v1080, %v1080
    %vm1083 = vcmask 785408
    %v1085 = vsel %vm1083, %v1081, 0
    %v1088 = vsel %vm1083, %v1082, 0
    %1090 = vmatprep.subr.bf16.mxu0 0
    %1091 = vmatpush1.bf16.msra.mxu0 %v1063
    %1092 = vmatprep.subr.bf16.mxu0 0
    %1093 = vmatpush1.bf16.msra.mxu0 %v1064
    %1094 = vmatprep.subr.bf16.mxu0 0
    %1095 = vmatpush1.bf16.msra.mxu0 %v1065
    %1096 = vmatprep.subr.bf16.mxu0 0
    %1097 = vmatpush1.bf16.msra.mxu0 %v1066
    %1098 = vmatprep.subr.bf16.mxu0 0
    %1099 = vmatpush1.bf16.msra.mxu0 %v1067
    %1100 = vmatprep.subr.bf16.mxu0 0
    %1101 = vmatpush1.bf16.msra.mxu0 %v1068
    %1102 = vmatprep.subr.bf16.mxu0 0
    %1103 = vmatpush1.bf16.msra.mxu0 0
    %1104 = vmatprep.subr.bf16.mxu0 0
    %1105 = vmatpush1.bf16.msra.mxu0 0
    %1106 = vmatprep.subr.bf16.mxu0 0
    %1107 = vmatpush1.bf16.msra.mxu0 0
    %1108 = vmatprep.subr.bf16.mxu0 0
    %1109 = vmatpush1.bf16.msra.mxu0 0
    %1110 = vmatprep.subr.bf16.mxu0 0
    %1111 = vmatpush1.bf16.msra.mxu0 0
    %1112 = vmatprep.subr.bf16.mxu0 0
    %1113 = vmatpush1.bf16.msra.mxu0 0
    %1114 = vmatprep.subr.bf16.mxu0 0
    %1115 = vmatpush1.bf16.msra.mxu0 0
    %1116 = vmatprep.subr.bf16.mxu0 0
    %1117 = vmatpush1.bf16.msra.mxu0 0
    %1118 = vmatprep.subr.bf16.mxu0 0
    %1119 = vmatpush1.bf16.msra.mxu0 0
    %1120 = vmatprep.subr.bf16.mxu0 0
    %1121 = vmatpush1.bf16.msra.mxu0 0
    %1122 = vmatprep.mubr.bf16.mxu0 0
    %1123 = vmatmul.mubr.bf16.gmra.mrb[0].mxu0 %v1085
    %v1124 = vpop.f32.mrb[0].mxu0
    %v1125 = vadd.f32 %v1073, %v1124
    %v1126 = vpop.f32.mrb[0].mxu0
    %v1127 = vpop.f32.mrb[0].mxu0
    %v1128 = vadd.f32 %v1073, %v1127
    %v1129 = vpop.f32.mrb[0].mxu0
    %1130 = vmatprep.mubr.bf16.mxu0 0
    %1131 = vmatmul.mubr.bf16.gmra.mrb[0].mxu0 %v1088
    %v1132 = vpop.f32.mrb[0].mxu0
    %v1133 = vadd.f32 %v1073, %v1132
    %v1134 = vpop.f32.mrb[0].mxu0
    %v1135 = vpop.f32.mrb[0].mxu0
    %v1136 = vpop.f32.mrb[0].mxu0
    %1137 = vdwg.mxu0
    %v1138 = vld [vmem:[%s33] sm:$0xf]
    %v1139 = vld [vmem:[%s33 + $0x4] sm:$0xf]
    %v1140 = vld [vmem:[%s33 + $0x8] sm:$0x3]
    %v1144 = vunpack.c.l.b16 %v1138
    %v1145 = vunpack.c.l.b16 %v1139
    %v1146 = vunpack.c.l.b16 %v1140
    %v1147 = vpack.c.b16 %v1145, %v1144
    %v1148 = vpack.c.b16 %v1146, %v1146
    %v1151 = vsel %vm409, %v1148, 0
    %1153 = vmatprep.subr.bf16.mxu0 0
    %1154 = vmatpush1.bf16.msra.mxu0 %v1147
    %1155 = vmatprep.subr.bf16.mxu0 0
    %1156 = vmatpush1.bf16.msra.mxu0 %v1151
    %1157 = vmatprep.subr.bf16.mxu0 0
    %1158 = vmatpush1.bf16.msra.mxu0 0
    %1159 = vmatprep.subr.bf16.mxu0 0
    %1160 = vmatpush1.bf16.msra.mxu0 0
    %1161 = vmatprep.subr.bf16.mxu0 0
    %1162 = vmatpush1.bf16.msra.mxu0 0
    %1163 = vmatprep.subr.bf16.mxu0 0
    %1164 = vmatpush1.bf16.msra.mxu0 0
    %1165 = vmatprep.subr.bf16.mxu0 0
    %1166 = vmatpush1.bf16.msra.mxu0 0
    %1167 = vmatprep.subr.bf16.mxu0 0
    %1168 = vmatpush1.bf16.msra.mxu0 0
    %1169 = vmatprep.subr.bf16.mxu0 0
    %1170 = vmatpush1.bf16.msra.mxu0 0
    %1171 = vmatprep.subr.bf16.mxu0 0
    %1172 = vmatpush1.bf16.msra.mxu0 0
    %1173 = vmatprep.subr.bf16.mxu0 0
    %1174 = vmatpush1.bf16.msra.mxu0 0
    %1175 = vmatprep.subr.bf16.mxu0 0
    %1176 = vmatpush1.bf16.msra.mxu0 0
    %1177 = vmatprep.subr.bf16.mxu0 0
    %1178 = vmatpush1.bf16.msra.mxu0 0
    %1179 = vmatprep.subr.bf16.mxu0 0
    %1180 = vmatpush1.bf16.msra.mxu0 0
    %1181 = vmatprep.subr.bf16.mxu0 0
    %1182 = vmatpush1.bf16.msra.mxu0 0
    %1183 = vmatprep.subr.bf16.mxu0 0
    %1184 = vmatpush1.bf16.msra.mxu0 0
    %1185 = vmatprep.mubr.bf16.mxu0 0
    %1186 = vmatmul.mubr.bf16.gmra.mrb[0].mxu0 %v404
    %v1187 = vpop.f32.mrb[0].mxu0
    %v1188 = vadd.f32 0.0, %v1187
    %v1189 = vpop.f32.mrb[0].mxu0
    %v1190 = vpop.f32.mrb[0].mxu0
    %v1191 = vadd.f32 0.0, %v1190
    %v1192 = vpop.f32.mrb[0].mxu0
    %1193 = vmatprep.mubr.bf16.mxu0 0
    %1194 = vmatmul.mubr.bf16.gmra.mrb[0].mxu0 %v407
    %v1195 = vpop.f32.mrb[0].mxu0
    %v1196 = vadd.f32 0.0, %v1195
    %v1197 = vpop.f32.mrb[0].mxu0
    %v1198 = vpop.f32.mrb[0].mxu0
    %v1199 = vpop.f32.mrb[0].mxu0
    %1200 = vdwg.mxu0
    %v1201 = vadd.f32 %v1125, %v1188
    %v1202 = vadd.f32 %v1128, %v1191
    %v1203 = vadd.f32 %v1133, %v1196
    %v1204 = vld [vmem:[%s35] sm:$0x1]
    %v1206 = vlaneseq
    %v1207 = vshrl.u32 %v1206, 7
    %v1208 = vsub.s32 0, %v1207
    %v1209 = vrot.slane %v1204, %v1208
    %v1211 = vadd.f32 %v1201, %v1209
    %v1212 = vadd.f32 %v1202, %v1209
    %v1213 = vadd.f32 %v1203, %v1209
    %v1214 = vld [vmem:[%s37] sm:$0x1]
    %v1215 = vld [vmem:[%s39] sm:$0x1]
    %v1216 = vsel %vm528, %v1211, 0.0
    %v1217 = vsel %vm528, %v1212, 0.0
    %v1218 = vadd.f32 %v1216, %v1217
    %v1219 = vsel %vm528, %v1213, 0.0
    %v1220 = vadd.f32 %v1218, %v1219
    %v1221 = vrot.slane %v1220, 4
    %v1222 = vadd.f32 %v1220, %v1221
    %v1223 = vrot.slane %v1222, 2
    %v1224 = vadd.f32 %v1222, %v1223
    %v1225 = vrot.slane %v1224, 1
    %v1226 = vadd.f32 %v1224, %v1225
    %v1227 = vrcp.pop 24.0
    %v1228 = vmul.f32 %v1226, %v1227
    %v1229 = vsub.f32 %v1211, %v1228
    %v1230 = vsub.f32 %v1212, %v1228
    %v1231 = vsub.f32 %v1213, %v1228
    %v1232 = vmul.f32 %v1229, %v1229
    %v1233 = vmul.f32 %v1230, %v1230
    %v1234 = vmul.f32 %v1231, %v1231
    %v1235 = vsel %vm528, %v1232, 0.0
    %v1236 = vsel %vm528, %v1233, 0.0
    %v1237 = vadd.f32 %v1235, %v1236
    %v1238 = vsel %vm528, %v1234, 0.0
    %v1239 = vadd.f32 %v1237, %v1238
    %v1240 = vrot.slane %v1239, 4
    %v1241 = vadd.f32 %v1239, %v1240
    %v1242 = vrot.slane %v1241, 2
    %v1243 = vadd.f32 %v1241, %v1242
    %v1244 = vrot.slane %v1243, 1
    %v1245 = vadd.f32 %v1243, %v1244
    %v1246 = vmul.f32 %v1245, %v1227
    %v1247 = vadd.f32 %v1246, 1e-05
    %v1248 = vrsqrt.pop %v1247
    %v1249 = vmul.f32 %v1229, %v1248
    %v1250 = vmul.f32 %v1230, %v1248
    %v1251 = vmul.f32 %v1231, %v1248
    %v1253 = vlaneseq
    %v1254 = vshrl.u32 %v1253, 7
    %v1255 = vsub.s32 0, %v1254
    %v1256 = vrot.slane %v1214, %v1255
    %v1258 = vmul.f32 %v1249, %v1256
    %v1259 = vmul.f32 %v1250, %v1256
    %v1260 = vmul.f32 %v1251, %v1256
    %v1262 = vlaneseq
    %v1263 = vshrl.u32 %v1262, 7
    %v1264 = vsub.s32 0, %v1263
    %v1265 = vrot.slane %v1215, %v1264
    %v1267 = vadd.f32 %v1258, %v1265
    %v1268 = vadd.f32 %v1259, %v1265
    %v1269 = vadd.f32 %v1260, %v1265
    %v1270 = vmax.f32 %v1267, 0.0
    %v1271 = vmax.f32 %v1268, 0.0
    %v1272 = vmax.f32 %v1269, 0.0
    %v1273 = vpack.c.bf16 %v1271, %v1270
    %v1274 = vpack.c.bf16 %v1272, %v1272
    %v1276 = vsel %vm528, %v1273, 0
    %v1279 = vsel %vm528, %v1274, 0
    %1281 = vmatprep.subr.bf16.mxu0 0
    %1282 = vmatpush1.bf16.msra.mxu0 %v537
    %1283 = vmatprep.subr.bf16.mxu0 0
    %1284 = vmatpush1.bf16.msra.mxu0 0
    %1285 = vmatprep.subr.bf16.mxu0 0
    %1286 = vmatpush1.bf16.msra.mxu0 0
    %1287 = vmatprep.subr.bf16.mxu0 0
    %1288 = vmatpush1.bf16.msra.mxu0 0
    %1289 = vmatprep.subr.bf16.mxu0 0
    %1290 = vmatpush1.bf16.msra.mxu0 0
    %1291 = vmatprep.subr.bf16.mxu0 0
    %1292 = vmatpush1.bf16.msra.mxu0 0
    %1293 = vmatprep.subr.bf16.mxu0 0
    %1294 = vmatpush1.bf16.msra.mxu0 0
    %1295 = vmatprep.subr.bf16.mxu0 0
    %1296 = vmatpush1.bf16.msra.mxu0 0
    %1297 = vmatprep.subr.bf16.mxu0 0
    %1298 = vmatpush1.bf16.msra.mxu0 0
    %1299 = vmatprep.subr.bf16.mxu0 0
    %1300 = vmatpush1.bf16.msra.mxu0 0
    %1301 = vmatprep.subr.bf16.mxu0 0
    %1302 = vmatpush1.bf16.msra.mxu0 0
    %1303 = vmatprep.subr.bf16.mxu0 0
    %1304 = vmatpush1.bf16.msra.mxu0 0
    %1305 = vmatprep.subr.bf16.mxu0 0
    %1306 = vmatpush1.bf16.msra.mxu0 0
    %1307 = vmatprep.subr.bf16.mxu0 0
    %1308 = vmatpush1.bf16.msra.mxu0 0
    %1309 = vmatprep.subr.bf16.mxu0 0
    %1310 = vmatpush1.bf16.msra.mxu0 0
    %1311 = vmatprep.subr.bf16.mxu0 0
    %1312 = vmatpush1.bf16.msra.mxu0 0
    %1313 = vmatprep.mubr.bf16.mxu0 0
    %1314 = vmatmul.mubr.bf16.gmra.mrb[0].mxu0 %v1276
    %v1315 = vpop.f32.mrb[0].mxu0
    %v1316 = vadd.f32 0.0, %v1315
    %v1317 = vpop.f32.mrb[0].mxu0
    %v1318 = vpop.f32.mrb[0].mxu0
    %v1319 = vadd.f32 0.0, %v1318
    %v1320 = vpop.f32.mrb[0].mxu0
    %1321 = vmatprep.mubr.bf16.mxu0 0
    %1322 = vmatmul.mubr.bf16.gmra.mrb[0].mxu0 %v1279
    %v1323 = vpop.f32.mrb[0].mxu0
    %v1324 = vadd.f32 0.0, %v1323
    %v1325 = vpop.f32.mrb[0].mxu0
    %v1326 = vpop.f32.mrb[0].mxu0
    %v1327 = vpop.f32.mrb[0].mxu0
    %1328 = vdwg.mxu0
    %1329 = vmatprep.subr.bf16.mxu0 0
    %1330 = vmatpush1.bf16.msra.mxu0 %v590
    %1331 = vmatprep.subr.bf16.mxu0 0
    %1332 = vmatpush1.bf16.msra.mxu0 0
    %1333 = vmatprep.subr.bf16.mxu0 0
    %1334 = vmatpush1.bf16.msra.mxu0 0
    %1335 = vmatprep.subr.bf16.mxu0 0
    %1336 = vmatpush1.bf16.msra.mxu0 0
    %1337 = vmatprep.subr.bf16.mxu0 0
    %1338 = vmatpush1.bf16.msra.mxu0 0
    %1339 = vmatprep.subr.bf16.mxu0 0
    %1340 = vmatpush1.bf16.msra.mxu0 0
    %1341 = vmatprep.subr.bf16.mxu0 0
    %1342 = vmatpush1.bf16.msra.mxu0 0
    %1343 = vmatprep.subr.bf16.mxu0 0
    %1344 = vmatpush1.bf16.msra.mxu0 0
    %1345 = vmatprep.subr.bf16.mxu0 0
    %1346 = vmatpush1.bf16.msra.mxu0 0
    %1347 = vmatprep.subr.bf16.mxu0 0
    %1348 = vmatpush1.bf16.msra.mxu0 0
    %1349 = vmatprep.subr.bf16.mxu0 0
    %1350 = vmatpush1.bf16.msra.mxu0 0
    %1351 = vmatprep.subr.bf16.mxu0 0
    %1352 = vmatpush1.bf16.msra.mxu0 0
    %1353 = vmatprep.subr.bf16.mxu0 0
    %1354 = vmatpush1.bf16.msra.mxu0 0
    %1355 = vmatprep.subr.bf16.mxu0 0
    %1356 = vmatpush1.bf16.msra.mxu0 0
    %1357 = vmatprep.subr.bf16.mxu0 0
    %1358 = vmatpush1.bf16.msra.mxu0 0
    %1359 = vmatprep.subr.bf16.mxu0 0
    %1360 = vmatpush1.bf16.msra.mxu0 0
    %1361 = vmatprep.mubr.bf16.mxu0 0
    %1362 = vmatmul.mubr.bf16.gmra.mrb[0].mxu0 %v1276
    %v1363 = vpop.f32.mrb[0].mxu0
    %v1364 = vadd.f32 0.0, %v1363
    %v1365 = vpop.f32.mrb[0].mxu0
    %v1366 = vpop.f32.mrb[0].mxu0
    %v1367 = vadd.f32 0.0, %v1366
    %v1368 = vpop.f32.mrb[0].mxu0
    %1369 = vmatprep.mubr.bf16.mxu0 0
    %1370 = vmatmul.mubr.bf16.gmra.mrb[0].mxu0 %v1279
    %v1371 = vpop.f32.mrb[0].mxu0
    %v1372 = vadd.f32 0.0, %v1371
    %v1373 = vpop.f32.mrb[0].mxu0
    %v1374 = vpop.f32.mrb[0].mxu0
    %v1375 = vpop.f32.mrb[0].mxu0
    %1376 = vdwg.mxu0
    %v1377 = vpack.c.bf16 %v1319, %v1316
    %v1378 = vpack.c.bf16 %v1364, %v1324
    %v1379 = vpack.c.bf16 %v1372, %v1367
    %1380 = vmatprep.subr.bf16.mxu0 0
    %1381 = vmatpush1.bf16.msra.mxu0 %v1377
    %1382 = vmatprep.subr.bf16.mxu0 0
    %1383 = vmatpush1.bf16.msra.mxu0 %v1378
    %1384 = vmatprep.subr.bf16.mxu0 0
    %1385 = vmatpush1.bf16.msra.mxu0 %v1379
    %1386 = vmatprep.subr.bf16.mxu0 0
    %1387 = vmatpush1.bf16.msra.mxu0 0
    %1388 = vmatprep.subr.bf16.mxu0 0
    %1389 = vmatpush1.bf16.msra.mxu0 0
    %1390 = vmatprep.subr.bf16.mxu0 0
    %1391 = vmatpush1.bf16.msra.mxu0 0
    %1392 = vmatprep.subr.bf16.mxu0 0
    %1393 = vmatpush1.bf16.msra.mxu0 0
    %1394 = vmatprep.subr.bf16.mxu0 0
    %1395 = vmatpush1.bf16.msra.mxu0 0
    %1396 = vmatprep.subr.bf16.mxu0 0
    %1397 = vmatpush1.bf16.msra.mxu0 0
    %1398 = vmatprep.subr.bf16.mxu0 0
    %1399 = vmatpush1.bf16.msra.mxu0 0
    %1400 = vmatprep.subr.bf16.mxu0 0
    %1401 = vmatpush1.bf16.msra.mxu0 0
    %1402 = vmatprep.subr.bf16.mxu0 0
    %1403 = vmatpush1.bf16.msra.mxu0 0
    %1404 = vmatprep.subr.bf16.mxu0 0
    %1405 = vmatpush1.bf16.msra.mxu0 0
    %1406 = vmatprep.subr.bf16.mxu0 0
    %1407 = vmatpush1.bf16.msra.mxu0 0
    %1408 = vmatprep.subr.bf16.mxu0 0
    %1409 = vmatpush1.bf16.msra.mxu0 0
    %1410 = vmatprep.subr.bf16.mxu0 0
    %1411 = vmatpush1.bf16.msra.mxu0 0
    %1412 = vmatprep.mubr.bf16.mxu0 0
    %1413 = vmatmul.mubr.bf16.gmra.mrb[0].mxu0 %v656
    %v1414 = vpop.f32.mrb[0].mxu0
    %v1415 = vadd.f32 %v647, %v1414
    %v1416 = vpop.f32.mrb[0].mxu0
    %v1417 = vpop.f32.mrb[0].mxu0
    %v1418 = vadd.f32 %v647, %v1417
    %v1419 = vpop.f32.mrb[0].mxu0
    %1420 = vdwg.mxu0
    %v1421 = vmax.f32 %v1415, 0.0
    %v1422 = vmax.f32 %v1418, 0.0
    %v1423 = vadd.f32 %v805, %v1421
    %v1424 = vadd.f32 %v806, %v1422
    %v1425 = vld [vmem:[%s41] sm:$0x1]
    %v1426 = vld [vmem:[%s43] sm:$0x1]
    %v1427 = vsel %vm469, %v1423, 0.0
    %v1428 = vsel %vm469, %v1424, 0.0
    %v1429 = vadd.f32 %v1427, %v1428
    %v1430 = vrot.slane %v1429, 4
    %v1431 = vadd.f32 %v1429, %v1430
    %v1432 = vrot.slane %v1431, 2
    %v1433 = vadd.f32 %v1431, %v1432
    %v1434 = vrot.slane %v1433, 1
    %v1435 = vadd.f32 %v1433, %v1434
    %v1436 = vmul.f32 %v1435, %v769
    %v1437 = vsub.f32 %v1423, %v1436
    %v1438 = vsub.f32 %v1424, %v1436
    %v1439 = vmul.f32 %v1437, %v1437
    %v1440 = vmul.f32 %v1438, %v1438
    %v1441 = vsel %vm469, %v1439, 0.0
    %v1442 = vsel %vm469, %v1440, 0.0
    %v1443 = vadd.f32 %v1441, %v1442
    %v1444 = vrot.slane %v1443, 4
    %v1445 = vadd.f32 %v1443, %v1444
    %v1446 = vrot.slane %v1445, 2
    %v1447 = vadd.f32 %v1445, %v1446
    %v1448 = vrot.slane %v1447, 1
    %v1449 = vadd.f32 %v1447, %v1448
    %v1450 = vmul.f32 %v1449, %v769
    %v1451 = vadd.f32 %v1450, 1e-05
    %v1452 = vrsqrt.pop %v1451
    %v1453 = vmul.f32 %v1437, %v1452
    %v1454 = vmul.f32 %v1438, %v1452
    %v1456 = vlaneseq
    %v1457 = vshrl.u32 %v1456, 7
    %v1458 = vsub.s32 0, %v1457
    %v1459 = vrot.slane %v1425, %v1458
    %v1461 = vmul.f32 %v1453, %v1459
    %v1462 = vmul.f32 %v1454, %v1459
    %v1464 = vlaneseq
    %v1465 = vshrl.u32 %v1464, 7
    %v1466 = vsub.s32 0, %v1465
    %v1467 = vrot.slane %v1426, %v1466
    %v1469 = vadd.f32 %v1461, %v1467
    %v1470 = vadd.f32 %v1462, %v1467
    %v1471 = vpack.c.bf16 %v1470, %v1469
    %v1472 = vld [vmem:[%s45] sm:$0xf]
    %v1473 = vld [vmem:[%s45 + $0x4] sm:$0xf]
    %v1474 = vld [vmem:[%s45 + $0x8] sm:$0x3]
    %v1475 = vld [vmem:[%s47] sm:$0x1]
    %v1477 = vlaneseq
    %v1478 = vshrl.u32 %v1477, 7
    %v1479 = vsub.s32 0, %v1478
    %v1480 = vrot.slane %v1475, %v1479
    %v1485 = vunpack.c.l.b16 %v1472
    %v1486 = vunpack.c.l.b16 %v1473
    %v1487 = vunpack.c.l.b16 %v1474
    %v1488 = vpack.c.b16 %v1486, %v1485
    %v1489 = vpack.c.b16 %v1487, %v1487
    %v1492 = vsel %vm409, %v1489, 0
    %1494 = vmatprep.subr.bf16.mxu0 0
    %1495 = vmatpush1.bf16.msra.mxu0 %v1488
    %1496 = vmatprep.subr.bf16.mxu0 0
    %1497 = vmatpush1.bf16.msra.mxu0 %v1492
    %1498 = vmatprep.subr.bf16.mxu0 0
    %1499 = vmatpush1.bf16.msra.mxu0 0
    %1500 = vmatprep.subr.bf16.mxu0 0
    %1501 = vmatpush1.bf16.msra.mxu0 0
    %1502 = vmatprep.subr.bf16.mxu0 0
    %1503 = vmatpush1.bf16.msra.mxu0 0
    %1504 = vmatprep.subr.bf16.mxu0 0
    %1505 = vmatpush1.bf16.msra.mxu0 0
    %1506 = vmatprep.subr.bf16.mxu0 0
    %1507 = vmatpush1.bf16.msra.mxu0 0
    %1508 = vmatprep.subr.bf16.mxu0 0
    %1509 = vmatpush1.bf16.msra.mxu0 0
    %1510 = vmatprep.subr.bf16.mxu0 0
    %1511 = vmatpush1.bf16.msra.mxu0 0
    %1512 = vmatprep.subr.bf16.mxu0 0
    %1513 = vmatpush1.bf16.msra.mxu0 0
    %1514 = vmatprep.subr.bf16.mxu0 0
    %1515 = vmatpush1.bf16.msra.mxu0 0
    %1516 = vmatprep.subr.bf16.mxu0 0
    %1517 = vmatpush1.bf16.msra.mxu0 0
    %1518 = vmatprep.subr.bf16.mxu0 0
    %1519 = vmatpush1.bf16.msra.mxu0 0
    %1520 = vmatprep.subr.bf16.mxu0 0
    %1521 = vmatpush1.bf16.msra.mxu0 0
    %1522 = vmatprep.subr.bf16.mxu0 0
    %1523 = vmatpush1.bf16.msra.mxu0 0
    %1524 = vmatprep.subr.bf16.mxu0 0
    %1525 = vmatpush1.bf16.msra.mxu0 0
    %1526 = vmatprep.mubr.bf16.mxu0 0
    %1527 = vmatmul.mubr.bf16.gmra.mrb[0].mxu0 %v404
    %v1528 = vpop.f32.mrb[0].mxu0
    %v1529 = vadd.f32 %v1480, %v1528
    %v1530 = vpop.f32.mrb[0].mxu0
    %v1531 = vpop.f32.mrb[0].mxu0
    %v1532 = vadd.f32 %v1480, %v1531
    %v1533 = vpop.f32.mrb[0].mxu0
    %1534 = vmatprep.mubr.bf16.mxu0 0
    %1535 = vmatmul.mubr.bf16.gmra.mrb[0].mxu0 %v407
    %v1536 = vpop.f32.mrb[0].mxu0
    %v1537 = vadd.f32 %v1480, %v1536
    %v1538 = vpop.f32.mrb[0].mxu0
    %v1539 = vpop.f32.mrb[0].mxu0
    %v1540 = vpop.f32.mrb[0].mxu0
    %1541 = vdwg.mxu0
    %1542 = vmatprep.subr.bf16.mxu0 0
    %1543 = vmatpush1.bf16.msra.mxu0 %v1471
    %1544 = vmatprep.subr.bf16.mxu0 0
    %1545 = vmatpush1.bf16.msra.mxu0 0
    %1546 = vmatprep.subr.bf16.mxu0 0
    %1547 = vmatpush1.bf16.msra.mxu0 0
    %1548 = vmatprep.subr.bf16.mxu0 0
    %1549 = vmatpush1.bf16.msra.mxu0 0
    %1550 = vmatprep.subr.bf16.mxu0 0
    %1551 = vmatpush1.bf16.msra.mxu0 0
    %1552 = vmatprep.subr.bf16.mxu0 0
    %1553 = vmatpush1.bf16.msra.mxu0 0
    %1554 = vmatprep.subr.bf16.mxu0 0
    %1555 = vmatpush1.bf16.msra.mxu0 0
    %1556 = vmatprep.subr.bf16.mxu0 0
    %1557 = vmatpush1.bf16.msra.mxu0 0
    %1558 = vmatprep.subr.bf16.mxu0 0
    %1559 = vmatpush1.bf16.msra.mxu0 0
    %1560 = vmatprep.subr.bf16.mxu0 0
    %1561 = vmatpush1.bf16.msra.mxu0 0
    %1562 = vmatprep.subr.bf16.mxu0 0
    %1563 = vmatpush1.bf16.msra.mxu0 0
    %1564 = vmatprep.subr.bf16.mxu0 0
    %1565 = vmatpush1.bf16.msra.mxu0 0
    %1566 = vmatprep.subr.bf16.mxu0 0
    %1567 = vmatpush1.bf16.msra.mxu0 0
    %1568 = vmatprep.subr.bf16.mxu0 0
    %1569 = vmatpush1.bf16.msra.mxu0 0
    %1570 = vmatprep.subr.bf16.mxu0 0
    %1571 = vmatpush1.bf16.msra.mxu0 0
    %1572 = vmatprep.subr.bf16.mxu0 0
    %1573 = vmatpush1.bf16.msra.mxu0 0
    %1574 = vmatprep.mubr.bf16.mxu0 0
    %1575 = vmatmul.mubr.bf16.gmra.mrb[0].mxu0 %v471
    %v1576 = vpop.f32.mrb[0].mxu0
    %v1577 = vadd.f32 %v1529, %v1576
    %v1578 = vpop.f32.mrb[0].mxu0
    %v1579 = vpop.f32.mrb[0].mxu0
    %v1580 = vadd.f32 %v1532, %v1579
    %v1581 = vpop.f32.mrb[0].mxu0
    %1582 = vmatprep.mubr.bf16.mxu0 0
    %1583 = vmatmul.mubr.bf16.gmra.mrb[0].mxu0 %v474
    %v1584 = vpop.f32.mrb[0].mxu0
    %v1585 = vadd.f32 %v1537, %v1584
    %v1586 = vpop.f32.mrb[0].mxu0
    %v1587 = vpop.f32.mrb[0].mxu0
    %v1588 = vpop.f32.mrb[0].mxu0
    %1589 = vdwg.mxu0
    %v1590 = vpack.c.bf16 %v1580, %v1577
    %v1591 = vpack.c.bf16 %v1585, %v1585
    %v1592 = vld [vmem:[%s51] sm:$0x1]
    %v1593 = vld [vmem:[%s49] sm:$0xf]
    %v1594 = vld [vmem:[%s49 + $0x4] sm:$0xf]
    %v1597 = vunpack.c.l.b16 %v1593
    %v1598 = vunpack.c.l.b16 %v1594
    %v1599 = vpack.c.b16 %v1598, %v1597
    %v1602 = vsel %vm469, %v1590, 0
    %v1605 = vsel %vm469, %v1591, 0
    %1607 = vmatprep.subr.bf16.mxu0 0
    %1608 = vmatpush1.bf16.msra.mxu0 %v1599
    %1609 = vmatprep.subr.bf16.mxu0 0
    %1610 = vmatpush1.bf16.msra.mxu0 0
    %1611 = vmatprep.subr.bf16.mxu0 0
    %1612 = vmatpush1.bf16.msra.mxu0 0
    %1613 = vmatprep.subr.bf16.mxu0 0
    %1614 = vmatpush1.bf16.msra.mxu0 0
    %1615 = vmatprep.subr.bf16.mxu0 0
    %1616 = vmatpush1.bf16.msra.mxu0 0
    %1617 = vmatprep.subr.bf16.mxu0 0
    %1618 = vmatpush1.bf16.msra.mxu0 0
    %1619 = vmatprep.subr.bf16.mxu0 0
    %1620 = vmatpush1.bf16.msra.mxu0 0
    %1621 = vmatprep.subr.bf16.mxu0 0
    %1622 = vmatpush1.bf16.msra.mxu0 0
    %1623 = vmatprep.subr.bf16.mxu0 0
    %1624 = vmatpush1.bf16.msra.mxu0 0
    %1625 = vmatprep.subr.bf16.mxu0 0
    %1626 = vmatpush1.bf16.msra.mxu0 0
    %1627 = vmatprep.subr.bf16.mxu0 0
    %1628 = vmatpush1.bf16.msra.mxu0 0
    %1629 = vmatprep.subr.bf16.mxu0 0
    %1630 = vmatpush1.bf16.msra.mxu0 0
    %1631 = vmatprep.subr.bf16.mxu0 0
    %1632 = vmatpush1.bf16.msra.mxu0 0
    %1633 = vmatprep.subr.bf16.mxu0 0
    %1634 = vmatpush1.bf16.msra.mxu0 0
    %1635 = vmatprep.subr.bf16.mxu0 0
    %1636 = vmatpush1.bf16.msra.mxu0 0
    %1637 = vmatprep.subr.bf16.mxu0 0
    %1638 = vmatpush1.bf16.msra.mxu0 0
    %1639 = vmatprep.mubr.bf16.mxu0 0
    %1640 = vmatmul.mubr.bf16.gmra.mrb[0].mxu0 %v1602
    %v1641 = vpop.f32.mrb[0].mxu0
    %v1642 = vadd.f32 0.0, %v1641
    %v1643 = vpop.f32.mrb[0].mxu0
    %v1644 = vpop.f32.mrb[0].mxu0
    %v1645 = vadd.f32 0.0, %v1644
    %v1646 = vpop.f32.mrb[0].mxu0
    %1647 = vmatprep.mubr.bf16.mxu0 0
    %1648 = vmatmul.mubr.bf16.gmra.mrb[0].mxu0 %v1605
    %v1649 = vpop.f32.mrb[0].mxu0
    %v1650 = vadd.f32 0.0, %v1649
    %v1651 = vpop.f32.mrb[0].mxu0
    %v1652 = vpop.f32.mrb[0].mxu0
    %v1653 = vpop.f32.mrb[0].mxu0
    %1654 = vdwg.mxu0
    %s1655 = scalar_lea.vmem %s49, 8
    %v1656 = vld [vmem:[%s1655] sm:$0xf]
    %v1657 = vld [vmem:[%s1655 + $0x4] sm:$0xf]
    %v1660 = vunpack.c.l.b16 %v1656
    %v1661 = vunpack.c.l.b16 %v1657
    %v1662 = vpack.c.b16 %v1661, %v1660
    %1664 = vmatprep.subr.bf16.mxu0 0
    %1665 = vmatpush1.bf16.msra.mxu0 %v1662
    %1666 = vmatprep.subr.bf16.mxu0 0
    %1667 = vmatpush1.bf16.msra.mxu0 0
    %1668 = vmatprep.subr.bf16.mxu0 0
    %1669 = vmatpush1.bf16.msra.mxu0 0
    %1670 = vmatprep.subr.bf16.mxu0 0
    %1671 = vmatpush1.bf16.msra.mxu0 0
    %1672 = vmatprep.subr.bf16.mxu0 0
    %1673 = vmatpush1.bf16.msra.mxu0 0
    %1674 = vmatprep.subr.bf16.mxu0 0
    %1675 = vmatpush1.bf16.msra.mxu0 0
    %1676 = vmatprep.subr.bf16.mxu0 0
    %1677 = vmatpush1.bf16.msra.mxu0 0
    %1678 = vmatprep.subr.bf16.mxu0 0
    %1679 = vmatpush1.bf16.msra.mxu0 0
    %1680 = vmatprep.subr.bf16.mxu0 0
    %1681 = vmatpush1.bf16.msra.mxu0 0
    %1682 = vmatprep.subr.bf16.mxu0 0
    %1683 = vmatpush1.bf16.msra.mxu0 0
    %1684 = vmatprep.subr.bf16.mxu0 0
    %1685 = vmatpush1.bf16.msra.mxu0 0
    %1686 = vmatprep.subr.bf16.mxu0 0
    %1687 = vmatpush1.bf16.msra.mxu0 0
    %1688 = vmatprep.subr.bf16.mxu0 0
    %1689 = vmatpush1.bf16.msra.mxu0 0
    %1690 = vmatprep.subr.bf16.mxu0 0
    %1691 = vmatpush1.bf16.msra.mxu0 0
    %1692 = vmatprep.subr.bf16.mxu0 0
    %1693 = vmatpush1.bf16.msra.mxu0 0
    %1694 = vmatprep.subr.bf16.mxu0 0
    %1695 = vmatpush1.bf16.msra.mxu0 0
    %1696 = vmatprep.mubr.bf16.mxu0 0
    %1697 = vmatmul.mubr.bf16.gmra.mrb[0].mxu0 %v1602
    %v1698 = vpop.f32.mrb[0].mxu0
    %v1699 = vadd.f32 0.0, %v1698
    %v1700 = vpop.f32.mrb[0].mxu0
    %v1701 = vpop.f32.mrb[0].mxu0
    %v1702 = vadd.f32 0.0, %v1701
    %v1703 = vpop.f32.mrb[0].mxu0
    %1704 = vmatprep.mubr.bf16.mxu0 0
    %1705 = vmatmul.mubr.bf16.gmra.mrb[0].mxu0 %v1605
    %v1706 = vpop.f32.mrb[0].mxu0
    %v1707 = vadd.f32 0.0, %v1706
    %v1708 = vpop.f32.mrb[0].mxu0
    %v1709 = vpop.f32.mrb[0].mxu0
    %v1710 = vpop.f32.mrb[0].mxu0
    %1711 = vdwg.mxu0
    %v1712 = vpack.c.bf16 %v1645, %v1642
    %v1713 = vpack.c.bf16 %v1699, %v1650
    %v1714 = vpack.c.bf16 %v1707, %v1702
    %v1716 = vlaneseq
    %v1717 = vshrl.u32 %v1716, 7
    %v1718 = vsub.s32 0, %v1717
    %v1719 = vrot.slane %v1592, %v1718
    %1721 = vmatprep.subr.bf16.mxu0 0
    %1722 = vmatpush1.bf16.msra.mxu0 %v1712
    %1723 = vmatprep.subr.bf16.mxu0 0
    %1724 = vmatpush1.bf16.msra.mxu0 %v1713
    %1725 = vmatprep.subr.bf16.mxu0 0
    %1726 = vmatpush1.bf16.msra.mxu0 %v1714
    %1727 = vmatprep.subr.bf16.mxu0 0
    %1728 = vmatpush1.bf16.msra.mxu0 0
    %1729 = vmatprep.subr.bf16.mxu0 0
    %1730 = vmatpush1.bf16.msra.mxu0 0
    %1731 = vmatprep.subr.bf16.mxu0 0
    %1732 = vmatpush1.bf16.msra.mxu0 0
    %1733 = vmatprep.subr.bf16.mxu0 0
    %1734 = vmatpush1.bf16.msra.mxu0 0
    %1735 = vmatprep.subr.bf16.mxu0 0
    %1736 = vmatpush1.bf16.msra.mxu0 0
    %1737 = vmatprep.subr.bf16.mxu0 0
    %1738 = vmatpush1.bf16.msra.mxu0 0
    %1739 = vmatprep.subr.bf16.mxu0 0
    %1740 = vmatpush1.bf16.msra.mxu0 0
    %1741 = vmatprep.subr.bf16.mxu0 0
    %1742 = vmatpush1.bf16.msra.mxu0 0
    %1743 = vmatprep.subr.bf16.mxu0 0
    %1744 = vmatpush1.bf16.msra.mxu0 0
    %1745 = vmatprep.subr.bf16.mxu0 0
    %1746 = vmatpush1.bf16.msra.mxu0 0
    %1747 = vmatprep.subr.bf16.mxu0 0
    %1748 = vmatpush1.bf16.msra.mxu0 0
    %1749 = vmatprep.subr.bf16.mxu0 0
    %1750 = vmatpush1.bf16.msra.mxu0 0
    %1751 = vmatprep.subr.bf16.mxu0 0
    %1752 = vmatpush1.bf16.msra.mxu0 0
    %1753 = vmatprep.mubr.bf16.mxu0 0
    %1754 = vmatmul.mubr.bf16.gmra.mrb[0].mxu0 %v656
    %v1755 = vpop.f32.mrb[0].mxu0
    %v1756 = vadd.f32 %v1719, %v1755
    %v1757 = vpop.f32.mrb[0].mxu0
    %v1758 = vpop.f32.mrb[0].mxu0
    %v1759 = vadd.f32 %v1719, %v1758
    %v1760 = vpop.f32.mrb[0].mxu0
    %1761 = vdwg.mxu0
    %v1762 = vld [vmem:[%s53] sm:$0xf]
    %v1763 = vld [vmem:[%s53 + $0x4] sm:$0xf]
    %v1766 = vunpack.c.l.b16 %v1762
    %v1767 = vunpack.c.l.b16 %v1763
    %v1768 = vpack.c.b16 %v1767, %v1766
    %v1771 = vsel %vm469, %v1471, 0
    %1773 = vmatprep.subr.bf16.mxu0 0
    %1774 = vmatpush1.bf16.msra.mxu0 %v1768
    %1775 = vmatprep.subr.bf16.mxu0 0
    %1776 = vmatpush1.bf16.msra.mxu0 0
    %1777 = vmatprep.subr.bf16.mxu0 0
    %1778 = vmatpush1.bf16.msra.mxu0 0
    %1779 = vmatprep.subr.bf16.mxu0 0
    %1780 = vmatpush1.bf16.msra.mxu0 0
    %1781 = vmatprep.subr.bf16.mxu0 0
    %1782 = vmatpush1.bf16.msra.mxu0 0
    %1783 = vmatprep.subr.bf16.mxu0 0
    %1784 = vmatpush1.bf16.msra.mxu0 0
    %1785 = vmatprep.subr.bf16.mxu0 0
    %1786 = vmatpush1.bf16.msra.mxu0 0
    %1787 = vmatprep.subr.bf16.mxu0 0
    %1788 = vmatpush1.bf16.msra.mxu0 0
    %1789 = vmatprep.subr.bf16.mxu0 0
    %1790 = vmatpush1.bf16.msra.mxu0 0
    %1791 = vmatprep.subr.bf16.mxu0 0
    %1792 = vmatpush1.bf16.msra.mxu0 0
    %1793 = vmatprep.subr.bf16.mxu0 0
    %1794 = vmatpush1.bf16.msra.mxu0 0
    %1795 = vmatprep.subr.bf16.mxu0 0
    %1796 = vmatpush1.bf16.msra.mxu0 0
    %1797 = vmatprep.subr.bf16.mxu0 0
    %1798 = vmatpush1.bf16.msra.mxu0 0
    %1799 = vmatprep.subr.bf16.mxu0 0
    %1800 = vmatpush1.bf16.msra.mxu0 0
    %1801 = vmatprep.subr.bf16.mxu0 0
    %1802 = vmatpush1.bf16.msra.mxu0 0
    %1803 = vmatprep.subr.bf16.mxu0 0
    %1804 = vmatpush1.bf16.msra.mxu0 0
    %1805 = vmatprep.mubr.bf16.mxu0 0
    %1806 = vmatmul.mubr.bf16.gmra.mrb[0].mxu0 %v1771
    %v1807 = vpop.f32.mrb[0].mxu0
    %v1808 = vadd.f32 0.0, %v1807
    %v1809 = vpop.f32.mrb[0].mxu0
    %v1810 = vpop.f32.mrb[0].mxu0
    %v1811 = vadd.f32 0.0, %v1810
    %v1812 = vpop.f32.mrb[0].mxu0
    %1813 = vdwg.mxu0
    %v1814 = vadd.f32 %v1756, %v1808
    %v1815 = vadd.f32 %v1759, %v1811
    %v1816 = vld [vmem:[%s55] sm:$0x1]
    %v1818 = vlaneseq
    %v1819 = vshrl.u32 %v1818, 7
    %v1820 = vsub.s32 0, %v1819
    %v1821 = vrot.slane %v1816, %v1820
    %v1823 = vadd.f32 %v1814, %v1821
    %v1824 = vadd.f32 %v1815, %v1821
    %v1825 = vld [vmem:[%s57] sm:$0x1]
    %v1826 = vld [vmem:[%s59] sm:$0x1]
    %v1827 = vsel %vm469, %v1823, 0.0
    %v1828 = vsel %vm469, %v1824, 0.0
    %v1829 = vadd.f32 %v1827, %v1828
    %v1830 = vrot.slane %v1829, 4
    %v1831 = vadd.f32 %v1829, %v1830
    %v1832 = vrot.slane %v1831, 2
    %v1833 = vadd.f32 %v1831, %v1832
    %v1834 = vrot.slane %v1833, 1
    %v1835 = vadd.f32 %v1833, %v1834
    %v1836 = vmul.f32 %v1835, %v769
    %v1837 = vsub.f32 %v1823, %v1836
    %v1838 = vsub.f32 %v1824, %v1836
    %v1839 = vmul.f32 %v1837, %v1837
    %v1840 = vmul.f32 %v1838, %v1838
    %v1841 = vsel %vm469, %v1839, 0.0
    %v1842 = vsel %vm469, %v1840, 0.0
    %v1843 = vadd.f32 %v1841, %v1842
    %v1844 = vrot.slane %v1843, 4
    %v1845 = vadd.f32 %v1843, %v1844
    %v1846 = vrot.slane %v1845, 2
    %v1847 = vadd.f32 %v1845, %v1846
    %v1848 = vrot.slane %v1847, 1
    %v1849 = vadd.f32 %v1847, %v1848
    %v1850 = vmul.f32 %v1849, %v769
    %v1851 = vadd.f32 %v1850, 1e-05
    %v1852 = vrsqrt.pop %v1851
    %v1853 = vmul.f32 %v1837, %v1852
    %v1854 = vmul.f32 %v1838, %v1852
    %v1856 = vlaneseq
    %v1857 = vshrl.u32 %v1856, 7
    %v1858 = vsub.s32 0, %v1857
    %v1859 = vrot.slane %v1825, %v1858
    %v1861 = vmul.f32 %v1853, %v1859
    %v1862 = vmul.f32 %v1854, %v1859
    %v1864 = vlaneseq
    %v1865 = vshrl.u32 %v1864, 7
    %v1866 = vsub.s32 0, %v1865
    %v1867 = vrot.slane %v1826, %v1866
    %v1869 = vadd.f32 %v1861, %v1867
    %v1870 = vadd.f32 %v1862, %v1867
    %v1871 = vmax.f32 %v1869, 0.0
    %v1872 = vmax.f32 %v1870, 0.0
    %v1873 = vadd.f32 %v1871, %v1469
    %v1874 = vadd.f32 %v1872, %v1470
    %v1875 = vld [vmem:[%s63] sm:$0x1]
    %v1876 = vld [vmem:[%s61] sm:$0xf]
    %v1878 = vsel %vm535, %v1876, 0
    %1880 = vmatprep.subr.bf16.mxu0 0
    %1881 = vmatpush1.bf16.msra.mxu0 %v1878
    %1882 = vmatprep.subr.bf16.mxu0 0
    %1883 = vmatpush1.bf16.msra.mxu0 0
    %1884 = vmatprep.subr.bf16.mxu0 0
    %1885 = vmatpush1.bf16.msra.mxu0 0
    %1886 = vmatprep.subr.bf16.mxu0 0
    %1887 = vmatpush1.bf16.msra.mxu0 0
    %1888 = vmatprep.subr.bf16.mxu0 0
    %1889 = vmatpush1.bf16.msra.mxu0 0
    %1890 = vmatprep.subr.bf16.mxu0 0
    %1891 = vmatpush1.bf16.msra.mxu0 0
    %1892 = vmatprep.subr.bf16.mxu0 0
    %1893 = vmatpush1.bf16.msra.mxu0 0
    %1894 = vmatprep.subr.bf16.mxu0 0
    %1895 = vmatpush1.bf16.msra.mxu0 0
    %1896 = vmatprep.subr.bf16.mxu0 0
    %1897 = vmatpush1.bf16.msra.mxu0 0
    %1898 = vmatprep.subr.bf16.mxu0 0
    %1899 = vmatpush1.bf16.msra.mxu0 0
    %1900 = vmatprep.subr.bf16.mxu0 0
    %1901 = vmatpush1.bf16.msra.mxu0 0
    %1902 = vmatprep.subr.bf16.mxu0 0
    %1903 = vmatpush1.bf16.msra.mxu0 0
    %1904 = vmatprep.subr.bf16.mxu0 0
    %1905 = vmatpush1.bf16.msra.mxu0 0
    %1906 = vmatprep.subr.bf16.mxu0 0
    %1907 = vmatpush1.bf16.msra.mxu0 0
    %1908 = vmatprep.subr.bf16.mxu0 0
    %1909 = vmatpush1.bf16.msra.mxu0 0
    %1910 = vmatprep.subr.bf16.mxu0 0
    %1911 = vmatpush1.bf16.msra.mxu0 0
    %1912 = vmatprep.mubr.bf16.mxu0 0
    %1913 = vmatmul.mubr.bf16.gmra.mrb[0].mxu0 %v1276
    %v1914 = vpop.f32.mrb[0].mxu0
    %v1915 = vadd.f32 0.0, %v1914
    %v1916 = vpop.f32.mrb[0].mxu0
    %v1917 = vpop.f32.mrb[0].mxu0
    %v1918 = vadd.f32 0.0, %v1917
    %v1919 = vpop.f32.mrb[0].mxu0
    %1920 = vmatprep.mubr.bf16.mxu0 0
    %1921 = vmatmul.mubr.bf16.gmra.mrb[0].mxu0 %v1279
    %v1922 = vpop.f32.mrb[0].mxu0
    %v1923 = vadd.f32 0.0, %v1922
    %v1924 = vpop.f32.mrb[0].mxu0
    %v1925 = vpop.f32.mrb[0].mxu0
    %v1926 = vpop.f32.mrb[0].mxu0
    %1927 = vdwg.mxu0
    %s1928 = scalar_lea.vmem %s61, 4
    %v1929 = vld [vmem:[%s1928] sm:$0xf]
    %v1931 = vsel %vm535, %v1929, 0
    %1933 = vmatprep.subr.bf16.mxu0 0
    %1934 = vmatpush1.bf16.msra.mxu0 %v1931
    %1935 = vmatprep.subr.bf16.mxu0 0
    %1936 = vmatpush1.bf16.msra.mxu0 0
    %1937 = vmatprep.subr.bf16.mxu0 0
    %1938 = vmatpush1.bf16.msra.mxu0 0
    %1939 = vmatprep.subr.bf16.mxu0 0
    %1940 = vmatpush1.bf16.msra.mxu0 0
    %1941 = vmatprep.subr.bf16.mxu0 0
    %1942 = vmatpush1.bf16.msra.mxu0 0
    %1943 = vmatprep.subr.bf16.mxu0 0
    %1944 = vmatpush1.bf16.msra.mxu0 0
    %1945 = vmatprep.subr.bf16.mxu0 0
    %1946 = vmatpush1.bf16.msra.mxu0 0
    %1947 = vmatprep.subr.bf16.mxu0 0
    %1948 = vmatpush1.bf16.msra.mxu0 0
    %1949 = vmatprep.subr.bf16.mxu0 0
    %1950 = vmatpush1.bf16.msra.mxu0 0
    %1951 = vmatprep.subr.bf16.mxu0 0
    %1952 = vmatpush1.bf16.msra.mxu0 0
    %1953 = vmatprep.subr.bf16.mxu0 0
    %1954 = vmatpush1.bf16.msra.mxu0 0
    %1955 = vmatprep.subr.bf16.mxu0 0
    %1956 = vmatpush1.bf16.msra.mxu0 0
    %1957 = vmatprep.subr.bf16.mxu0 0
    %1958 = vmatpush1.bf16.msra.mxu0 0
    %1959 = vmatprep.subr.bf16.mxu0 0
    %1960 = vmatpush1.bf16.msra.mxu0 0
    %1961 = vmatprep.subr.bf16.mxu0 0
    %1962 = vmatpush1.bf16.msra.mxu0 0
    %1963 = vmatprep.subr.bf16.mxu0 0
    %1964 = vmatpush1.bf16.msra.mxu0 0
    %1965 = vmatprep.mubr.bf16.mxu0 0
    %1966 = vmatmul.mubr.bf16.gmra.mrb[0].mxu0 %v1276
    %v1967 = vpop.f32.mrb[0].mxu0
    %v1968 = vadd.f32 0.0, %v1967
    %v1969 = vpop.f32.mrb[0].mxu0
    %v1970 = vpop.f32.mrb[0].mxu0
    %v1971 = vadd.f32 0.0, %v1970
    %v1972 = vpop.f32.mrb[0].mxu0
    %1973 = vmatprep.mubr.bf16.mxu0 0
    %1974 = vmatmul.mubr.bf16.gmra.mrb[0].mxu0 %v1279
    %v1975 = vpop.f32.mrb[0].mxu0
    %v1976 = vadd.f32 0.0, %v1975
    %v1977 = vpop.f32.mrb[0].mxu0
    %v1978 = vpop.f32.mrb[0].mxu0
    %v1979 = vpop.f32.mrb[0].mxu0
    %1980 = vdwg.mxu0
    %s1981 = scalar_lea.vmem %s61, 8
    %v1982 = vld [vmem:[%s1981] sm:$0xf]
    %v1984 = vsel %vm535, %v1982, 0
    %1986 = vmatprep.subr.bf16.mxu0 0
    %1987 = vmatpush1.bf16.msra.mxu0 %v1984
    %1988 = vmatprep.subr.bf16.mxu0 0
    %1989 = vmatpush1.bf16.msra.mxu0 0
    %1990 = vmatprep.subr.bf16.mxu0 0
    %1991 = vmatpush1.bf16.msra.mxu0 0
    %1992 = vmatprep.subr.bf16.mxu0 0
    %1993 = vmatpush1.bf16.msra.mxu0 0
    %1994 = vmatprep.subr.bf16.mxu0 0
    %1995 = vmatpush1.bf16.msra.mxu0 0
    %1996 = vmatprep.subr.bf16.mxu0 0
    %1997 = vmatpush1.bf16.msra.mxu0 0
    %1998 = vmatprep.subr.bf16.mxu0 0
    %1999 = vmatpush1.bf16.msra.mxu0 0
    %2000 = vmatprep.subr.bf16.mxu0 0
    %2001 = vmatpush1.bf16.msra.mxu0 0
    %2002 = vmatprep.subr.bf16.mxu0 0
    %2003 = vmatpush1.bf16.msra.mxu0 0
    %2004 = vmatprep.subr.bf16.mxu0 0
    %2005 = vmatpush1.bf16.msra.mxu0 0
    %2006 = vmatprep.subr.bf16.mxu0 0
    %2007 = vmatpush1.bf16.msra.mxu0 0
    %2008 = vmatprep.subr.bf16.mxu0 0
    %2009 = vmatpush1.bf16.msra.mxu0 0
    %2010 = vmatprep.subr.bf16.mxu0 0
    %2011 = vmatpush1.bf16.msra.mxu0 0
    %2012 = vmatprep.subr.bf16.mxu0 0
    %2013 = vmatpush1.bf16.msra.mxu0 0
    %2014 = vmatprep.subr.bf16.mxu0 0
    %2015 = vmatpush1.bf16.msra.mxu0 0
    %2016 = vmatprep.subr.bf16.mxu0 0
    %2017 = vmatpush1.bf16.msra.mxu0 0
    %2018 = vmatprep.mubr.bf16.mxu0 0
    %2019 = vmatmul.mubr.bf16.gmra.mrb[0].mxu0 %v1276
    %v2020 = vpop.f32.mrb[0].mxu0
    %v2021 = vadd.f32 0.0, %v2020
    %v2022 = vpop.f32.mrb[0].mxu0
    %v2023 = vpop.f32.mrb[0].mxu0
    %v2024 = vadd.f32 0.0, %v2023
    %v2025 = vpop.f32.mrb[0].mxu0
    %2026 = vmatprep.mubr.bf16.mxu0 0
    %2027 = vmatmul.mubr.bf16.gmra.mrb[0].mxu0 %v1279
    %v2028 = vpop.f32.mrb[0].mxu0
    %v2029 = vadd.f32 0.0, %v2028
    %v2030 = vpop.f32.mrb[0].mxu0
    %v2031 = vpop.f32.mrb[0].mxu0
    %v2032 = vpop.f32.mrb[0].mxu0
    %2033 = vdwg.mxu0
    %s2034 = scalar_lea.vmem %s61, 12
    %v2035 = vld [vmem:[%s2034] sm:$0xf]
    %v2037 = vsel %vm535, %v2035, 0
    %2039 = vmatprep.subr.bf16.mxu0 0
    %2040 = vmatpush1.bf16.msra.mxu0 %v2037
    %2041 = vmatprep.subr.bf16.mxu0 0
    %2042 = vmatpush1.bf16.msra.mxu0 0
    %2043 = vmatprep.subr.bf16.mxu0 0
    %2044 = vmatpush1.bf16.msra.mxu0 0
    %2045 = vmatprep.subr.bf16.mxu0 0
    %2046 = vmatpush1.bf16.msra.mxu0 0
    %2047 = vmatprep.subr.bf16.mxu0 0
    %2048 = vmatpush1.bf16.msra.mxu0 0
    %2049 = vmatprep.subr.bf16.mxu0 0
    %2050 = vmatpush1.bf16.msra.mxu0 0
    %2051 = vmatprep.subr.bf16.mxu0 0
    %2052 = vmatpush1.bf16.msra.mxu0 0
    %2053 = vmatprep.subr.bf16.mxu0 0
    %2054 = vmatpush1.bf16.msra.mxu0 0
    %2055 = vmatprep.subr.bf16.mxu0 0
    %2056 = vmatpush1.bf16.msra.mxu0 0
    %2057 = vmatprep.subr.bf16.mxu0 0
    %2058 = vmatpush1.bf16.msra.mxu0 0
    %2059 = vmatprep.subr.bf16.mxu0 0
    %2060 = vmatpush1.bf16.msra.mxu0 0
    %2061 = vmatprep.subr.bf16.mxu0 0
    %2062 = vmatpush1.bf16.msra.mxu0 0
    %2063 = vmatprep.subr.bf16.mxu0 0
    %2064 = vmatpush1.bf16.msra.mxu0 0
    %2065 = vmatprep.subr.bf16.mxu0 0
    %2066 = vmatpush1.bf16.msra.mxu0 0
    %2067 = vmatprep.subr.bf16.mxu0 0
    %2068 = vmatpush1.bf16.msra.mxu0 0
    %2069 = vmatprep.subr.bf16.mxu0 0
    %2070 = vmatpush1.bf16.msra.mxu0 0
    %2071 = vmatprep.mubr.bf16.mxu0 0
    %2072 = vmatmul.mubr.bf16.gmra.mrb[0].mxu0 %v1276
    %v2073 = vpop.f32.mrb[0].mxu0
    %v2074 = vadd.f32 0.0, %v2073
    %v2075 = vpop.f32.mrb[0].mxu0
    %v2076 = vpop.f32.mrb[0].mxu0
    %v2077 = vadd.f32 0.0, %v2076
    %v2078 = vpop.f32.mrb[0].mxu0
    %2079 = vmatprep.mubr.bf16.mxu0 0
    %2080 = vmatmul.mubr.bf16.gmra.mrb[0].mxu0 %v1279
    %v2081 = vpop.f32.mrb[0].mxu0
    %v2082 = vadd.f32 0.0, %v2081
    %v2083 = vpop.f32.mrb[0].mxu0
    %v2084 = vpop.f32.mrb[0].mxu0
    %v2085 = vpop.f32.mrb[0].mxu0
    %2086 = vdwg.mxu0
    %v2087 = vpack.c.bf16 %v1918, %v1915
    %v2088 = vpack.c.bf16 %v1968, %v1923
    %v2089 = vpack.c.bf16 %v1976, %v1971
    %v2090 = vpack.c.bf16 %v2024, %v2021
    %v2091 = vpack.c.bf16 %v2074, %v2029
    %v2092 = vpack.c.bf16 %v2082, %v2077
    %v2094 = vlaneseq
    %v2095 = vshrl.u32 %v2094, 7
    %v2096 = vsub.s32 0, %v2095
    %v2097 = vrot.slane %v1875, %v2096
    %2099 = vmatprep.subr.bf16.mxu0 0
    %2100 = vmatpush1.bf16.msra.mxu0 %v2087
    %2101 = vmatprep.subr.bf16.mxu0 0
    %2102 = vmatpush1.bf16.msra.mxu0 %v2088
    %2103 = vmatprep.subr.bf16.mxu0 0
    %2104 = vmatpush1.bf16.msra.mxu0 %v2089
    %2105 = vmatprep.subr.bf16.mxu0 0
    %2106 = vmatpush1.bf16.msra.mxu0 %v2090
    %2107 = vmatprep.subr.bf16.mxu0 0
    %2108 = vmatpush1.bf16.msra.mxu0 %v2091
    %2109 = vmatprep.subr.bf16.mxu0 0
    %2110 = vmatpush1.bf16.msra.mxu0 %v2092
    %2111 = vmatprep.subr.bf16.mxu0 0
    %2112 = vmatpush1.bf16.msra.mxu0 0
    %2113 = vmatprep.subr.bf16.mxu0 0
    %2114 = vmatpush1.bf16.msra.mxu0 0
    %2115 = vmatprep.subr.bf16.mxu0 0
    %2116 = vmatpush1.bf16.msra.mxu0 0
    %2117 = vmatprep.subr.bf16.mxu0 0
    %2118 = vmatpush1.bf16.msra.mxu0 0
    %2119 = vmatprep.subr.bf16.mxu0 0
    %2120 = vmatpush1.bf16.msra.mxu0 0
    %2121 = vmatprep.subr.bf16.mxu0 0
    %2122 = vmatpush1.bf16.msra.mxu0 0
    %2123 = vmatprep.subr.bf16.mxu0 0
    %2124 = vmatpush1.bf16.msra.mxu0 0
    %2125 = vmatprep.subr.bf16.mxu0 0
    %2126 = vmatpush1.bf16.msra.mxu0 0
    %2127 = vmatprep.subr.bf16.mxu0 0
    %2128 = vmatpush1.bf16.msra.mxu0 0
    %2129 = vmatprep.subr.bf16.mxu0 0
    %2130 = vmatpush1.bf16.msra.mxu0 0
    %2131 = vmatprep.mubr.bf16.mxu0 0
    %2132 = vmatmul.mubr.bf16.gmra.mrb[0].mxu0 %v1085
    %v2133 = vpop.f32.mrb[0].mxu0
    %v2134 = vadd.f32 %v2097, %v2133
    %v2135 = vpop.f32.mrb[0].mxu0
    %v2136 = vpop.f32.mrb[0].mxu0
    %v2137 = vadd.f32 %v2097, %v2136
    %v2138 = vpop.f32.mrb[0].mxu0
    %2139 = vmatprep.mubr.bf16.mxu0 0
    %2140 = vmatmul.mubr.bf16.gmra.mrb[0].mxu0 %v1088
    %v2141 = vpop.f32.mrb[0].mxu0
    %v2142 = vadd.f32 %v2097, %v2141
    %v2143 = vpop.f32.mrb[0].mxu0
    %v2144 = vpop.f32.mrb[0].mxu0
    %v2145 = vpop.f32.mrb[0].mxu0
    %2146 = vdwg.mxu0
    %v2147 = vld [vmem:[%s65] sm:$0xf]
    %v2149 = vsel %vm535, %v2147, 0
    %2151 = vmatprep.subr.bf16.mxu0 0
    %2152 = vmatpush1.bf16.msra.mxu0 %v2149
    %2153 = vmatprep.subr.bf16.mxu0 0
    %2154 = vmatpush1.bf16.msra.mxu0 0
    %2155 = vmatprep.subr.bf16.mxu0 0
    %2156 = vmatpush1.bf16.msra.mxu0 0
    %2157 = vmatprep.subr.bf16.mxu0 0
    %2158 = vmatpush1.bf16.msra.mxu0 0
    %2159 = vmatprep.subr.bf16.mxu0 0
    %2160 = vmatpush1.bf16.msra.mxu0 0
    %2161 = vmatprep.subr.bf16.mxu0 0
    %2162 = vmatpush1.bf16.msra.mxu0 0
    %2163 = vmatprep.subr.bf16.mxu0 0
    %2164 = vmatpush1.bf16.msra.mxu0 0
    %2165 = vmatprep.subr.bf16.mxu0 0
    %2166 = vmatpush1.bf16.msra.mxu0 0
    %2167 = vmatprep.subr.bf16.mxu0 0
    %2168 = vmatpush1.bf16.msra.mxu0 0
    %2169 = vmatprep.subr.bf16.mxu0 0
    %2170 = vmatpush1.bf16.msra.mxu0 0
    %2171 = vmatprep.subr.bf16.mxu0 0
    %2172 = vmatpush1.bf16.msra.mxu0 0
    %2173 = vmatprep.subr.bf16.mxu0 0
    %2174 = vmatpush1.bf16.msra.mxu0 0
    %2175 = vmatprep.subr.bf16.mxu0 0
    %2176 = vmatpush1.bf16.msra.mxu0 0
    %2177 = vmatprep.subr.bf16.mxu0 0
    %2178 = vmatpush1.bf16.msra.mxu0 0
    %2179 = vmatprep.subr.bf16.mxu0 0
    %2180 = vmatpush1.bf16.msra.mxu0 0
    %2181 = vmatprep.subr.bf16.mxu0 0
    %2182 = vmatpush1.bf16.msra.mxu0 0
    %2183 = vmatprep.mubr.bf16.mxu0 0
    %2184 = vmatmul.mubr.bf16.gmra.mrb[0].mxu0 %v1276
    %v2185 = vpop.f32.mrb[0].mxu0
    %v2186 = vadd.f32 0.0, %v2185
    %v2187 = vpop.f32.mrb[0].mxu0
    %v2188 = vpop.f32.mrb[0].mxu0
    %v2189 = vadd.f32 0.0, %v2188
    %v2190 = vpop.f32.mrb[0].mxu0
    %2191 = vmatprep.mubr.bf16.mxu0 0
    %2192 = vmatmul.mubr.bf16.gmra.mrb[0].mxu0 %v1279
    %v2193 = vpop.f32.mrb[0].mxu0
    %v2194 = vadd.f32 0.0, %v2193
    %v2195 = vpop.f32.mrb[0].mxu0
    %v2196 = vpop.f32.mrb[0].mxu0
    %v2197 = vpop.f32.mrb[0].mxu0
    %2198 = vdwg.mxu0
    %v2199 = vadd.f32 %v2134, %v2186
    %v2200 = vadd.f32 %v2137, %v2189
    %v2201 = vadd.f32 %v2142, %v2194
    %v2202 = vld [vmem:[%s67] sm:$0x1]
    %v2204 = vlaneseq
    %v2205 = vshrl.u32 %v2204, 7
    %v2206 = vsub.s32 0, %v2205
    %v2207 = vrot.slane %v2202, %v2206
    %v2209 = vadd.f32 %v2199, %v2207
    %v2210 = vadd.f32 %v2200, %v2207
    %v2211 = vadd.f32 %v2201, %v2207
    %v2212 = vld [vmem:[%s69] sm:$0x1]
    %v2213 = vld [vmem:[%s71] sm:$0x1]
    %v2214 = vsel %vm469, %v2209, 0.0
    %v2215 = vsel %vm469, %v2210, 0.0
    %v2216 = vadd.f32 %v2214, %v2215
    %v2217 = vsel %vm469, %v2211, 0.0
    %v2218 = vadd.f32 %v2216, %v2217
    %v2219 = vrot.slane %v2218, 4
    %v2220 = vadd.f32 %v2218, %v2219
    %v2221 = vrot.slane %v2220, 2
    %v2222 = vadd.f32 %v2220, %v2221
    %v2223 = vrot.slane %v2222, 1
    %v2224 = vadd.f32 %v2222, %v2223
    %v2225 = vmul.f32 %v2224, %v1227
    %v2226 = vsub.f32 %v2209, %v2225
    %v2227 = vsub.f32 %v2210, %v2225
    %v2228 = vsub.f32 %v2211, %v2225
    %v2229 = vmul.f32 %v2226, %v2226
    %v2230 = vmul.f32 %v2227, %v2227
    %v2231 = vmul.f32 %v2228, %v2228
    %v2232 = vsel %vm469, %v2229, 0.0
    %v2233 = vsel %vm469, %v2230, 0.0
    %v2234 = vadd.f32 %v2232, %v2233
    %v2235 = vsel %vm469, %v2231, 0.0
    %v2236 = vadd.f32 %v2234, %v2235
    %v2237 = vrot.slane %v2236, 4
    %v2238 = vadd.f32 %v2236, %v2237
    %v2239 = vrot.slane %v2238, 2
    %v2240 = vadd.f32 %v2238, %v2239
    %v2241 = vrot.slane %v2240, 1
    %v2242 = vadd.f32 %v2240, %v2241
    %v2243 = vmul.f32 %v2242, %v1227
    %v2244 = vadd.f32 %v2243, 1e-05
    %v2245 = vrsqrt.pop %v2244
    %v2246 = vmul.f32 %v2226, %v2245
    %v2247 = vmul.f32 %v2227, %v2245
    %v2248 = vmul.f32 %v2228, %v2245
    %v2250 = vlaneseq
    %v2251 = vshrl.u32 %v2250, 7
    %v2252 = vsub.s32 0, %v2251
    %v2253 = vrot.slane %v2212, %v2252
    %v2255 = vmul.f32 %v2246, %v2253
    %v2256 = vmul.f32 %v2247, %v2253
    %v2257 = vmul.f32 %v2248, %v2253
    %v2259 = vlaneseq
    %v2260 = vshrl.u32 %v2259, 7
    %v2261 = vsub.s32 0, %v2260
    %v2262 = vrot.slane %v2213, %v2261
    %v2264 = vadd.f32 %v2255, %v2262
    %v2265 = vadd.f32 %v2256, %v2262
    %v2266 = vadd.f32 %v2257, %v2262
    %v2267 = vmax.f32 %v2264, 0.0
    %v2268 = vmax.f32 %v2265, 0.0
    %v2269 = vmax.f32 %v2266, 0.0
    %v2270 = vpack.c.bf16 %v2268, %v2267
    %v2271 = vpack.c.bf16 %v2269, %v2269
    %v2273 = vsel %vm469, %v2270, 0
    %v2276 = vsel %vm469, %v2271, 0
    %2278 = vmatprep.subr.bf16.mxu0 0
    %2279 = vmatpush1.bf16.msra.mxu0 %v1599
    %2280 = vmatprep.subr.bf16.mxu0 0
    %2281 = vmatpush1.bf16.msra.mxu0 0
    %2282 = vmatprep.subr.bf16.mxu0 0
    %2283 = vmatpush1.bf16.msra.mxu0 0
    %2284 = vmatprep.subr.bf16.mxu0 0
    %2285 = vmatpush1.bf16.msra.mxu0 0
    %2286 = vmatprep.subr.bf16.mxu0 0
    %2287 = vmatpush1.bf16.msra.mxu0 0
    %2288 = vmatprep.subr.bf16.mxu0 0
    %2289 = vmatpush1.bf16.msra.mxu0 0
    %2290 = vmatprep.subr.bf16.mxu0 0
    %2291 = vmatpush1.bf16.msra.mxu0 0
    %2292 = vmatprep.subr.bf16.mxu0 0
    %2293 = vmatpush1.bf16.msra.mxu0 0
    %2294 = vmatprep.subr.bf16.mxu0 0
    %2295 = vmatpush1.bf16.msra.mxu0 0
    %2296 = vmatprep.subr.bf16.mxu0 0
    %2297 = vmatpush1.bf16.msra.mxu0 0
    %2298 = vmatprep.subr.bf16.mxu0 0
    %2299 = vmatpush1.bf16.msra.mxu0 0
    %2300 = vmatprep.subr.bf16.mxu0 0
    %2301 = vmatpush1.bf16.msra.mxu0 0
    %2302 = vmatprep.subr.bf16.mxu0 0
    %2303 = vmatpush1.bf16.msra.mxu0 0
    %2304 = vmatprep.subr.bf16.mxu0 0
    %2305 = vmatpush1.bf16.msra.mxu0 0
    %2306 = vmatprep.subr.bf16.mxu0 0
    %2307 = vmatpush1.bf16.msra.mxu0 0
    %2308 = vmatprep.subr.bf16.mxu0 0
    %2309 = vmatpush1.bf16.msra.mxu0 0
    %2310 = vmatprep.mubr.bf16.mxu0 0
    %2311 = vmatmul.mubr.bf16.gmra.mrb[0].mxu0 %v2273
    %v2312 = vpop.f32.mrb[0].mxu0
    %v2313 = vadd.f32 0.0, %v2312
    %v2314 = vpop.f32.mrb[0].mxu0
    %v2315 = vpop.f32.mrb[0].mxu0
    %v2316 = vadd.f32 0.0, %v2315
    %v2317 = vpop.f32.mrb[0].mxu0
    %2318 = vmatprep.mubr.bf16.mxu0 0
    %2319 = vmatmul.mubr.bf16.gmra.mrb[0].mxu0 %v2276
    %v2320 = vpop.f32.mrb[0].mxu0
    %v2321 = vadd.f32 0.0, %v2320
    %v2322 = vpop.f32.mrb[0].mxu0
    %v2323 = vpop.f32.mrb[0].mxu0
    %v2324 = vpop.f32.mrb[0].mxu0
    %2325 = vdwg.mxu0
    %2326 = vmatprep.subr.bf16.mxu0 0
    %2327 = vmatpush1.bf16.msra.mxu0 %v1662
    %2328 = vmatprep.subr.bf16.mxu0 0
    %2329 = vmatpush1.bf16.msra.mxu0 0
    %2330 = vmatprep.subr.bf16.mxu0 0
    %2331 = vmatpush1.bf16.msra.mxu0 0
    %2332 = vmatprep.subr.bf16.mxu0 0
    %2333 = vmatpush1.bf16.msra.mxu0 0
    %2334 = vmatprep.subr.bf16.mxu0 0
    %2335 = vmatpush1.bf16.msra.mxu0 0
    %2336 = vmatprep.subr.bf16.mxu0 0
    %2337 = vmatpush1.bf16.msra.mxu0 0
    %2338 = vmatprep.subr.bf16.mxu0 0
    %2339 = vmatpush1.bf16.msra.mxu0 0
    %2340 = vmatprep.subr.bf16.mxu0 0
    %2341 = vmatpush1.bf16.msra.mxu0 0
    %2342 = vmatprep.subr.bf16.mxu0 0
    %2343 = vmatpush1.bf16.msra.mxu0 0
    %2344 = vmatprep.subr.bf16.mxu0 0
    %2345 = vmatpush1.bf16.msra.mxu0 0
    %2346 = vmatprep.subr.bf16.mxu0 0
    %2347 = vmatpush1.bf16.msra.mxu0 0
    %2348 = vmatprep.subr.bf16.mxu0 0
    %2349 = vmatpush1.bf16.msra.mxu0 0
    %2350 = vmatprep.subr.bf16.mxu0 0
    %2351 = vmatpush1.bf16.msra.mxu0 0
    %2352 = vmatprep.subr.bf16.mxu0 0
    %2353 = vmatpush1.bf16.msra.mxu0 0
    %2354 = vmatprep.subr.bf16.mxu0 0
    %2355 = vmatpush1.bf16.msra.mxu0 0
    %2356 = vmatprep.subr.bf16.mxu0 0
    %2357 = vmatpush1.bf16.msra.mxu0 0
    %2358 = vmatprep.mubr.bf16.mxu0 0
    %2359 = vmatmul.mubr.bf16.gmra.mrb[0].mxu0 %v2273
    %v2360 = vpop.f32.mrb[0].mxu0
    %v2361 = vadd.f32 0.0, %v2360
    %v2362 = vpop.f32.mrb[0].mxu0
    %v2363 = vpop.f32.mrb[0].mxu0
    %v2364 = vadd.f32 0.0, %v2363
    %v2365 = vpop.f32.mrb[0].mxu0
    %2366 = vmatprep.mubr.bf16.mxu0 0
    %2367 = vmatmul.mubr.bf16.gmra.mrb[0].mxu0 %v2276
    %v2368 = vpop.f32.mrb[0].mxu0
    %v2369 = vadd.f32 0.0, %v2368
    %v2370 = vpop.f32.mrb[0].mxu0
    %v2371 = vpop.f32.mrb[0].mxu0
    %v2372 = vpop.f32.mrb[0].mxu0
    %2373 = vdwg.mxu0
    %v2374 = vpack.c.bf16 %v2316, %v2313
    %v2375 = vpack.c.bf16 %v2361, %v2321
    %v2376 = vpack.c.bf16 %v2369, %v2364
    %2377 = vmatprep.subr.bf16.mxu0 0
    %2378 = vmatpush1.bf16.msra.mxu0 %v2374
    %2379 = vmatprep.subr.bf16.mxu0 0
    %2380 = vmatpush1.bf16.msra.mxu0 %v2375
    %2381 = vmatprep.subr.bf16.mxu0 0
    %2382 = vmatpush1.bf16.msra.mxu0 %v2376
    %2383 = vmatprep.subr.bf16.mxu0 0
    %2384 = vmatpush1.bf16.msra.mxu0 0
    %2385 = vmatprep.subr.bf16.mxu0 0
    %2386 = vmatpush1.bf16.msra.mxu0 0
    %2387 = vmatprep.subr.bf16.mxu0 0
    %2388 = vmatpush1.bf16.msra.mxu0 0
    %2389 = vmatprep.subr.bf16.mxu0 0
    %2390 = vmatpush1.bf16.msra.mxu0 0
    %2391 = vmatprep.subr.bf16.mxu0 0
    %2392 = vmatpush1.bf16.msra.mxu0 0
    %2393 = vmatprep.subr.bf16.mxu0 0
    %2394 = vmatpush1.bf16.msra.mxu0 0
    %2395 = vmatprep.subr.bf16.mxu0 0
    %2396 = vmatpush1.bf16.msra.mxu0 0
    %2397 = vmatprep.subr.bf16.mxu0 0
    %2398 = vmatpush1.bf16.msra.mxu0 0
    %2399 = vmatprep.subr.bf16.mxu0 0
    %2400 = vmatpush1.bf16.msra.mxu0 0
    %2401 = vmatprep.subr.bf16.mxu0 0
    %2402 = vmatpush1.bf16.msra.mxu0 0
    %2403 = vmatprep.subr.bf16.mxu0 0
    %2404 = vmatpush1.bf16.msra.mxu0 0
    %2405 = vmatprep.subr.bf16.mxu0 0
    %2406 = vmatpush1.bf16.msra.mxu0 0
    %2407 = vmatprep.subr.bf16.mxu0 0
    %2408 = vmatpush1.bf16.msra.mxu0 0
    %2409 = vmatprep.mubr.bf16.mxu0 0
    %2410 = vmatmul.mubr.bf16.gmra.mrb[0].mxu0 %v656
    %v2411 = vpop.f32.mrb[0].mxu0
    %v2412 = vadd.f32 %v1719, %v2411
    %v2413 = vpop.f32.mrb[0].mxu0
    %v2414 = vpop.f32.mrb[0].mxu0
    %v2415 = vadd.f32 %v1719, %v2414
    %v2416 = vpop.f32.mrb[0].mxu0
    %2417 = vdwg.mxu0
    %v2418 = vmax.f32 %v2412, 0.0
    %v2419 = vmax.f32 %v2415, 0.0
    %v2420 = vadd.f32 %v1873, %v2418
    %v2421 = vadd.f32 %v1874, %v2419
    %v2422 = vld [vmem:[%s73] sm:$0x1]
    %v2423 = vld [vmem:[#allocation2] sm:$0x1]
    %v2424 = vsel %vm469, %v2420, 0.0
    %v2425 = vsel %vm469, %v2421, 0.0
    %v2426 = vadd.f32 %v2424, %v2425
    %v2427 = vrot.slane %v2426, 4
    %v2428 = vadd.f32 %v2426, %v2427
    %v2429 = vrot.slane %v2428, 2
    %v2430 = vadd.f32 %v2428, %v2429
    %v2431 = vrot.slane %v2430, 1
    %v2432 = vadd.f32 %v2430, %v2431
    %v2433 = vmul.f32 %v2432, %v769
    %v2434 = vsub.f32 %v2420, %v2433
    %v2435 = vsub.f32 %v2421, %v2433
    %v2436 = vmul.f32 %v2434, %v2434
    %v2437 = vmul.f32 %v2435, %v2435
    %v2438 = vsel %vm469, %v2436, 0.0
    %v2439 = vsel %vm469, %v2437, 0.0
    %v2440 = vadd.f32 %v2438, %v2439
    %v2441 = vrot.slane %v2440, 4
    %v2442 = vadd.f32 %v2440, %v2441
    %v2443 = vrot.slane %v2442, 2
    %v2444 = vadd.f32 %v2442, %v2443
    %v2445 = vrot.slane %v2444, 1
    %v2446 = vadd.f32 %v2444, %v2445
    %v2447 = vmul.f32 %v2446, %v769
    %v2448 = vadd.f32 %v2447, 1e-05
    %v2449 = vrsqrt.pop %v2448
    %v2450 = vmul.f32 %v2434, %v2449
    %v2451 = vmul.f32 %v2435, %v2449
    %v2453 = vlaneseq
    %v2454 = vshrl.u32 %v2453, 7
    %v2455 = vsub.s32 0, %v2454
    %v2456 = vrot.slane %v2422, %v2455
    %v2458 = vmul.f32 %v2450, %v2456
    %v2459 = vmul.f32 %v2451, %v2456
    %v2461 = vlaneseq
    %v2462 = vshrl.u32 %v2461, 7
    %v2463 = vsub.s32 0, %v2462
    %v2464 = vrot.slane %v2423, %v2463
    %v2466 = vadd.f32 %v2458, %v2464
    %v2467 = vadd.f32 %v2459, %v2464
    %v2468 = vpack.c.bf16 %v2467, %v2466
    %v2469 = vld [vmem:[%s77] sm:$0xf]
    %v2470 = vld [vmem:[%s77 + $0x4] sm:$0xf]
    %v2471 = vld [vmem:[%s77 + $0x8] sm:$0x3]
    %v2472 = vld [vmem:[#allocation5] sm:$0x1]
    %v2474 = vlaneseq
    %v2475 = vshrl.u32 %v2474, 7
    %v2476 = vsub.s32 0, %v2475
    %v2477 = vrot.slane %v2472, %v2476
    %v2482 = vunpack.c.l.b16 %v2469
    %v2483 = vunpack.c.l.b16 %v2470
    %v2484 = vunpack.c.l.b16 %v2471
    %v2485 = vpack.c.b16 %v2483, %v2482
    %v2486 = vpack.c.b16 %v2484, %v2484
    %v2489 = vsel %vm409, %v2486, 0
    %2491 = vmatprep.subr.bf16.mxu0 0
    %2492 = vmatpush1.bf16.msra.mxu0 %v2485
    %2493 = vmatprep.subr.bf16.mxu0 0
    %2494 = vmatpush1.bf16.msra.mxu0 %v2489
    %2495 = vmatprep.subr.bf16.mxu0 0
    %2496 = vmatpush1.bf16.msra.mxu0 0
    %2497 = vmatprep.subr.bf16.mxu0 0
    %2498 = vmatpush1.bf16.msra.mxu0 0
    %2499 = vmatprep.subr.bf16.mxu0 0
    %2500 = vmatpush1.bf16.msra.mxu0 0
    %2501 = vmatprep.subr.bf16.mxu0 0
    %2502 = vmatpush1.bf16.msra.mxu0 0
    %2503 = vmatprep.subr.bf16.mxu0 0
    %2504 = vmatpush1.bf16.msra.mxu0 0
    %2505 = vmatprep.subr.bf16.mxu0 0
    %2506 = vmatpush1.bf16.msra.mxu0 0
    %2507 = vmatprep.subr.bf16.mxu0 0
    %2508 = vmatpush1.bf16.msra.mxu0 0
    %2509 = vmatprep.subr.bf16.mxu0 0
    %2510 = vmatpush1.bf16.msra.mxu0 0
    %2511 = vmatprep.subr.bf16.mxu0 0
    %2512 = vmatpush1.bf16.msra.mxu0 0
    %2513 = vmatprep.subr.bf16.mxu0 0
    %2514 = vmatpush1.bf16.msra.mxu0 0
    %2515 = vmatprep.subr.bf16.mxu0 0
    %2516 = vmatpush1.bf16.msra.mxu0 0
    %2517 = vmatprep.subr.bf16.mxu0 0
    %2518 = vmatpush1.bf16.msra.mxu0 0
    %2519 = vmatprep.subr.bf16.mxu0 0
    %2520 = vmatpush1.bf16.msra.mxu0 0
    %2521 = vmatprep.subr.bf16.mxu0 0
    %2522 = vmatpush1.bf16.msra.mxu0 0
    %2523 = vmatprep.mubr.bf16.mxu0 0
    %2524 = vmatmul.mubr.bf16.gmra.mrb[0].mxu0 %v404
    %v2525 = vpop.f32.mrb[0].mxu0
    %v2526 = vadd.f32 %v2477, %v2525
    %v2527 = vpop.f32.mrb[0].mxu0
    %v2528 = vpop.f32.mrb[0].mxu0
    %v2529 = vadd.f32 %v2477, %v2528
    %v2530 = vpop.f32.mrb[0].mxu0
    %2531 = vmatprep.mubr.bf16.mxu0 0
    %2532 = vmatmul.mubr.bf16.gmra.mrb[0].mxu0 %v407
    %v2533 = vpop.f32.mrb[0].mxu0
    %v2534 = vadd.f32 %v2477, %v2533
    %v2535 = vpop.f32.mrb[0].mxu0
    %v2536 = vpop.f32.mrb[0].mxu0
    %v2537 = vpop.f32.mrb[0].mxu0
    %2538 = vdwg.mxu0
    %2539 = vmatprep.subr.bf16.mxu0 0
    %2540 = vmatpush1.bf16.msra.mxu0 %v2468
    %2541 = vmatprep.subr.bf16.mxu0 0
    %2542 = vmatpush1.bf16.msra.mxu0 0
    %2543 = vmatprep.subr.bf16.mxu0 0
    %2544 = vmatpush1.bf16.msra.mxu0 0
    %2545 = vmatprep.subr.bf16.mxu0 0
    %2546 = vmatpush1.bf16.msra.mxu0 0
    %2547 = vmatprep.subr.bf16.mxu0 0
    %2548 = vmatpush1.bf16.msra.mxu0 0
    %2549 = vmatprep.subr.bf16.mxu0 0
    %2550 = vmatpush1.bf16.msra.mxu0 0
    %2551 = vmatprep.subr.bf16.mxu0 0
    %2552 = vmatpush1.bf16.msra.mxu0 0
    %2553 = vmatprep.subr.bf16.mxu0 0
    %2554 = vmatpush1.bf16.msra.mxu0 0
    %2555 = vmatprep.subr.bf16.mxu0 0
    %2556 = vmatpush1.bf16.msra.mxu0 0
    %2557 = vmatprep.subr.bf16.mxu0 0
    %2558 = vmatpush1.bf16.msra.mxu0 0
    %2559 = vmatprep.subr.bf16.mxu0 0
    %2560 = vmatpush1.bf16.msra.mxu0 0
    %2561 = vmatprep.subr.bf16.mxu0 0
    %2562 = vmatpush1.bf16.msra.mxu0 0
    %2563 = vmatprep.subr.bf16.mxu0 0
    %2564 = vmatpush1.bf16.msra.mxu0 0
    %2565 = vmatprep.subr.bf16.mxu0 0
    %2566 = vmatpush1.bf16.msra.mxu0 0
    %2567 = vmatprep.subr.bf16.mxu0 0
    %2568 = vmatpush1.bf16.msra.mxu0 0
    %2569 = vmatprep.subr.bf16.mxu0 0
    %2570 = vmatpush1.bf16.msra.mxu0 0
    %2571 = vmatprep.mubr.bf16.mxu0 0
    %2572 = vmatmul.mubr.bf16.gmra.mrb[0].mxu0 %v471
    %v2573 = vpop.f32.mrb[0].mxu0
    %v2574 = vadd.f32 %v2526, %v2573
    %v2575 = vpop.f32.mrb[0].mxu0
    %v2576 = vpop.f32.mrb[0].mxu0
    %v2577 = vadd.f32 %v2529, %v2576
    %v2578 = vpop.f32.mrb[0].mxu0
    %2579 = vmatprep.mubr.bf16.mxu0 0
    %2580 = vmatmul.mubr.bf16.gmra.mrb[0].mxu0 %v474
    %v2581 = vpop.f32.mrb[0].mxu0
    %v2582 = vadd.f32 %v2534, %v2581
    %v2583 = vpop.f32.mrb[0].mxu0
    %v2584 = vpop.f32.mrb[0].mxu0
    %v2585 = vpop.f32.mrb[0].mxu0
    %2586 = vdwg.mxu0
    %v2587 = vpack.c.bf16 %v2577, %v2574
    %v2588 = vpack.c.bf16 %v2582, %v2582
    %v2589 = vld [vmem:[#allocation7] sm:$0x1]
    %v2590 = vld [vmem:[%s81] sm:$0xf]
    %v2591 = vld [vmem:[%s81 + $0x4] sm:$0xf]
    %v2594 = vunpack.c.l.b16 %v2590
    %v2595 = vunpack.c.l.b16 %v2591
    %v2596 = vpack.c.b16 %v2595, %v2594
    %v2599 = vsel %vm469, %v2587, 0
    %v2602 = vsel %vm469, %v2588, 0
    %2604 = vmatprep.subr.bf16.mxu0 0
    %2605 = vmatpush1.bf16.msra.mxu0 %v2596
    %2606 = vmatprep.subr.bf16.mxu0 0
    %2607 = vmatpush1.bf16.msra.mxu0 0
    %2608 = vmatprep.subr.bf16.mxu0 0
    %2609 = vmatpush1.bf16.msra.mxu0 0
    %2610 = vmatprep.subr.bf16.mxu0 0
    %2611 = vmatpush1.bf16.msra.mxu0 0
    %2612 = vmatprep.subr.bf16.mxu0 0
    %2613 = vmatpush1.bf16.msra.mxu0 0
    %2614 = vmatprep.subr.bf16.mxu0 0
    %2615 = vmatpush1.bf16.msra.mxu0 0
    %2616 = vmatprep.subr.bf16.mxu0 0
    %2617 = vmatpush1.bf16.msra.mxu0 0
    %2618 = vmatprep.subr.bf16.mxu0 0
    %2619 = vmatpush1.bf16.msra.mxu0 0
    %2620 = vmatprep.subr.bf16.mxu0 0
    %2621 = vmatpush1.bf16.msra.mxu0 0
    %2622 = vmatprep.subr.bf16.mxu0 0
    %2623 = vmatpush1.bf16.msra.mxu0 0
    %2624 = vmatprep.subr.bf16.mxu0 0
    %2625 = vmatpush1.bf16.msra.mxu0 0
    %2626 = vmatprep.subr.bf16.mxu0 0
    %2627 = vmatpush1.bf16.msra.mxu0 0
    %2628 = vmatprep.subr.bf16.mxu0 0
    %2629 = vmatpush1.bf16.msra.mxu0 0
    %2630 = vmatprep.subr.bf16.mxu0 0
    %2631 = vmatpush1.bf16.msra.mxu0 0
    %2632 = vmatprep.subr.bf16.mxu0 0
    %2633 = vmatpush1.bf16.msra.mxu0 0
    %2634 = vmatprep.subr.bf16.mxu0 0
    %2635 = vmatpush1.bf16.msra.mxu0 0
    %2636 = vmatprep.mubr.bf16.mxu0 0
    %2637 = vmatmul.mubr.bf16.gmra.mrb[0].mxu0 %v2599
    %v2638 = vpop.f32.mrb[0].mxu0
    %v2639 = vadd.f32 0.0, %v2638
    %v2640 = vpop.f32.mrb[0].mxu0
    %v2641 = vpop.f32.mrb[0].mxu0
    %v2642 = vadd.f32 0.0, %v2641
    %v2643 = vpop.f32.mrb[0].mxu0
    %2644 = vmatprep.mubr.bf16.mxu0 0
    %2645 = vmatmul.mubr.bf16.gmra.mrb[0].mxu0 %v2602
    %v2646 = vpop.f32.mrb[0].mxu0
    %v2647 = vadd.f32 0.0, %v2646
    %v2648 = vpop.f32.mrb[0].mxu0
    %v2649 = vpop.f32.mrb[0].mxu0
    %v2650 = vpop.f32.mrb[0].mxu0
    %2651 = vdwg.mxu0
    %s2652 = scalar_lea.vmem %s81, 8
    %v2653 = vld [vmem:[%s2652] sm:$0xf]
    %v2654 = vld [vmem:[%s2652 + $0x4] sm:$0xf]
    %v2657 = vunpack.c.l.b16 %v2653
    %v2658 = vunpack.c.l.b16 %v2654
    %v2659 = vpack.c.b16 %v2658, %v2657
    %2661 = vmatprep.subr.bf16.mxu0 0
    %2662 = vmatpush1.bf16.msra.mxu0 %v2659
    %2663 = vmatprep.subr.bf16.mxu0 0
    %2664 = vmatpush1.bf16.msra.mxu0 0
    %2665 = vmatprep.subr.bf16.mxu0 0
    %2666 = vmatpush1.bf16.msra.mxu0 0
    %2667 = vmatprep.subr.bf16.mxu0 0
    %2668 = vmatpush1.bf16.msra.mxu0 0
    %2669 = vmatprep.subr.bf16.mxu0 0
    %2670 = vmatpush1.bf16.msra.mxu0 0
    %2671 = vmatprep.subr.bf16.mxu0 0
    %2672 = vmatpush1.bf16.msra.mxu0 0
    %2673 = vmatprep.subr.bf16.mxu0 0
    %2674 = vmatpush1.bf16.msra.mxu0 0
    %2675 = vmatprep.subr.bf16.mxu0 0
    %2676 = vmatpush1.bf16.msra.mxu0 0
    %2677 = vmatprep.subr.bf16.mxu0 0
    %2678 = vmatpush1.bf16.msra.mxu0 0
    %2679 = vmatprep.subr.bf16.mxu0 0
    %2680 = vmatpush1.bf16.msra.mxu0 0
    %2681 = vmatprep.subr.bf16.mxu0 0
    %2682 = vmatpush1.bf16.msra.mxu0 0
    %2683 = vmatprep.subr.bf16.mxu0 0
    %2684 = vmatpush1.bf16.msra.mxu0 0
    %2685 = vmatprep.subr.bf16.mxu0 0
    %2686 = vmatpush1.bf16.msra.mxu0 0
    %2687 = vmatprep.subr.bf16.mxu0 0
    %2688 = vmatpush1.bf16.msra.mxu0 0
    %2689 = vmatprep.subr.bf16.mxu0 0
    %2690 = vmatpush1.bf16.msra.mxu0 0
    %2691 = vmatprep.subr.bf16.mxu0 0
    %2692 = vmatpush1.bf16.msra.mxu0 0
    %2693 = vmatprep.mubr.bf16.mxu0 0
    %2694 = vmatmul.mubr.bf16.gmra.mrb[0].mxu0 %v2599
    %v2695 = vpop.f32.mrb[0].mxu0
    %v2696 = vadd.f32 0.0, %v2695
    %v2697 = vpop.f32.mrb[0].mxu0
    %v2698 = vpop.f32.mrb[0].mxu0
    %v2699 = vadd.f32 0.0, %v2698
    %v2700 = vpop.f32.mrb[0].mxu0
    %2701 = vmatprep.mubr.bf16.mxu0 0
    %2702 = vmatmul.mubr.bf16.gmra.mrb[0].mxu0 %v2602
    %v2703 = vpop.f32.mrb[0].mxu0
    %v2704 = vadd.f32 0.0, %v2703
    %v2705 = vpop.f32.mrb[0].mxu0
    %v2706 = vpop.f32.mrb[0].mxu0
    %v2707 = vpop.f32.mrb[0].mxu0
    %2708 = vdwg.mxu0
    %v2709 = vpack.c.bf16 %v2642, %v2639
    %v2710 = vpack.c.bf16 %v2696, %v2647
    %v2711 = vpack.c.bf16 %v2704, %v2699
    %v2713 = vlaneseq
    %v2714 = vshrl.u32 %v2713, 7
    %v2715 = vsub.s32 0, %v2714
    %v2716 = vrot.slane %v2589, %v2715
    %2718 = vmatprep.subr.bf16.mxu0 0
    %2719 = vmatpush1.bf16.msra.mxu0 %v2709
    %2720 = vmatprep.subr.bf16.mxu0 0
    %2721 = vmatpush1.bf16.msra.mxu0 %v2710
    %2722 = vmatprep.subr.bf16.mxu0 0
    %2723 = vmatpush1.bf16.msra.mxu0 %v2711
    %2724 = vmatprep.subr.bf16.mxu0 0
    %2725 = vmatpush1.bf16.msra.mxu0 0
    %2726 = vmatprep.subr.bf16.mxu0 0
    %2727 = vmatpush1.bf16.msra.mxu0 0
    %2728 = vmatprep.subr.bf16.mxu0 0
    %2729 = vmatpush1.bf16.msra.mxu0 0
    %2730 = vmatprep.subr.bf16.mxu0 0
    %2731 = vmatpush1.bf16.msra.mxu0 0
    %2732 = vmatprep.subr.bf16.mxu0 0
    %2733 = vmatpush1.bf16.msra.mxu0 0
    %2734 = vmatprep.subr.bf16.mxu0 0
    %2735 = vmatpush1.bf16.msra.mxu0 0
    %2736 = vmatprep.subr.bf16.mxu0 0
    %2737 = vmatpush1.bf16.msra.mxu0 0
    %2738 = vmatprep.subr.bf16.mxu0 0
    %2739 = vmatpush1.bf16.msra.mxu0 0
    %2740 = vmatprep.subr.bf16.mxu0 0
    %2741 = vmatpush1.bf16.msra.mxu0 0
    %2742 = vmatprep.subr.bf16.mxu0 0
    %2743 = vmatpush1.bf16.msra.mxu0 0
    %2744 = vmatprep.subr.bf16.mxu0 0
    %2745 = vmatpush1.bf16.msra.mxu0 0
    %2746 = vmatprep.subr.bf16.mxu0 0
    %2747 = vmatpush1.bf16.msra.mxu0 0
    %2748 = vmatprep.subr.bf16.mxu0 0
    %2749 = vmatpush1.bf16.msra.mxu0 0
    %2750 = vmatprep.mubr.bf16.mxu0 0
    %2751 = vmatmul.mubr.bf16.gmra.mrb[0].mxu0 %v656
    %v2752 = vpop.f32.mrb[0].mxu0
    %v2753 = vadd.f32 %v2716, %v2752
    %v2754 = vpop.f32.mrb[0].mxu0
    %v2755 = vpop.f32.mrb[0].mxu0
    %v2756 = vadd.f32 %v2716, %v2755
    %v2757 = vpop.f32.mrb[0].mxu0
    %2758 = vdwg.mxu0
    %v2759 = vld [vmem:[%s85] sm:$0xf]
    %v2760 = vld [vmem:[%s85 + $0x4] sm:$0xf]
    %v2763 = vunpack.c.l.b16 %v2759
    %v2764 = vunpack.c.l.b16 %v2760
    %v2765 = vpack.c.b16 %v2764, %v2763
    %v2768 = vsel %vm469, %v2468, 0
    %2770 = vmatprep.subr.bf16.mxu0 0
    %2771 = vmatpush1.bf16.msra.mxu0 %v2765
    %2772 = vmatprep.subr.bf16.mxu0 0
    %2773 = vmatpush1.bf16.msra.mxu0 0
    %2774 = vmatprep.subr.bf16.mxu0 0
    %2775 = vmatpush1.bf16.msra.mxu0 0
    %2776 = vmatprep.subr.bf16.mxu0 0
    %2777 = vmatpush1.bf16.msra.mxu0 0
    %2778 = vmatprep.subr.bf16.mxu0 0
    %2779 = vmatpush1.bf16.msra.mxu0 0
    %2780 = vmatprep.subr.bf16.mxu0 0
    %2781 = vmatpush1.bf16.msra.mxu0 0
    %2782 = vmatprep.subr.bf16.mxu0 0
    %2783 = vmatpush1.bf16.msra.mxu0 0
    %2784 = vmatprep.subr.bf16.mxu0 0
    %2785 = vmatpush1.bf16.msra.mxu0 0
    %2786 = vmatprep.subr.bf16.mxu0 0
    %2787 = vmatpush1.bf16.msra.mxu0 0
    %2788 = vmatprep.subr.bf16.mxu0 0
    %2789 = vmatpush1.bf16.msra.mxu0 0
    %2790 = vmatprep.subr.bf16.mxu0 0
    %2791 = vmatpush1.bf16.msra.mxu0 0
    %2792 = vmatprep.subr.bf16.mxu0 0
    %2793 = vmatpush1.bf16.msra.mxu0 0
    %2794 = vmatprep.subr.bf16.mxu0 0
    %2795 = vmatpush1.bf16.msra.mxu0 0
    %2796 = vmatprep.subr.bf16.mxu0 0
    %2797 = vmatpush1.bf16.msra.mxu0 0
    %2798 = vmatprep.subr.bf16.mxu0 0
    %2799 = vmatpush1.bf16.msra.mxu0 0
    %2800 = vmatprep.subr.bf16.mxu0 0
    %2801 = vmatpush1.bf16.msra.mxu0 0
    %2802 = vmatprep.mubr.bf16.mxu0 0
    %2803 = vmatmul.mubr.bf16.gmra.mrb[0].mxu0 %v2768
    %v2804 = vpop.f32.mrb[0].mxu0
    %v2805 = vadd.f32 0.0, %v2804
    %v2806 = vpop.f32.mrb[0].mxu0
    %v2807 = vpop.f32.mrb[0].mxu0
    %v2808 = vadd.f32 0.0, %v2807
    %v2809 = vpop.f32.mrb[0].mxu0
    %2810 = vdwg.mxu0
    %v2811 = vadd.f32 %v2753, %v2805
    %v2812 = vadd.f32 %v2756, %v2808
    %v2813 = vld [vmem:[#allocation8] sm:$0x1]
    %v2815 = vlaneseq
    %v2816 = vshrl.u32 %v2815, 7
    %v2817 = vsub.s32 0, %v2816
    %v2818 = vrot.slane %v2813, %v2817
    %v2820 = vadd.f32 %v2811, %v2818
    %v2821 = vadd.f32 %v2812, %v2818
    %v2822 = vld [vmem:[#allocation10] sm:$0x1]
    %v2823 = vld [vmem:[#allocation11] sm:$0x1]
    %v2824 = vsel %vm469, %v2820, 0.0
    %v2825 = vsel %vm469, %v2821, 0.0
    %v2826 = vadd.f32 %v2824, %v2825
    %v2827 = vrot.slane %v2826, 4
    %v2828 = vadd.f32 %v2826, %v2827
    %v2829 = vrot.slane %v2828, 2
    %v2830 = vadd.f32 %v2828, %v2829
    %v2831 = vrot.slane %v2830, 1
    %v2832 = vadd.f32 %v2830, %v2831
    %v2833 = vmul.f32 %v2832, %v769
    %v2834 = vsub.f32 %v2820, %v2833
    %v2835 = vsub.f32 %v2821, %v2833
    %v2836 = vmul.f32 %v2834, %v2834
    %v2837 = vmul.f32 %v2835, %v2835
    %v2838 = vsel %vm469, %v2836, 0.0
    %v2839 = vsel %vm469, %v2837, 0.0
    %v2840 = vadd.f32 %v2838, %v2839
    %v2841 = vrot.slane %v2840, 4
    %v2842 = vadd.f32 %v2840, %v2841
    %v2843 = vrot.slane %v2842, 2
    %v2844 = vadd.f32 %v2842, %v2843
    %v2845 = vrot.slane %v2844, 1
    %v2846 = vadd.f32 %v2844, %v2845
    %v2847 = vmul.f32 %v2846, %v769
    %v2848 = vadd.f32 %v2847, 1e-05
    %v2849 = vrsqrt.pop %v2848
    %v2850 = vmul.f32 %v2834, %v2849
    %v2851 = vmul.f32 %v2835, %v2849
    %v2853 = vlaneseq
    %v2854 = vshrl.u32 %v2853, 7
    %v2855 = vsub.s32 0, %v2854
    %v2856 = vrot.slane %v2822, %v2855
    %v2858 = vmul.f32 %v2850, %v2856
    %v2859 = vmul.f32 %v2851, %v2856
    %v2861 = vlaneseq
    %v2862 = vshrl.u32 %v2861, 7
    %v2863 = vsub.s32 0, %v2862
    %v2864 = vrot.slane %v2823, %v2863
    %v2866 = vadd.f32 %v2858, %v2864
    %v2867 = vadd.f32 %v2859, %v2864
    %v2868 = vmax.f32 %v2866, 0.0
    %v2869 = vmax.f32 %v2867, 0.0
    %v2870 = vadd.f32 %v2868, %v2466
    %v2871 = vadd.f32 %v2869, %v2467
    %v2872 = vld [vmem:[#allocation13] sm:$0x1]
    %v2873 = vld [vmem:[%s93] sm:$0xf]
    %v2874 = vld [vmem:[%s93 + $0x4] sm:$0xf]
    %v2877 = vunpack.c.l.b16 %v2873
    %v2878 = vunpack.c.l.b16 %v2874
    %v2879 = vpack.c.b16 %v2878, %v2877
    %2881 = vmatprep.subr.bf16.mxu0 0
    %2882 = vmatpush1.bf16.msra.mxu0 %v2879
    %2883 = vmatprep.subr.bf16.mxu0 0
    %2884 = vmatpush1.bf16.msra.mxu0 0
    %2885 = vmatprep.subr.bf16.mxu0 0
    %2886 = vmatpush1.bf16.msra.mxu0 0
    %2887 = vmatprep.subr.bf16.mxu0 0
    %2888 = vmatpush1.bf16.msra.mxu0 0
    %2889 = vmatprep.subr.bf16.mxu0 0
    %2890 = vmatpush1.bf16.msra.mxu0 0
    %2891 = vmatprep.subr.bf16.mxu0 0
    %2892 = vmatpush1.bf16.msra.mxu0 0
    %2893 = vmatprep.subr.bf16.mxu0 0
    %2894 = vmatpush1.bf16.msra.mxu0 0
    %2895 = vmatprep.subr.bf16.mxu0 0
    %2896 = vmatpush1.bf16.msra.mxu0 0
    %2897 = vmatprep.subr.bf16.mxu0 0
    %2898 = vmatpush1.bf16.msra.mxu0 0
    %2899 = vmatprep.subr.bf16.mxu0 0
    %2900 = vmatpush1.bf16.msra.mxu0 0
    %2901 = vmatprep.subr.bf16.mxu0 0
    %2902 = vmatpush1.bf16.msra.mxu0 0
    %2903 = vmatprep.subr.bf16.mxu0 0
    %2904 = vmatpush1.bf16.msra.mxu0 0
    %2905 = vmatprep.subr.bf16.mxu0 0
    %2906 = vmatpush1.bf16.msra.mxu0 0
    %2907 = vmatprep.subr.bf16.mxu0 0
    %2908 = vmatpush1.bf16.msra.mxu0 0
    %2909 = vmatprep.subr.bf16.mxu0 0
    %2910 = vmatpush1.bf16.msra.mxu0 0
    %2911 = vmatprep.subr.bf16.mxu0 0
    %2912 = vmatpush1.bf16.msra.mxu0 0
    %2913 = vmatprep.mubr.bf16.mxu0 0
    %2914 = vmatmul.mubr.bf16.gmra.mrb[0].mxu0 %v2273
    %v2915 = vpop.f32.mrb[0].mxu0
    %v2916 = vadd.f32 0.0, %v2915
    %v2917 = vpop.f32.mrb[0].mxu0
    %v2918 = vpop.f32.mrb[0].mxu0
    %v2919 = vadd.f32 0.0, %v2918
    %v2920 = vpop.f32.mrb[0].mxu0
    %2921 = vmatprep.mubr.bf16.mxu0 0
    %2922 = vmatmul.mubr.bf16.gmra.mrb[0].mxu0 %v2276
    %v2923 = vpop.f32.mrb[0].mxu0
    %v2924 = vadd.f32 0.0, %v2923
    %v2925 = vpop.f32.mrb[0].mxu0
    %v2926 = vpop.f32.mrb[0].mxu0
    %v2927 = vpop.f32.mrb[0].mxu0
    %2928 = vdwg.mxu0
    %s2929 = scalar_lea.vmem %s93, 8
    %v2930 = vld [vmem:[%s2929] sm:$0xf]
    %v2931 = vld [vmem:[%s2929 + $0x4] sm:$0xf]
    %v2934 = vunpack.c.l.b16 %v2930
    %v2935 = vunpack.c.l.b16 %v2931
    %v2936 = vpack.c.b16 %v2935, %v2934
    %2938 = vmatprep.subr.bf16.mxu0 0
    %2939 = vmatpush1.bf16.msra.mxu0 %v2936
    %2940 = vmatprep.subr.bf16.mxu0 0
    %2941 = vmatpush1.bf16.msra.mxu0 0
    %2942 = vmatprep.subr.bf16.mxu0 0
    %2943 = vmatpush1.bf16.msra.mxu0 0
    %2944 = vmatprep.subr.bf16.mxu0 0
    %2945 = vmatpush1.bf16.msra.mxu0 0
    %2946 = vmatprep.subr.bf16.mxu0 0
    %2947 = vmatpush1.bf16.msra.mxu0 0
    %2948 = vmatprep.subr.bf16.mxu0 0
    %2949 = vmatpush1.bf16.msra.mxu0 0
    %2950 = vmatprep.subr.bf16.mxu0 0
    %2951 = vmatpush1.bf16.msra.mxu0 0
    %2952 = vmatprep.subr.bf16.mxu0 0
    %2953 = vmatpush1.bf16.msra.mxu0 0
    %2954 = vmatprep.subr.bf16.mxu0 0
    %2955 = vmatpush1.bf16.msra.mxu0 0
    %2956 = vmatprep.subr.bf16.mxu0 0
    %2957 = vmatpush1.bf16.msra.mxu0 0
    %2958 = vmatprep.subr.bf16.mxu0 0
    %2959 = vmatpush1.bf16.msra.mxu0 0
    %2960 = vmatprep.subr.bf16.mxu0 0
    %2961 = vmatpush1.bf16.msra.mxu0 0
    %2962 = vmatprep.subr.bf16.mxu0 0
    %2963 = vmatpush1.bf16.msra.mxu0 0
    %2964 = vmatprep.subr.bf16.mxu0 0
    %2965 = vmatpush1.bf16.msra.mxu0 0
    %2966 = vmatprep.subr.bf16.mxu0 0
    %2967 = vmatpush1.bf16.msra.mxu0 0
    %2968 = vmatprep.subr.bf16.mxu0 0
    %2969 = vmatpush1.bf16.msra.mxu0 0
    %2970 = vmatprep.mubr.bf16.mxu0 0
    %2971 = vmatmul.mubr.bf16.gmra.mrb[0].mxu0 %v2273
    %v2972 = vpop.f32.mrb[0].mxu0
    %v2973 = vadd.f32 0.0, %v2972
    %v2974 = vpop.f32.mrb[0].mxu0
    %v2975 = vpop.f32.mrb[0].mxu0
    %v2976 = vadd.f32 0.0, %v2975
    %v2977 = vpop.f32.mrb[0].mxu0
    %2978 = vmatprep.mubr.bf16.mxu0 0
    %2979 = vmatmul.mubr.bf16.gmra.mrb[0].mxu0 %v2276
    %v2980 = vpop.f32.mrb[0].mxu0
    %v2981 = vadd.f32 0.0, %v2980
    %v2982 = vpop.f32.mrb[0].mxu0
    %v2983 = vpop.f32.mrb[0].mxu0
    %v2984 = vpop.f32.mrb[0].mxu0
    %2985 = vdwg.mxu0
    %s2986 = scalar_lea.vmem %s93, 16
    %v2987 = vld [vmem:[%s2986] sm:$0xf]
    %v2988 = vld [vmem:[%s2986 + $0x4] sm:$0xf]
    %v2991 = vunpack.c.l.b16 %v2987
    %v2992 = vunpack.c.l.b16 %v2988
    %v2993 = vpack.c.b16 %v2992, %v2991
    %2995 = vmatprep.subr.bf16.mxu0 0
    %2996 = vmatpush1.bf16.msra.mxu0 %v2993
    %2997 = vmatprep.subr.bf16.mxu0 0
    %2998 = vmatpush1.bf16.msra.mxu0 0
    %2999 = vmatprep.subr.bf16.mxu0 0
    %3000 = vmatpush1.bf16.msra.mxu0 0
    %3001 = vmatprep.subr.bf16.mxu0 0
    %3002 = vmatpush1.bf16.msra.mxu0 0
    %3003 = vmatprep.subr.bf16.mxu0 0
    %3004 = vmatpush1.bf16.msra.mxu0 0
    %3005 = vmatprep.subr.bf16.mxu0 0
    %3006 = vmatpush1.bf16.msra.mxu0 0
    %3007 = vmatprep.subr.bf16.mxu0 0
    %3008 = vmatpush1.bf16.msra.mxu0 0
    %3009 = vmatprep.subr.bf16.mxu0 0
    %3010 = vmatpush1.bf16.msra.mxu0 0
    %3011 = vmatprep.subr.bf16.mxu0 0
    %3012 = vmatpush1.bf16.msra.mxu0 0
    %3013 = vmatprep.subr.bf16.mxu0 0
    %3014 = vmatpush1.bf16.msra.mxu0 0
    %3015 = vmatprep.subr.bf16.mxu0 0
    %3016 = vmatpush1.bf16.msra.mxu0 0
    %3017 = vmatprep.subr.bf16.mxu0 0
    %3018 = vmatpush1.bf16.msra.mxu0 0
    %3019 = vmatprep.subr.bf16.mxu0 0
    %3020 = vmatpush1.bf16.msra.mxu0 0
    %3021 = vmatprep.subr.bf16.mxu0 0
    %3022 = vmatpush1.bf16.msra.mxu0 0
    %3023 = vmatprep.subr.bf16.mxu0 0
    %3024 = vmatpush1.bf16.msra.mxu0 0
    %3025 = vmatprep.subr.bf16.mxu0 0
    %3026 = vmatpush1.bf16.msra.mxu0 0
    %3027 = vmatprep.mubr.bf16.mxu0 0
    %3028 = vmatmul.mubr.bf16.gmra.mrb[0].mxu0 %v2273
    %v3029 = vpop.f32.mrb[0].mxu0
    %v3030 = vadd.f32 0.0, %v3029
    %v3031 = vpop.f32.mrb[0].mxu0
    %v3032 = vpop.f32.mrb[0].mxu0
    %v3033 = vadd.f32 0.0, %v3032
    %v3034 = vpop.f32.mrb[0].mxu0
    %3035 = vmatprep.mubr.bf16.mxu0 0
    %3036 = vmatmul.mubr.bf16.gmra.mrb[0].mxu0 %v2276
    %v3037 = vpop.f32.mrb[0].mxu0
    %v3038 = vadd.f32 0.0, %v3037
    %v3039 = vpop.f32.mrb[0].mxu0
    %v3040 = vpop.f32.mrb[0].mxu0
    %v3041 = vpop.f32.mrb[0].mxu0
    %3042 = vdwg.mxu0
    %s3043 = scalar_lea.vmem %s93, 24
    %v3044 = vld [vmem:[%s3043] sm:$0xf]
    %v3045 = vld [vmem:[%s3043 + $0x4] sm:$0xf]
    %v3048 = vunpack.c.l.b16 %v3044
    %v3049 = vunpack.c.l.b16 %v3045
    %v3050 = vpack.c.b16 %v3049, %v3048
    %3052 = vmatprep.subr.bf16.mxu0 0
    %3053 = vmatpush1.bf16.msra.mxu0 %v3050
    %3054 = vmatprep.subr.bf16.mxu0 0
    %3055 = vmatpush1.bf16.msra.mxu0 0
    %3056 = vmatprep.subr.bf16.mxu0 0
    %3057 = vmatpush1.bf16.msra.mxu0 0
    %3058 = vmatprep.subr.bf16.mxu0 0
    %3059 = vmatpush1.bf16.msra.mxu0 0
    %3060 = vmatprep.subr.bf16.mxu0 0
    %3061 = vmatpush1.bf16.msra.mxu0 0
    %3062 = vmatprep.subr.bf16.mxu0 0
    %3063 = vmatpush1.bf16.msra.mxu0 0
    %3064 = vmatprep.subr.bf16.mxu0 0
    %3065 = vmatpush1.bf16.msra.mxu0 0
    %3066 = vmatprep.subr.bf16.mxu0 0
    %3067 = vmatpush1.bf16.msra.mxu0 0
    %3068 = vmatprep.subr.bf16.mxu0 0
    %3069 = vmatpush1.bf16.msra.mxu0 0
    %3070 = vmatprep.subr.bf16.mxu0 0
    %3071 = vmatpush1.bf16.msra.mxu0 0
    %3072 = vmatprep.subr.bf16.mxu0 0
    %3073 = vmatpush1.bf16.msra.mxu0 0
    %3074 = vmatprep.subr.bf16.mxu0 0
    %3075 = vmatpush1.bf16.msra.mxu0 0
    %3076 = vmatprep.subr.bf16.mxu0 0
    %3077 = vmatpush1.bf16.msra.mxu0 0
    %3078 = vmatprep.subr.bf16.mxu0 0
    %3079 = vmatpush1.bf16.msra.mxu0 0
    %3080 = vmatprep.subr.bf16.mxu0 0
    %3081 = vmatpush1.bf16.msra.mxu0 0
    %3082 = vmatprep.subr.bf16.mxu0 0
    %3083 = vmatpush1.bf16.msra.mxu0 0
    %3084 = vmatprep.mubr.bf16.mxu0 0
    %3085 = vmatmul.mubr.bf16.gmra.mrb[0].mxu0 %v2273
    %v3086 = vpop.f32.mrb[0].mxu0
    %v3087 = vadd.f32 0.0, %v3086
    %v3088 = vpop.f32.mrb[0].mxu0
    %v3089 = vpop.f32.mrb[0].mxu0
    %v3090 = vadd.f32 0.0, %v3089
    %v3091 = vpop.f32.mrb[0].mxu0
    %3092 = vmatprep.mubr.bf16.mxu0 0
    %3093 = vmatmul.mubr.bf16.gmra.mrb[0].mxu0 %v2276
    %v3094 = vpop.f32.mrb[0].mxu0
    %v3095 = vadd.f32 0.0, %v3094
    %v3096 = vpop.f32.mrb[0].mxu0
    %v3097 = vpop.f32.mrb[0].mxu0
    %v3098 = vpop.f32.mrb[0].mxu0
    %3099 = vdwg.mxu0
    %v3100 = vpack.c.bf16 %v2919, %v2916
    %v3101 = vpack.c.bf16 %v2973, %v2924
    %v3102 = vpack.c.bf16 %v2981, %v2976
    %v3103 = vpack.c.bf16 %v3033, %v3030
    %v3104 = vpack.c.bf16 %v3087, %v3038
    %v3105 = vpack.c.bf16 %v3095, %v3090
    %v3107 = vlaneseq
    %v3108 = vshrl.u32 %v3107, 7
    %v3109 = vsub.s32 0, %v3108
    %v3110 = vrot.slane %v2872, %v3109
    %3112 = vmatprep.subr.bf16.mxu0 0
    %3113 = vmatpush1.bf16.msra.mxu0 %v3100
    %3114 = vmatprep.subr.bf16.mxu0 0
    %3115 = vmatpush1.bf16.msra.mxu0 %v3101
    %3116 = vmatprep.subr.bf16.mxu0 0
    %3117 = vmatpush1.bf16.msra.mxu0 %v3102
    %3118 = vmatprep.subr.bf16.mxu0 0
    %3119 = vmatpush1.bf16.msra.mxu0 %v3103
    %3120 = vmatprep.subr.bf16.mxu0 0
    %3121 = vmatpush1.bf16.msra.mxu0 %v3104
    %3122 = vmatprep.subr.bf16.mxu0 0
    %3123 = vmatpush1.bf16.msra.mxu0 %v3105
    %3124 = vmatprep.subr.bf16.mxu0 0
    %3125 = vmatpush1.bf16.msra.mxu0 0
    %3126 = vmatprep.subr.bf16.mxu0 0
    %3127 = vmatpush1.bf16.msra.mxu0 0
    %3128 = vmatprep.subr.bf16.mxu0 0
    %3129 = vmatpush1.bf16.msra.mxu0 0
    %3130 = vmatprep.subr.bf16.mxu0 0
    %3131 = vmatpush1.bf16.msra.mxu0 0
    %3132 = vmatprep.subr.bf16.mxu0 0
    %3133 = vmatpush1.bf16.msra.mxu0 0
    %3134 = vmatprep.subr.bf16.mxu0 0
    %3135 = vmatpush1.bf16.msra.mxu0 0
    %3136 = vmatprep.subr.bf16.mxu0 0
    %3137 = vmatpush1.bf16.msra.mxu0 0
    %3138 = vmatprep.subr.bf16.mxu0 0
    %3139 = vmatpush1.bf16.msra.mxu0 0
    %3140 = vmatprep.subr.bf16.mxu0 0
    %3141 = vmatpush1.bf16.msra.mxu0 0
    %3142 = vmatprep.subr.bf16.mxu0 0
    %3143 = vmatpush1.bf16.msra.mxu0 0
    %3144 = vmatprep.mubr.bf16.mxu0 0
    %3145 = vmatmul.mubr.bf16.gmra.mrb[0].mxu0 %v1085
    %v3146 = vpop.f32.mrb[0].mxu0
    %v3147 = vadd.f32 %v3110, %v3146
    %v3148 = vpop.f32.mrb[0].mxu0
    %v3149 = vpop.f32.mrb[0].mxu0
    %v3150 = vadd.f32 %v3110, %v3149
    %v3151 = vpop.f32.mrb[0].mxu0
    %3152 = vmatprep.mubr.bf16.mxu0 0
    %3153 = vmatmul.mubr.bf16.gmra.mrb[0].mxu0 %v1088
    %v3154 = vpop.f32.mrb[0].mxu0
    %v3155 = vadd.f32 %v3110, %v3154
    %v3156 = vpop.f32.mrb[0].mxu0
    %v3157 = vpop.f32.mrb[0].mxu0
    %v3158 = vpop.f32.mrb[0].mxu0
    %3159 = vdwg.mxu0
    %v3160 = vld [vmem:[%s97] sm:$0xf]
    %v3161 = vld [vmem:[%s97 + $0x4] sm:$0xf]
    %v3164 = vunpack.c.l.b16 %v3160
    %v3165 = vunpack.c.l.b16 %v3161
    %v3166 = vpack.c.b16 %v3165, %v3164
    %3168 = vmatprep.subr.bf16.mxu0 0
    %3169 = vmatpush1.bf16.msra.mxu0 %v3166
    %3170 = vmatprep.subr.bf16.mxu0 0
    %3171 = vmatpush1.bf16.msra.mxu0 0
    %3172 = vmatprep.subr.bf16.mxu0 0
    %3173 = vmatpush1.bf16.msra.mxu0 0
    %3174 = vmatprep.subr.bf16.mxu0 0
    %3175 = vmatpush1.bf16.msra.mxu0 0
    %3176 = vmatprep.subr.bf16.mxu0 0
    %3177 = vmatpush1.bf16.msra.mxu0 0
    %3178 = vmatprep.subr.bf16.mxu0 0
    %3179 = vmatpush1.bf16.msra.mxu0 0
    %3180 = vmatprep.subr.bf16.mxu0 0
    %3181 = vmatpush1.bf16.msra.mxu0 0
    %3182 = vmatprep.subr.bf16.mxu0 0
    %3183 = vmatpush1.bf16.msra.mxu0 0
    %3184 = vmatprep.subr.bf16.mxu0 0
    %3185 = vmatpush1.bf16.msra.mxu0 0
    %3186 = vmatprep.subr.bf16.mxu0 0
    %3187 = vmatpush1.bf16.msra.mxu0 0
    %3188 = vmatprep.subr.bf16.mxu0 0
    %3189 = vmatpush1.bf16.msra.mxu0 0
    %3190 = vmatprep.subr.bf16.mxu0 0
    %3191 = vmatpush1.bf16.msra.mxu0 0
    %3192 = vmatprep.subr.bf16.mxu0 0
    %3193 = vmatpush1.bf16.msra.mxu0 0
    %3194 = vmatprep.subr.bf16.mxu0 0
    %3195 = vmatpush1.bf16.msra.mxu0 0
    %3196 = vmatprep.subr.bf16.mxu0 0
    %3197 = vmatpush1.bf16.msra.mxu0 0
    %3198 = vmatprep.subr.bf16.mxu0 0
    %3199 = vmatpush1.bf16.msra.mxu0 0
    %3200 = vmatprep.mubr.bf16.mxu0 0
    %3201 = vmatmul.mubr.bf16.gmra.mrb[0].mxu0 %v2273
    %v3202 = vpop.f32.mrb[0].mxu0
    %v3203 = vadd.f32 0.0, %v3202
    %v3204 = vpop.f32.mrb[0].mxu0
    %v3205 = vpop.f32.mrb[0].mxu0
    %v3206 = vadd.f32 0.0, %v3205
    %v3207 = vpop.f32.mrb[0].mxu0
    %3208 = vmatprep.mubr.bf16.mxu0 0
    %3209 = vmatmul.mubr.bf16.gmra.mrb[0].mxu0 %v2276
    %v3210 = vpop.f32.mrb[0].mxu0
    %v3211 = vadd.f32 0.0, %v3210
    %v3212 = vpop.f32.mrb[0].mxu0
    %v3213 = vpop.f32.mrb[0].mxu0
    %v3214 = vpop.f32.mrb[0].mxu0
    %3215 = vdwg.mxu0
    %v3216 = vadd.f32 %v3147, %v3203
    %v3217 = vadd.f32 %v3150, %v3206
    %v3218 = vadd.f32 %v3155, %v3211
    %v3219 = vld [vmem:[#allocation14] sm:$0x1]
    %v3221 = vlaneseq
    %v3222 = vshrl.u32 %v3221, 7
    %v3223 = vsub.s32 0, %v3222
    %v3224 = vrot.slane %v3219, %v3223
    %v3226 = vadd.f32 %v3216, %v3224
    %v3227 = vadd.f32 %v3217, %v3224
    %v3228 = vadd.f32 %v3218, %v3224
    %v3229 = vld [vmem:[#allocation16] sm:$0x1]
    %v3230 = vld [vmem:[#allocation17] sm:$0x1]
    %v3231 = vsel %vm469, %v3226, 0.0
    %v3232 = vsel %vm469, %v3227, 0.0
    %v3233 = vadd.f32 %v3231, %v3232
    %v3234 = vsel %vm469, %v3228, 0.0
    %v3235 = vadd.f32 %v3233, %v3234
    %v3236 = vrot.slane %v3235, 4
    %v3237 = vadd.f32 %v3235, %v3236
    %v3238 = vrot.slane %v3237, 2
    %v3239 = vadd.f32 %v3237, %v3238
    %v3240 = vrot.slane %v3239, 1
    %v3241 = vadd.f32 %v3239, %v3240
    %v3242 = vmul.f32 %v3241, %v1227
    %v3243 = vsub.f32 %v3226, %v3242
    %v3244 = vsub.f32 %v3227, %v3242
    %v3245 = vsub.f32 %v3228, %v3242
    %v3246 = vmul.f32 %v3243, %v3243
    %v3247 = vmul.f32 %v3244, %v3244
    %v3248 = vmul.f32 %v3245, %v3245
    %v3249 = vsel %vm469, %v3246, 0.0
    %v3250 = vsel %vm469, %v3247, 0.0
    %v3251 = vadd.f32 %v3249, %v3250
    %v3252 = vsel %vm469, %v3248, 0.0
    %v3253 = vadd.f32 %v3251, %v3252
    %v3254 = vrot.slane %v3253, 4
    %v3255 = vadd.f32 %v3253, %v3254
    %v3256 = vrot.slane %v3255, 2
    %v3257 = vadd.f32 %v3255, %v3256
    %v3258 = vrot.slane %v3257, 1
    %v3259 = vadd.f32 %v3257, %v3258
    %v3260 = vmul.f32 %v3259, %v1227
    %v3261 = vadd.f32 %v3260, 1e-05
    %v3262 = vrsqrt.pop %v3261
    %v3263 = vmul.f32 %v3243, %v3262
    %v3264 = vmul.f32 %v3244, %v3262
    %v3265 = vmul.f32 %v3245, %v3262
    %v3267 = vlaneseq
    %v3268 = vshrl.u32 %v3267, 7
    %v3269 = vsub.s32 0, %v3268
    %v3270 = vrot.slane %v3229, %v3269
    %v3272 = vmul.f32 %v3263, %v3270
    %v3273 = vmul.f32 %v3264, %v3270
    %v3274 = vmul.f32 %v3265, %v3270
    %v3276 = vlaneseq
    %v3277 = vshrl.u32 %v3276, 7
    %v3278 = vsub.s32 0, %v3277
    %v3279 = vrot.slane %v3230, %v3278
    %v3281 = vadd.f32 %v3272, %v3279
    %v3282 = vadd.f32 %v3273, %v3279
    %v3283 = vadd.f32 %v3274, %v3279
    %v3284 = vmax.f32 %v3281, 0.0
    %v3285 = vmax.f32 %v3282, 0.0
    %v3286 = vmax.f32 %v3283, 0.0
    %v3287 = vpack.c.bf16 %v3285, %v3284
    %v3288 = vpack.c.bf16 %v3286, %v3286
    %v3290 = vsel %vm469, %v3287, 0
    %v3293 = vsel %vm469, %v3288, 0
    %3295 = vmatprep.subr.bf16.mxu0 0
    %3296 = vmatpush1.bf16.msra.mxu0 %v2596
    %3297 = vmatprep.subr.bf16.mxu0 0
    %3298 = vmatpush1.bf16.msra.mxu0 0
    %3299 = vmatprep.subr.bf16.mxu0 0
    %3300 = vmatpush1.bf16.msra.mxu0 0
    %3301 = vmatprep.subr.bf16.mxu0 0
    %3302 = vmatpush1.bf16.msra.mxu0 0
    %3303 = vmatprep.subr.bf16.mxu0 0
    %3304 = vmatpush1.bf16.msra.mxu0 0
    %3305 = vmatprep.subr.bf16.mxu0 0
    %3306 = vmatpush1.bf16.msra.mxu0 0
    %3307 = vmatprep.subr.bf16.mxu0 0
    %3308 = vmatpush1.bf16.msra.mxu0 0
    %3309 = vmatprep.subr.bf16.mxu0 0
    %3310 = vmatpush1.bf16.msra.mxu0 0
    %3311 = vmatprep.subr.bf16.mxu0 0
    %3312 = vmatpush1.bf16.msra.mxu0 0
    %3313 = vmatprep.subr.bf16.mxu0 0
    %3314 = vmatpush1.bf16.msra.mxu0 0
    %3315 = vmatprep.subr.bf16.mxu0 0
    %3316 = vmatpush1.bf16.msra.mxu0 0
    %3317 = vmatprep.subr.bf16.mxu0 0
    %3318 = vmatpush1.bf16.msra.mxu0 0
    %3319 = vmatprep.subr.bf16.mxu0 0
    %3320 = vmatpush1.bf16.msra.mxu0 0
    %3321 = vmatprep.subr.bf16.mxu0 0
    %3322 = vmatpush1.bf16.msra.mxu0 0
    %3323 = vmatprep.subr.bf16.mxu0 0
    %3324 = vmatpush1.bf16.msra.mxu0 0
    %3325 = vmatprep.subr.bf16.mxu0 0
    %3326 = vmatpush1.bf16.msra.mxu0 0
    %3327 = vmatprep.mubr.bf16.mxu0 0
    %3328 = vmatmul.mubr.bf16.gmra.mrb[0].mxu0 %v3290
    %v3329 = vpop.f32.mrb[0].mxu0
    %v3330 = vadd.f32 0.0, %v3329
    %v3331 = vpop.f32.mrb[0].mxu0
    %v3332 = vpop.f32.mrb[0].mxu0
    %v3333 = vadd.f32 0.0, %v3332
    %v3334 = vpop.f32.mrb[0].mxu0
    %3335 = vmatprep.mubr.bf16.mxu0 0
    %3336 = vmatmul.mubr.bf16.gmra.mrb[0].mxu0 %v3293
    %v3337 = vpop.f32.mrb[0].mxu0
    %v3338 = vadd.f32 0.0, %v3337
    %v3339 = vpop.f32.mrb[0].mxu0
    %v3340 = vpop.f32.mrb[0].mxu0
    %v3341 = vpop.f32.mrb[0].mxu0
    %3342 = vdwg.mxu0
    %3343 = vmatprep.subr.bf16.mxu0 0
    %3344 = vmatpush1.bf16.msra.mxu0 %v2659
    %3345 = vmatprep.subr.bf16.mxu0 0
    %3346 = vmatpush1.bf16.msra.mxu0 0
    %3347 = vmatprep.subr.bf16.mxu0 0
    %3348 = vmatpush1.bf16.msra.mxu0 0
    %3349 = vmatprep.subr.bf16.mxu0 0
    %3350 = vmatpush1.bf16.msra.mxu0 0
    %3351 = vmatprep.subr.bf16.mxu0 0
    %3352 = vmatpush1.bf16.msra.mxu0 0
    %3353 = vmatprep.subr.bf16.mxu0 0
    %3354 = vmatpush1.bf16.msra.mxu0 0
    %3355 = vmatprep.subr.bf16.mxu0 0
    %3356 = vmatpush1.bf16.msra.mxu0 0
    %3357 = vmatprep.subr.bf16.mxu0 0
    %3358 = vmatpush1.bf16.msra.mxu0 0
    %3359 = vmatprep.subr.bf16.mxu0 0
    %3360 = vmatpush1.bf16.msra.mxu0 0
    %3361 = vmatprep.subr.bf16.mxu0 0
    %3362 = vmatpush1.bf16.msra.mxu0 0
    %3363 = vmatprep.subr.bf16.mxu0 0
    %3364 = vmatpush1.bf16.msra.mxu0 0
    %3365 = vmatprep.subr.bf16.mxu0 0
    %3366 = vmatpush1.bf16.msra.mxu0 0
    %3367 = vmatprep.subr.bf16.mxu0 0
    %3368 = vmatpush1.bf16.msra.mxu0 0
    %3369 = vmatprep.subr.bf16.mxu0 0
    %3370 = vmatpush1.bf16.msra.mxu0 0
    %3371 = vmatprep.subr.bf16.mxu0 0
    %3372 = vmatpush1.bf16.msra.mxu0 0
    %3373 = vmatprep.subr.bf16.mxu0 0
    %3374 = vmatpush1.bf16.msra.mxu0 0
    %3375 = vmatprep.mubr.bf16.mxu0 0
    %3376 = vmatmul.mubr.bf16.gmra.mrb[0].mxu0 %v3290
    %v3377 = vpop.f32.mrb[0].mxu0
    %v3378 = vadd.f32 0.0, %v3377
    %v3379 = vpop.f32.mrb[0].mxu0
    %v3380 = vpop.f32.mrb[0].mxu0
    %v3381 = vadd.f32 0.0, %v3380
    %v3382 = vpop.f32.mrb[0].mxu0
    %3383 = vmatprep.mubr.bf16.mxu0 0
    %3384 = vmatmul.mubr.bf16.gmra.mrb[0].mxu0 %v3293
    %v3385 = vpop.f32.mrb[0].mxu0
    %v3386 = vadd.f32 0.0, %v3385
    %v3387 = vpop.f32.mrb[0].mxu0
    %v3388 = vpop.f32.mrb[0].mxu0
    %v3389 = vpop.f32.mrb[0].mxu0
    %3390 = vdwg.mxu0
    %v3391 = vpack.c.bf16 %v3333, %v3330
    %v3392 = vpack.c.bf16 %v3378, %v3338
    %v3393 = vpack.c.bf16 %v3386, %v3381
    %3394 = vmatprep.subr.bf16.mxu0 0
    %3395 = vmatpush1.bf16.msra.mxu0 %v3391
    %3396 = vmatprep.subr.bf16.mxu0 0
    %3397 = vmatpush1.bf16.msra.mxu0 %v3392
    %3398 = vmatprep.subr.bf16.mxu0 0
    %3399 = vmatpush1.bf16.msra.mxu0 %v3393
    %3400 = vmatprep.subr.bf16.mxu0 0
    %3401 = vmatpush1.bf16.msra.mxu0 0
    %3402 = vmatprep.subr.bf16.mxu0 0
    %3403 = vmatpush1.bf16.msra.mxu0 0
    %3404 = vmatprep.subr.bf16.mxu0 0
    %3405 = vmatpush1.bf16.msra.mxu0 0
    %3406 = vmatprep.subr.bf16.mxu0 0
    %3407 = vmatpush1.bf16.msra.mxu0 0
    %3408 = vmatprep.subr.bf16.mxu0 0
    %3409 = vmatpush1.bf16.msra.mxu0 0
    %3410 = vmatprep.subr.bf16.mxu0 0
    %3411 = vmatpush1.bf16.msra.mxu0 0
    %3412 = vmatprep.subr.bf16.mxu0 0
    %3413 = vmatpush1.bf16.msra.mxu0 0
    %3414 = vmatprep.subr.bf16.mxu0 0
    %3415 = vmatpush1.bf16.msra.mxu0 0
    %3416 = vmatprep.subr.bf16.mxu0 0
    %3417 = vmatpush1.bf16.msra.mxu0 0
    %3418 = vmatprep.subr.bf16.mxu0 0
    %3419 = vmatpush1.bf16.msra.mxu0 0
    %3420 = vmatprep.subr.bf16.mxu0 0
    %3421 = vmatpush1.bf16.msra.mxu0 0
    %3422 = vmatprep.subr.bf16.mxu0 0
    %3423 = vmatpush1.bf16.msra.mxu0 0
    %3424 = vmatprep.subr.bf16.mxu0 0
    %3425 = vmatpush1.bf16.msra.mxu0 0
    %3426 = vmatprep.mubr.bf16.mxu0 0
    %3427 = vmatmul.mubr.bf16.gmra.mrb[0].mxu0 %v656
    %v3428 = vpop.f32.mrb[0].mxu0
    %v3429 = vadd.f32 %v2716, %v3428
    %v3430 = vpop.f32.mrb[0].mxu0
    %v3431 = vpop.f32.mrb[0].mxu0
    %v3432 = vadd.f32 %v2716, %v3431
    %v3433 = vpop.f32.mrb[0].mxu0
    %3434 = vdwg.mxu0
    %v3435 = vmax.f32 %v3429, 0.0
    %v3436 = vmax.f32 %v3432, 0.0
    %v3437 = vadd.f32 %v2870, %v3435
    %v3438 = vadd.f32 %v2871, %v3436
    %v3439 = vld [vmem:[#allocation19] sm:$0x1]
    %v3440 = vld [vmem:[#allocation20] sm:$0x1]
    %v3441 = vsel %vm469, %v3437, 0.0
    %v3442 = vsel %vm469, %v3438, 0.0
    %v3443 = vadd.f32 %v3441, %v3442
    %v3444 = vrot.slane %v3443, 4
    %v3445 = vadd.f32 %v3443, %v3444
    %v3446 = vrot.slane %v3445, 2
    %v3447 = vadd.f32 %v3445, %v3446
    %v3448 = vrot.slane %v3447, 1
    %v3449 = vadd.f32 %v3447, %v3448
    %v3450 = vmul.f32 %v3449, %v769
    %v3451 = vsub.f32 %v3437, %v3450
    %v3452 = vsub.f32 %v3438, %v3450
    %v3453 = vmul.f32 %v3451, %v3451
    %v3454 = vmul.f32 %v3452, %v3452
    %v3455 = vsel %vm469, %v3453, 0.0
    %v3456 = vsel %vm469, %v3454, 0.0
    %v3457 = vadd.f32 %v3455, %v3456
    %v3458 = vrot.slane %v3457, 4
    %v3459 = vadd.f32 %v3457, %v3458
    %v3460 = vrot.slane %v3459, 2
    %v3461 = vadd.f32 %v3459, %v3460
    %v3462 = vrot.slane %v3461, 1
    %v3463 = vadd.f32 %v3461, %v3462
    %v3464 = vmul.f32 %v3463, %v769
    %v3465 = vadd.f32 %v3464, 1e-05
    %v3466 = vrsqrt.pop %v3465
    %v3467 = vmul.f32 %v3451, %v3466
    %v3468 = vmul.f32 %v3452, %v3466
    %v3470 = vlaneseq
    %v3471 = vshrl.u32 %v3470, 7
    %v3472 = vsub.s32 0, %v3471
    %v3473 = vrot.slane %v3439, %v3472
    %v3475 = vmul.f32 %v3467, %v3473
    %v3476 = vmul.f32 %v3468, %v3473
    %v3478 = vlaneseq
    %v3479 = vshrl.u32 %v3478, 7
    %v3480 = vsub.s32 0, %v3479
    %v3481 = vrot.slane %v3440, %v3480
    %v3483 = vadd.f32 %v3475, %v3481
    %v3484 = vadd.f32 %v3476, %v3481
    %3487 = vrot.lane.b32.xlu0 %v2466, 16
    %v3488 = vpop.permute.xlu0 %3487
    %3489 = vrot.lane.b32.xlu0 %v2467, 16
    %v3490 = vpop.permute.xlu0 %3489
    %3495 = vrot.lane.b32.xlu0 %v3483, 32
    %v3496 = vpop.permute.xlu0 %3495
    %3497 = vrot.lane.b32.xlu0 %v3484, 32
    %v3498 = vpop.permute.xlu0 %3497
    %v3501 = vsel %vm469, %v1469, %v3488
    %v3502 = vsel %vm469, %v1470, %v3490
    %vm3503 = vcmask 261120
    %v3504 = vsel %vm3503, %v3501, %v3496
    %v3505 = vsel %vm3503, %v3502, %v3498
    %3506 = vst.msk [vmem:[#allocation22] sm:$0xff] %vm654, %v3504
    %3507 = vst.msk [vmem:[#allocation22 + $0x8] sm:$0xff] %vm654, %v3505
    %v3508 = vld [vmem:[%s11] sm:$0x1]
    %v3509 = vpack.c.bf16 %v3505, %v3504
    %v3511 = vsel %vm469, %v3508, 0
    %3513 = vmatprep.subr.bf16.mxu0 0
    %3514 = vmatpush1.bf16.msra.mxu0 %v3509
    %3515 = vmatprep.subr.bf16.mxu0 0
    %3516 = vmatpush1.bf16.msra.mxu0 0
    %3517 = vmatprep.subr.bf16.mxu0 0
    %3518 = vmatpush1.bf16.msra.mxu0 0
    %3519 = vmatprep.subr.bf16.mxu0 0
    %3520 = vmatpush1.bf16.msra.mxu0 0
    %3521 = vmatprep.subr.bf16.mxu0 0
    %3522 = vmatpush1.bf16.msra.mxu0 0
    %3523 = vmatprep.subr.bf16.mxu0 0
    %3524 = vmatpush1.bf16.msra.mxu0 0
    %3525 = vmatprep.subr.bf16.mxu0 0
    %3526 = vmatpush1.bf16.msra.mxu0 0
    %3527 = vmatprep.subr.bf16.mxu0 0
    %3528 = vmatpush1.bf16.msra.mxu0 0
    %3529 = vmatprep.subr.bf16.mxu0 0
    %3530 = vmatpush1.bf16.msra.mxu0 0
    %3531 = vmatprep.subr.bf16.mxu0 0
    %3532 = vmatpush1.bf16.msra.mxu0 0
    %3533 = vmatprep.subr.bf16.mxu0 0
    %3534 = vmatpush1.bf16.msra.mxu0 0
    %3535 = vmatprep.subr.bf16.mxu0 0
    %3536 = vmatpush1.bf16.msra.mxu0 0
    %3537 = vmatprep.subr.bf16.mxu0 0
    %3538 = vmatpush1.bf16.msra.mxu0 0
    %3539 = vmatprep.subr.bf16.mxu0 0
    %3540 = vmatpush1.bf16.msra.mxu0 0
    %3541 = vmatprep.subr.bf16.mxu0 0
    %3542 = vmatpush1.bf16.msra.mxu0 0
    %3543 = vmatprep.subr.bf16.mxu0 0
    %3544 = vmatpush1.bf16.msra.mxu0 0
    %3545 = vmatprep.mubr.bf16.mxu0 0
    %3546 = vmatmul.mubr.bf16.gmra.mrb[0].mxu0 %v3511
    %v3547 = vpop.f32.mrb[0].mxu0
    %v3548 = vadd.f32 0.0, %v3547
    %v3549 = vpop.f32.mrb[0].mxu0
    %v3550 = vpop.f32.mrb[0].mxu0
    %v3551 = vpop.f32.mrb[0].mxu0
    %3552 = vdwg.mxu0
    %vm3553 = vcmask 386048
    %3554 = vst.msk [vmem:[#allocation23] sm:$0x3] %vm3553, %v3548
    // Predicated region
    $region266: #{tpu_custom_call.1} parent=1 // pred_check
      _
    $region267: #{tpu_custom_call.1} parent=1 // pred_check_branch
      %3556 = sbr.rel (0) target = $region269
    $region268: #{tpu_custom_call.1} parent=1 // pred_region
      %s3558 = ssub.s32 256, 256
      %3559 = vsyncadd [#allocation4], %s3558
      %s3560 = sshll.u32 [#allocation22], 4
      %s3561 = int_to_ptr.vmem [resolvable:$true] %s3560
      %3566 = dma.vmem_to_hbm [thread:$0]  %s3561, 256, %s109, [#allocation4], 128, 128, 8
    $region269: #{tpu_custom_call.1} parent=1 // pred_fallthru
      _
    // Predicated region
    $region270: #{tpu_custom_call.1} parent=1 // pred_check
      _
    $region271: #{tpu_custom_call.1} parent=1 // pred_check_branch
      %3568 = sbr.rel (0) target = $region273
    $region272: #{tpu_custom_call.1} parent=1 // pred_region
      %s3570 = ssub.s32 32, 32
      %3571 = vsyncadd [#allocation24], %s3570
      %s3573 = sshll.u32 [#allocation23], 4
      %s3574 = int_to_ptr.vmem [resolvable:$true] %s3573
      %3576 = dma.vmem_to_hbm [thread:$0]  %s3574, 32, %s111, [#allocation24]
    $region273: #{tpu_custom_call.1} parent=1 // pred_fallthru
      _
    // Predicated region
    $region274: #{tpu_custom_call.1} parent=1 // pred_check
      _
    $region275: #{tpu_custom_call.1} parent=1 // pred_check_branch
      %3578 = sbr.rel (0) target = $region277
    $region276: #{tpu_custom_call.1} parent=1 // pred_region
      %3579 = dma.done [#allocation4], 256
    $region277: #{tpu_custom_call.1} parent=1 // pred_fallthru
      _
    // Predicated region
    $region278: #{tpu_custom_call.1} parent=1 // pred_check
      _
    $region279: #{tpu_custom_call.1} parent=1 // pred_check_branch
      %3581 = sbr.rel (0) target = $region281
    $region280: #{tpu_custom_call.1} parent=1 // pred_region
      %3582 = dma.done [#allocation24], 32
    $region281: #{tpu_custom_call.1} parent=1 // pred_fallthru
      _
    %3583 = vsyncpa [#allocation3], 1
    %3584 = vsyncpa [#allocation6], 1
    %3585 = vsyncpa [#allocation9], 1
    %3586 = vsyncpa [#allocation12], 1
    %3587 = vsyncpa [#allocation15], 1
    %3588 = vsyncpa [#allocation18], 1
    %3589 = vsyncpa [#allocation21], 1
    %3590 = vsyncpa [#allocation4], 1
    %3591 = vsyncpa [#allocation24], 1

</llo_original>
